<compile_context>
chip_gen: v6e
topology: v6e:2x2x1
jax: 0.10.0
libtpu: 0.0.40
codegen_flags: <defaults>
</compile_context>

<pallas_src>
import functools

import jax
import jax.numpy as jnp
from jax.experimental import pallas as pl
from jax.experimental.pallas import tpu as pltpu


# ---------------------------------------------------------------------------
# Pallas kernel: bidirectional LSTM + fc1(relu) + fc2 over the whole sequence
# ---------------------------------------------------------------------------
def bilstm_kernel(xcat_ref,                    # (T*B, 2E)  bf16  [x_t | x_{T-1-t}]
                  wih_ref,                     # (2E, 8H)   bf16  block input weights
                  b_ref,                       # (1, 8H)    f32   folded biases
                  whh_ref,                     # (2H, 8H)   bf16  block recurrent weights
                  fc1_w_ref, fc1_b_ref,        # (2H, 128) bf16, (1, 128) f32
                  fc2_w_ref, fc2_b_ref,        # (128, OUT_PAD) bf16, (1, OUT_PAD) f32
                  out_ref,                     # (T*B, OUT_PAD) f32
                  zin_ref,                     # (T*B, 8H) f32 scratch (merged gate inputs)
                  hs_ref,                      # (T*B, 2H) f32 scratch (step-order h)
                  hcat_ref,                    # (T*B, 2H) f32 scratch (time-order h)
                  *, T, B, H):
    H2 = 2 * H

    # --- 1) Input projection hoisted out of the recurrence (one MXU matmul) --
    # Column layout is gate-major / direction-minor:
    #   [i_f,i_b | f_f,f_b | g_f,g_b | o_f,o_b], each H wide, so every gate
    # slice below is a full 128-lane (2H) vreg. Forward columns draw from the
    # x_t half of xcat, backward columns from the x_{T-1-s} half (block
    # weight), so no per-step select is needed. Biases folded in once.
    zin_ref[...] = (jnp.dot(xcat_ref[...], wih_ref[...],
                            preferred_element_type=jnp.float32)
                    + b_ref[...])

    # --- 2) Recurrence: both directions carried in one (B, 2H) local state ---
    # h (bf16, MXU LHS) and c (f32) live in vregs across the unrolled steps;
    # no VMEM round trip on the serial chain.
    h_bf = jnp.zeros((B, H2), jnp.bfloat16)
    c = jnp.zeros((B, H2), jnp.float32)
    for s in range(T):                          # T small & static -> unroll
        r = s * B
        gates = zin_ref[r:r + B, :] + jnp.dot(
            h_bf, whh_ref[...], preferred_element_type=jnp.float32)
        i_g = jax.nn.sigmoid(gates[:, 0 * H2:1 * H2])
        f_g = jax.nn.sigmoid(gates[:, 1 * H2:2 * H2])
        g_g = jnp.tanh(gates[:, 2 * H2:3 * H2])
        o_g = jax.nn.sigmoid(gates[:, 3 * H2:4 * H2])
        c = f_g * c + i_g * g_g
        h_f32 = o_g * jnp.tanh(c)
        h_bf = h_f32.astype(jnp.bfloat16)       # one cast, reused as next LHS
        # ONE full-width 128-lane store per step ("step order":
        # row block s = [h_f(t=s) | h_b(t=T-1-s)]).
        hs_ref[r:r + B, :] = h_f32

    # --- 3) One merge pass: resolve the backward-direction time reversal -----
    # hcat[t] = [h_f(t) | h_b(t)]; full-lane loads/stores, off the serial chain.
    lane = jax.lax.broadcasted_iota(jnp.int32, (B, H2), 1)
    fwd_lane = lane < H
    for t in range(T):
        a = hs_ref[t * B:(t + 1) * B, :]                  # fwd half correct here
        b_blk = hs_ref[(T - 1 - t) * B:(T - t) * B, :]    # bwd half for time t
        hcat_ref[t * B:(t + 1) * B, :] = jnp.where(fwd_lane, a, b_blk)

    # --- 4) FC tail: bf16 MXU operands, f32 accumulation, lane-dense output --
    h1 = jnp.maximum(
        jnp.dot(hcat_ref[...].astype(jnp.bfloat16), fc1_w_ref[...],
                preferred_element_type=jnp.float32) + fc1_b_ref[...],
        0.0)                                              # ReLU
    # Dropout(p=0.2) is identity at inference time (no mask applied).
    out_ref[...] = (jnp.dot(h1.astype(jnp.bfloat16), fc2_w_ref[...],
                            preferred_element_type=jnp.float32)
                    + fc2_b_ref[...]).astype(out_ref.dtype)


# ---------------------------------------------------------------------------
# Wrapper: embedding gather (glue) + weight re-layout + pallas_call
# ---------------------------------------------------------------------------
def bilstm_forward(token_ids, params):
    emb_tbl = params['embedding']                      # (V, E)
    B, T = token_ids.shape
    E = emb_tbl.shape[1]
    H = params['whh_f'].shape[1]
    H2, G = 2 * H, 8 * H
    tag = params['fc2_w'].shape[0]
    n1 = params['fc1_w'].shape[0]                      # 32
    FC_PAD = 128
    OUT_PAD = max(128, ((tag + 127) // 128) * 128)

    # Time-major embedding gather; also build the time-reversed copy so the
    # kernel's single input-projection matmul yields fwd AND bwd gate inputs.
    emb3 = jnp.take(emb_tbl, token_ids.T, axis=0)      # (T, B, E)
    x_fwd = emb3.reshape(T * B, E)                     # row block s = x_{t=s}
    x_bwd = emb3[::-1].reshape(T * B, E)               # row block s = x_{t=T-1-s}
    xcat = jnp.concatenate([x_fwd, x_bwd], axis=1).astype(jnp.bfloat16)

    # Combined input weights, gate-major / direction-minor columns
    # (col = gate*2H + dir*H + unit, gate order i,f,g,o):
    #   rows 0:E  = forward weights into dir-0 columns (zeros in dir-1)
    #   rows E:2E = backward weights into dir-1 columns (zeros in dir-0)
    wih_f_T = params['wih_f'].T.reshape(E, 4, H)
    wih_b_T = params['wih_b'].T.reshape(E, 4, H)
    zE = jnp.zeros((E, 4, H), jnp.float32)
    w_top = jnp.stack([wih_f_T, zE], axis=2).reshape(E, G)
    w_bot = jnp.stack([zE, wih_b_T], axis=2).reshape(E, G)
    W_ih = jnp.concatenate([w_top, w_bot], axis=0).astype(jnp.bfloat16)   # (2E, G)

    b_f = (params['bih_f'] + params['bhh_f']).reshape(4, H)
    b_b = (params['bih_b'] + params['bhh_b']).reshape(4, H)
    b_all = jnp.stack([b_f, b_b], axis=1).reshape(1, G).astype(jnp.float32)

    # Block-stacked recurrent weights: rows 0:H act on h_f, rows H:2H on h_b.
    whh_f_T = params['whh_f'].T.reshape(H, 4, H)
    whh_b_T = params['whh_b'].T.reshape(H, 4, H)
    zH = jnp.zeros((H, 4, H), jnp.float32)
    whh_top = jnp.stack([whh_f_T, zH], axis=2).reshape(H, G)
    whh_bot = jnp.stack([zH, whh_b_T], axis=2).reshape(H, G)
    W_hh = jnp.concatenate([whh_top, whh_bot], axis=0).astype(jnp.bfloat16)  # (2H, G)

    # FC tail weights: zero-padded to 128 lanes, bf16 operands (biases f32).
    fc1_wT = params['fc1_w'].T.astype(jnp.float32)     # (2H, 32)
    fc1_w_pad = (jnp.zeros((H2, FC_PAD), jnp.float32)
                 .at[:, :n1].set(fc1_wT).astype(jnp.bfloat16))
    fc1_b_pad = jnp.zeros((1, FC_PAD), jnp.float32).at[:, :n1].set(
        params['fc1_b'].reshape(1, -1))
    fc2_wT = params['fc2_w'].T.astype(jnp.float32)     # (32, tag)
    fc2_w_pad = (jnp.zeros((FC_PAD, OUT_PAD), jnp.float32)
                 .at[:n1, :tag].set(fc2_wT).astype(jnp.bfloat16))
    fc2_b_pad = jnp.zeros((1, OUT_PAD), jnp.float32).at[:, :tag].set(
        params['fc2_b'].reshape(1, -1))

    inputs = [xcat, W_ih, b_all, W_hh,
              fc1_w_pad, fc1_b_pad, fc2_w_pad, fc2_b_pad]

    def full_spec(a):
        nd = a.ndim
        return pl.BlockSpec(a.shape, lambda *_, _nd=nd: (0,) * _nd)

    kernel = functools.partial(bilstm_kernel, T=T, B=B, H=H)

    out2d = pl.pallas_call(
        kernel,
        grid=(1,),
        in_specs=[full_spec(a) for a in inputs],
        out_specs=pl.BlockSpec((T * B, OUT_PAD), lambda *_: (0, 0)),
        out_shape=jax.ShapeDtypeStruct((T * B, OUT_PAD), jnp.float32),
        scratch_shapes=[
            pltpu.VMEM((T * B, G), jnp.float32),    # merged gate inputs zin
            pltpu.VMEM((T * B, H2), jnp.float32),   # step-order hidden states
            pltpu.VMEM((T * B, H2), jnp.float32),   # time-order merged hidden
        ],
        compiler_params=pltpu.CompilerParams(
            dimension_semantics=("arbitrary",)),
        # TODO(synk): at serving batch sizes add a "parallel" batch-tile grid
        # axis (v7x second TensorCore / pipeline overlap) and set
        # vmem_limit_bytes for long sequences.
    )(*inputs)

    out = out2d[:, :tag].reshape(T, B, tag)            # time-major, tag lanes
    return jnp.transpose(out, (1, 0, 2))               # (B, T, tag)


# ---------------------------------------------------------------------------
# Pure-JAX reference (matches PyTorch BiLSTM forward in eval mode, f32)
# ---------------------------------------------------------------------------
def reference_forward(token_ids, params):
    emb = jnp.take(params['embedding'], token_ids, axis=0)  # (B, T, E)
    B, T, E = emb.shape
    H = params['whh_f'].shape[1]

    def run_dir(wih, whh, bih, bhh, reverse):
        h = jnp.zeros((B, H), jnp.float32)
        c = jnp.zeros((B, H), jnp.float32)
        hs = [None] * T
        order = range(T - 1, -1, -1) if reverse else range(T)
        for t in order:
            g = emb[:, t] @ wih.T + h @ whh.T + bih + bhh
            i_g = jax.nn.sigmoid(g[:, :H])
            f_g = jax.nn.sigmoid(g[:, H:2 * H])
            g_g = jnp.tanh(g[:, 2 * H:3 * H])
            o_g = jax.nn.sigmoid(g[:, 3 * H:])
            c = f_g * c + i_g * g_g
            h = o_g * jnp.tanh(c)
            hs[t] = h
        return jnp.stack(hs, axis=1)                     # (B, T, H)

    hf = run_dir(params['wih_f'], params['whh_f'],
                 params['bih_f'], params['bhh_f'], False)
    hb = run_dir(params['wih_b'], params['whh_b'],
                 params['bih_b'], params['bhh_b'], True)
    lstm_out = jnp.concatenate([hf, hb], axis=-1)        # (B, T, 2H)
    h1 = jax.nn.relu(lstm_out @ params['fc1_w'].T + params['fc1_b'])
    return h1 @ params['fc2_w'].T + params['fc2_b']


# ---------------------------------------------------------------------------
# Deterministic parameter init (shapes per module __init__)
# ---------------------------------------------------------------------------
def init_params(key, vocab_size, tagset_size, embedding_dim=64, hidden_dim=64):
    ks = jax.random.split(key, 16)
    H, E = hidden_dim, embedding_dim
    bound = 1.0 / jnp.sqrt(jnp.float32(H))

    def u(k, shape, b):
        return jax.random.uniform(k, shape, jnp.float32, -b, b)

    emb = jax.random.normal(ks[0], (vocab_size, E), jnp.float32)
    emb = emb.at[0].set(0.0)                             # padding_idx=0

    params = dict(
        embedding=emb,
        wih_f=u(ks[1], (4 * H, E), bound), whh_f=u(ks[2], (4 * H, H), bound),
        bih_f=u(ks[3], (4 * H,), bound),   bhh_f=u(ks[4], (4 * H,), bound),
        wih_b=u(ks[5], (4 * H, E), bound), whh_b=u(ks[6], (4 * H, H), bound),
        bih_b=u(ks[7], (4 * H,), bound),   bhh_b=u(ks[8], (4 * H,), bound),
        fc1_w=u(ks[9], (32, 2 * H), 1.0 / jnp.sqrt(jnp.float32(2 * H))),
        fc1_b=u(ks[10], (32,), 1.0 / jnp.sqrt(jnp.float32(2 * H))),
        fc2_w=u(ks[11], (tagset_size, 32), 1.0 / jnp.sqrt(jnp.float32(32))),
        fc2_b=u(ks[12], (tagset_size,), 1.0 / jnp.sqrt(jnp.float32(32))),
    )
    return params


if __name__ == "__main__":
    VOCAB, TAGSET, E, H = 50, 16, 64, 64
    B, T = 2, 8

    key = jax.random.PRNGKey(0)
    k_param, k_tok = jax.random.split(key)
    params = init_params(k_param, VOCAB, TAGSET, E, H)
    token_ids = jax.random.randint(k_tok, (B, T), 0, VOCAB, dtype=jnp.int32)

    out = bilstm_forward(token_ids, params)
    out = jax.block_until_ready(out)
    assert out.shape == (B, T, TAGSET), out.shape

    ref = reference_forward(token_ids, params)
    # LSTM + FC matmul operands are bf16 (f32 accumulation) on the MXU, so
    # allow a modest tolerance vs. the all-f32 reference.
    err = float(jnp.max(jnp.abs(out - ref)))
    assert err < 5e-2, err

    print("KERNEL_OK")
</pallas_src>

<mosaic_0001>
module attributes {stable_mosaic.version = 11 : i64} {
  func.func @bilstm_kernel(%arg0: i32, %arg1: memref<16x128xbf16, #tpu.memory_space<vmem>>, %arg2: memref<128x512xbf16, #tpu.memory_space<vmem>>, %arg3: memref<1x512xf32, #tpu.memory_space<vmem>>, %arg4: memref<128x512xbf16, #tpu.memory_space<vmem>>, %arg5: memref<128x128xbf16, #tpu.memory_space<vmem>>, %arg6: memref<1x128xf32, #tpu.memory_space<vmem>>, %arg7: memref<128x128xbf16, #tpu.memory_space<vmem>>, %arg8: memref<1x128xf32, #tpu.memory_space<vmem>>, %arg9: memref<16x128xf32, #tpu.memory_space<vmem>>, %arg10: memref<16x512xf32, #tpu.memory_space<vmem>>, %arg11: memref<16x128xf32, #tpu.memory_space<vmem>>, %arg12: memref<16x128xf32, #tpu.memory_space<vmem>>) attributes {dimension_semantics = [#tpu.dimension_semantics<arbitrary>], iteration_bounds = array<i64: 1>, scalar_prefetch = 0 : i64, scratch_operands = 3 : i64, tpu.core_type = #tpu.core_type<tc>, window_params = [{pipeline_mode = #tpu.pipeline_mode<synchronous>, transform_indices = @transform_0, window_bounds = array<i64: 16, 128>}, {pipeline_mode = #tpu.pipeline_mode<synchronous>, transform_indices = @transform_1, window_bounds = array<i64: 128, 512>}, {pipeline_mode = #tpu.pipeline_mode<synchronous>, transform_indices = @transform_2, window_bounds = array<i64: 1, 512>}, {pipeline_mode = #tpu.pipeline_mode<synchronous>, transform_indices = @transform_3, window_bounds = array<i64: 128, 512>}, {pipeline_mode = #tpu.pipeline_mode<synchronous>, transform_indices = @transform_4, window_bounds = array<i64: 128, 128>}, {pipeline_mode = #tpu.pipeline_mode<synchronous>, transform_indices = @transform_5, window_bounds = array<i64: 1, 128>}, {pipeline_mode = #tpu.pipeline_mode<synchronous>, transform_indices = @transform_6, window_bounds = array<i64: 128, 128>}, {pipeline_mode = #tpu.pipeline_mode<synchronous>, transform_indices = @transform_7, window_bounds = array<i64: 1, 128>}, {pipeline_mode = #tpu.pipeline_mode<synchronous>, transform_indices = @transform_8, window_bounds = array<i64: 16, 128>}]} {
    %c0 = arith.constant 0 : index
    %c0_0 = arith.constant 0 : index
    %0 = vector.load %arg1[%c0, %c0_0] : memref<16x128xbf16, #tpu.memory_space<vmem>>, vector<16x128xbf16>
    %c0_1 = arith.constant 0 : index
    %c0_2 = arith.constant 0 : index
    %1 = vector.load %arg2[%c0_1, %c0_2] : memref<128x512xbf16, #tpu.memory_space<vmem>>, vector<128x512xbf16>
    %cst = arith.constant dense<0.000000e+00> : vector<16x512xf32>
    %2 = tpu.matmul %0, %1, %cst {dimension_numbers = #tpu.dot_dimension_numbers<[1], [0], [0], [1], [0, 0, 1, 1], [], []>} : vector<16x128xbf16>, vector<128x512xbf16>, vector<16x512xf32> -> vector<16x512xf32>
    %c0_3 = arith.constant 0 : index
    %c0_4 = arith.constant 0 : index
    %3 = vector.load %arg3[%c0_3, %c0_4] : memref<1x512xf32, #tpu.memory_space<vmem>>, vector<1x512xf32>
    %4 = vector.broadcast %3 : vector<1x512xf32> to vector<16x512xf32>
    %5 = arith.addf %2, %4 : vector<16x512xf32>
    %c0_5 = arith.constant 0 : index
    %c0_6 = arith.constant 0 : index
    %6 = vector.load %arg10[%c0_5, %c0_6] : memref<16x512xf32, #tpu.memory_space<vmem>>, vector<16x512xf32>
    tpu.vector_store %arg10[%c0_5, %c0_6], %5 {strides = array<i32>} : memref<16x512xf32, #tpu.memory_space<vmem>>, vector<16x512xf32>,
    %cst_7 = arith.constant 0.000000e+00 : bf16
    %7 = vector.broadcast %cst_7 : bf16 to vector<2x128xbf16>
    %cst_8 = arith.constant 0.000000e+00 : f32
    %8 = vector.broadcast %cst_8 : f32 to vector<2x128xf32>
    %c0_9 = arith.constant 0 : index
    %c0_10 = arith.constant 0 : index
    %9 = vector.load %arg10[%c0_9, %c0_10] : memref<16x512xf32, #tpu.memory_space<vmem>>, vector<2x512xf32>
    %c0_11 = arith.constant 0 : index
    %c0_12 = arith.constant 0 : index
    %10 = vector.load %arg4[%c0_11, %c0_12] : memref<128x512xbf16, #tpu.memory_space<vmem>>, vector<128x512xbf16>
    %cst_13 = arith.constant dense<0.000000e+00> : vector<2x512xf32>
    %11 = tpu.matmul %7, %10, %cst_13 {dimension_numbers = #tpu.dot_dimension_numbers<[1], [0], [0], [1], [0, 0, 1, 1], [], []>} : vector<2x128xbf16>, vector<128x512xbf16>, vector<2x512xf32> -> vector<2x512xf32>
    %12 = arith.addf %9, %11 : vector<2x512xf32>
    %13 = vector.extract_strided_slice %12 {offsets = [0, 0], sizes = [2, 128], strides = [1, 1]} : vector<2x512xf32> to vector<2x128xf32>
    %14 = arith.negf %13 : vector<2x128xf32>
    %15 = math.exp %14 : vector<2x128xf32>
    %cst_14 = arith.constant 1.000000e+00 : f32
    %16 = vector.broadcast %cst_14 : f32 to vector<2x128xf32>
    %17 = arith.addf %16, %15 : vector<2x128xf32>
    %18 = arith.divf %16, %17 : vector<2x128xf32>
    %19 = vector.extract_strided_slice %12 {offsets = [0, 128], sizes = [2, 128], strides = [1, 1]} : vector<2x512xf32> to vector<2x128xf32>
    %20 = arith.negf %19 : vector<2x128xf32>
    %21 = math.exp %20 : vector<2x128xf32>
    %cst_15 = arith.constant 1.000000e+00 : f32
    %22 = vector.broadcast %cst_15 : f32 to vector<2x128xf32>
    %23 = arith.addf %22, %21 : vector<2x128xf32>
    %24 = arith.divf %22, %23 : vector<2x128xf32>
    %25 = vector.extract_strided_slice %12 {offsets = [0, 256], sizes = [2, 128], strides = [1, 1]} : vector<2x512xf32> to vector<2x128xf32>
    %26 = math.tanh %25 : vector<2x128xf32>
    %27 = vector.extract_strided_slice %12 {offsets = [0, 384], sizes = [2, 128], strides = [1, 1]} : vector<2x512xf32> to vector<2x128xf32>
    %28 = arith.negf %27 : vector<2x128xf32>
    %29 = math.exp %28 : vector<2x128xf32>
    %cst_16 = arith.constant 1.000000e+00 : f32
    %30 = vector.broadcast %cst_16 : f32 to vector<2x128xf32>
    %31 = arith.addf %30, %29 : vector<2x128xf32>
    %32 = arith.divf %30, %31 : vector<2x128xf32>
    %33 = arith.mulf %24, %8 : vector<2x128xf32>
    %34 = arith.mulf %18, %26 : vector<2x128xf32>
    %35 = arith.addf %33, %34 : vector<2x128xf32>
    %36 = math.tanh %35 : vector<2x128xf32>
    %37 = arith.mulf %32, %36 : vector<2x128xf32>
    %38 = arith.truncf %37 : vector<2x128xf32> to vector<2x128xbf16>
    %c0_17 = arith.constant 0 : index
    %c0_18 = arith.constant 0 : index
    %39 = vector.load %arg11[%c0_17, %c0_18] : memref<16x128xf32, #tpu.memory_space<vmem>>, vector<2x128xf32>
    tpu.vector_store %arg11[%c0_17, %c0_18], %37 {strides = array<i32>} : memref<16x128xf32, #tpu.memory_space<vmem>>, vector<2x128xf32>,
    %c2 = arith.constant 2 : index
    %c0_19 = arith.constant 0 : index
    %40 = vector.load %arg10[%c2, %c0_19] : memref<16x512xf32, #tpu.memory_space<vmem>>, vector<2x512xf32>
    %c0_20 = arith.constant 0 : index
    %c0_21 = arith.constant 0 : index
    %41 = vector.load %arg4[%c0_20, %c0_21] : memref<128x512xbf16, #tpu.memory_space<vmem>>, vector<128x512xbf16>
    %cst_22 = arith.constant dense<0.000000e+00> : vector<2x512xf32>
    %42 = tpu.matmul %38, %41, %cst_22 {dimension_numbers = #tpu.dot_dimension_numbers<[1], [0], [0], [1], [0, 0, 1, 1], [], []>} : vector<2x128xbf16>, vector<128x512xbf16>, vector<2x512xf32> -> vector<2x512xf32>
    %43 = arith.addf %40, %42 : vector<2x512xf32>
    %44 = vector.extract_strided_slice %43 {offsets = [0, 0], sizes = [2, 128], strides = [1, 1]} : vector<2x512xf32> to vector<2x128xf32>
    %45 = arith.negf %44 : vector<2x128xf32>
    %46 = math.exp %45 : vector<2x128xf32>
    %cst_23 = arith.constant 1.000000e+00 : f32
    %47 = vector.broadcast %cst_23 : f32 to vector<2x128xf32>
    %48 = arith.addf %47, %46 : vector<2x128xf32>
    %49 = arith.divf %47, %48 : vector<2x128xf32>
    %50 = vector.extract_strided_slice %43 {offsets = [0, 128], sizes = [2, 128], strides = [1, 1]} : vector<2x512xf32> to vector<2x128xf32>
    %51 = arith.negf %50 : vector<2x128xf32>
    %52 = math.exp %51 : vector<2x128xf32>
    %cst_24 = arith.constant 1.000000e+00 : f32
    %53 = vector.broadcast %cst_24 : f32 to vector<2x128xf32>
    %54 = arith.addf %53, %52 : vector<2x128xf32>
    %55 = arith.divf %53, %54 : vector<2x128xf32>
    %56 = vector.extract_strided_slice %43 {offsets = [0, 256], sizes = [2, 128], strides = [1, 1]} : vector<2x512xf32> to vector<2x128xf32>
    %57 = math.tanh %56 : vector<2x128xf32>
    %58 = vector.extract_strided_slice %43 {offsets = [0, 384], sizes = [2, 128], strides = [1, 1]} : vector<2x512xf32> to vector<2x128xf32>
    %59 = arith.negf %58 : vector<2x128xf32>
    %60 = math.exp %59 : vector<2x128xf32>
    %cst_25 = arith.constant 1.000000e+00 : f32
    %61 = vector.broadcast %cst_25 : f32 to vector<2x128xf32>
    %62 = arith.addf %61, %60 : vector<2x128xf32>
    %63 = arith.divf %61, %62 : vector<2x128xf32>
    %64 = arith.mulf %55, %35 : vector<2x128xf32>
    %65 = arith.mulf %49, %57 : vector<2x128xf32>
    %66 = arith.addf %64, %65 : vector<2x128xf32>
    %67 = math.tanh %66 : vector<2x128xf32>
    %68 = arith.mulf %63, %67 : vector<2x128xf32>
    %69 = arith.truncf %68 : vector<2x128xf32> to vector<2x128xbf16>
    %c2_26 = arith.constant 2 : index
    %c0_27 = arith.constant 0 : index
    %70 = vector.load %arg11[%c2_26, %c0_27] : memref<16x128xf32, #tpu.memory_space<vmem>>, vector<2x128xf32>
    tpu.vector_store %arg11[%c2_26, %c0_27], %68 {strides = array<i32>} : memref<16x128xf32, #tpu.memory_space<vmem>>, vector<2x128xf32>,
    %c4 = arith.constant 4 : index
    %c0_28 = arith.constant 0 : index
    %71 = vector.load %arg10[%c4, %c0_28] : memref<16x512xf32, #tpu.memory_space<vmem>>, vector<2x512xf32>
    %c0_29 = arith.constant 0 : index
    %c0_30 = arith.constant 0 : index
    %72 = vector.load %arg4[%c0_29, %c0_30] : memref<128x512xbf16, #tpu.memory_space<vmem>>, vector<128x512xbf16>
    %cst_31 = arith.constant dense<0.000000e+00> : vector<2x512xf32>
    %73 = tpu.matmul %69, %72, %cst_31 {dimension_numbers = #tpu.dot_dimension_numbers<[1], [0], [0], [1], [0, 0, 1, 1], [], []>} : vector<2x128xbf16>, vector<128x512xbf16>, vector<2x512xf32> -> vector<2x512xf32>
    %74 = arith.addf %71, %73 : vector<2x512xf32>
    %75 = vector.extract_strided_slice %74 {offsets = [0, 0], sizes = [2, 128], strides = [1, 1]} : vector<2x512xf32> to vector<2x128xf32>
    %76 = arith.negf %75 : vector<2x128xf32>
    %77 = math.exp %76 : vector<2x128xf32>
    %cst_32 = arith.constant 1.000000e+00 : f32
    %78 = vector.broadcast %cst_32 : f32 to vector<2x128xf32>
    %79 = arith.addf %78, %77 : vector<2x128xf32>
    %80 = arith.divf %78, %79 : vector<2x128xf32>
    %81 = vector.extract_strided_slice %74 {offsets = [0, 128], sizes = [2, 128], strides = [1, 1]} : vector<2x512xf32> to vector<2x128xf32>
    %82 = arith.negf %81 : vector<2x128xf32>
    %83 = math.exp %82 : vector<2x128xf32>
    %cst_33 = arith.constant 1.000000e+00 : f32
    %84 = vector.broadcast %cst_33 : f32 to vector<2x128xf32>
    %85 = arith.addf %84, %83 : vector<2x128xf32>
    %86 = arith.divf %84, %85 : vector<2x128xf32>
    %87 = vector.extract_strided_slice %74 {offsets = [0, 256], sizes = [2, 128], strides = [1, 1]} : vector<2x512xf32> to vector<2x128xf32>
    %88 = math.tanh %87 : vector<2x128xf32>
    %89 = vector.extract_strided_slice %74 {offsets = [0, 384], sizes = [2, 128], strides = [1, 1]} : vector<2x512xf32> to vector<2x128xf32>
    %90 = arith.negf %89 : vector<2x128xf32>
    %91 = math.exp %90 : vector<2x128xf32>
    %cst_34 = arith.constant 1.000000e+00 : f32
    %92 = vector.broadcast %cst_34 : f32 to vector<2x128xf32>
    %93 = arith.addf %92, %91 : vector<2x128xf32>
    %94 = arith.divf %92, %93 : vector<2x128xf32>
    %95 = arith.mulf %86, %66 : vector<2x128xf32>
    %96 = arith.mulf %80, %88 : vector<2x128xf32>
    %97 = arith.addf %95, %96 : vector<2x128xf32>
    %98 = math.tanh %97 : vector<2x128xf32>
    %99 = arith.mulf %94, %98 : vector<2x128xf32>
    %100 = arith.truncf %99 : vector<2x128xf32> to vector<2x128xbf16>
    %c4_35 = arith.constant 4 : index
    %c0_36 = arith.constant 0 : index
    %101 = vector.load %arg11[%c4_35, %c0_36] : memref<16x128xf32, #tpu.memory_space<vmem>>, vector<2x128xf32>
    tpu.vector_store %arg11[%c4_35, %c0_36], %99 {strides = array<i32>} : memref<16x128xf32, #tpu.memory_space<vmem>>, vector<2x128xf32>,
    %c6 = arith.constant 6 : index
    %c0_37 = arith.constant 0 : index
    %102 = vector.load %arg10[%c6, %c0_37] : memref<16x512xf32, #tpu.memory_space<vmem>>, vector<2x512xf32>
    %c0_38 = arith.constant 0 : index
    %c0_39 = arith.constant 0 : index
    %103 = vector.load %arg4[%c0_38, %c0_39] : memref<128x512xbf16, #tpu.memory_space<vmem>>, vector<128x512xbf16>
    %cst_40 = arith.constant dense<0.000000e+00> : vector<2x512xf32>
    %104 = tpu.matmul %100, %103, %cst_40 {dimension_numbers = #tpu.dot_dimension_numbers<[1], [0], [0], [1], [0, 0, 1, 1], [], []>} : vector<2x128xbf16>, vector<128x512xbf16>, vector<2x512xf32> -> vector<2x512xf32>
    %105 = arith.addf %102, %104 : vector<2x512xf32>
    %106 = vector.extract_strided_slice %105 {offsets = [0, 0], sizes = [2, 128], strides = [1, 1]} : vector<2x512xf32> to vector<2x128xf32>
    %107 = arith.negf %106 : vector<2x128xf32>
    %108 = math.exp %107 : vector<2x128xf32>
    %cst_41 = arith.constant 1.000000e+00 : f32
    %109 = vector.broadcast %cst_41 : f32 to vector<2x128xf32>
    %110 = arith.addf %109, %108 : vector<2x128xf32>
    %111 = arith.divf %109, %110 : vector<2x128xf32>
    %112 = vector.extract_strided_slice %105 {offsets = [0, 128], sizes = [2, 128], strides = [1, 1]} : vector<2x512xf32> to vector<2x128xf32>
    %113 = arith.negf %112 : vector<2x128xf32>
    %114 = math.exp %113 : vector<2x128xf32>
    %cst_42 = arith.constant 1.000000e+00 : f32
    %115 = vector.broadcast %cst_42 : f32 to vector<2x128xf32>
    %116 = arith.addf %115, %114 : vector<2x128xf32>
    %117 = arith.divf %115, %116 : vector<2x128xf32>
    %118 = vector.extract_strided_slice %105 {offsets = [0, 256], sizes = [2, 128], strides = [1, 1]} : vector<2x512xf32> to vector<2x128xf32>
    %119 = math.tanh %118 : vector<2x128xf32>
    %120 = vector.extract_strided_slice %105 {offsets = [0, 384], sizes = [2, 128], strides = [1, 1]} : vector<2x512xf32> to vector<2x128xf32>
    %121 = arith.negf %120 : vector<2x128xf32>
    %122 = math.exp %121 : vector<2x128xf32>
    %cst_43 = arith.constant 1.000000e+00 : f32
    %123 = vector.broadcast %cst_43 : f32 to vector<2x128xf32>
    %124 = arith.addf %123, %122 : vector<2x128xf32>
    %125 = arith.divf %123, %124 : vector<2x128xf32>
    %126 = arith.mulf %117, %97 : vector<2x128xf32>
    %127 = arith.mulf %111, %119 : vector<2x128xf32>
    %128 = arith.addf %126, %127 : vector<2x128xf32>
    %129 = math.tanh %128 : vector<2x128xf32>
    %130 = arith.mulf %125, %129 : vector<2x128xf32>
    %131 = arith.truncf %130 : vector<2x128xf32> to vector<2x128xbf16>
    %c6_44 = arith.constant 6 : index
    %c0_45 = arith.constant 0 : index
    %132 = vector.load %arg11[%c6_44, %c0_45] : memref<16x128xf32, #tpu.memory_space<vmem>>, vector<2x128xf32>
    tpu.vector_store %arg11[%c6_44, %c0_45], %130 {strides = array<i32>} : memref<16x128xf32, #tpu.memory_space<vmem>>, vector<2x128xf32>,
    %c8 = arith.constant 8 : index
    %c0_46 = arith.constant 0 : index
    %133 = vector.load %arg10[%c8, %c0_46] : memref<16x512xf32, #tpu.memory_space<vmem>>, vector<2x512xf32>
    %c0_47 = arith.constant 0 : index
    %c0_48 = arith.constant 0 : index
    %134 = vector.load %arg4[%c0_47, %c0_48] : memref<128x512xbf16, #tpu.memory_space<vmem>>, vector<128x512xbf16>
    %cst_49 = arith.constant dense<0.000000e+00> : vector<2x512xf32>
    %135 = tpu.matmul %131, %134, %cst_49 {dimension_numbers = #tpu.dot_dimension_numbers<[1], [0], [0], [1], [0, 0, 1, 1], [], []>} : vector<2x128xbf16>, vector<128x512xbf16>, vector<2x512xf32> -> vector<2x512xf32>
    %136 = arith.addf %133, %135 : vector<2x512xf32>
    %137 = vector.extract_strided_slice %136 {offsets = [0, 0], sizes = [2, 128], strides = [1, 1]} : vector<2x512xf32> to vector<2x128xf32>
    %138 = arith.negf %137 : vector<2x128xf32>
    %139 = math.exp %138 : vector<2x128xf32>
    %cst_50 = arith.constant 1.000000e+00 : f32
    %140 = vector.broadcast %cst_50 : f32 to vector<2x128xf32>
    %141 = arith.addf %140, %139 : vector<2x128xf32>
    %142 = arith.divf %140, %141 : vector<2x128xf32>
    %143 = vector.extract_strided_slice %136 {offsets = [0, 128], sizes = [2, 128], strides = [1, 1]} : vector<2x512xf32> to vector<2x128xf32>
    %144 = arith.negf %143 : vector<2x128xf32>
    %145 = math.exp %144 : vector<2x128xf32>
    %cst_51 = arith.constant 1.000000e+00 : f32
    %146 = vector.broadcast %cst_51 : f32 to vector<2x128xf32>
    %147 = arith.addf %146, %145 : vector<2x128xf32>
    %148 = arith.divf %146, %147 : vector<2x128xf32>
    %149 = vector.extract_strided_slice %136 {offsets = [0, 256], sizes = [2, 128], strides = [1, 1]} : vector<2x512xf32> to vector<2x128xf32>
    %150 = math.tanh %149 : vector<2x128xf32>
    %151 = vector.extract_strided_slice %136 {offsets = [0, 384], sizes = [2, 128], strides = [1, 1]} : vector<2x512xf32> to vector<2x128xf32>
    %152 = arith.negf %151 : vector<2x128xf32>
    %153 = math.exp %152 : vector<2x128xf32>
    %cst_52 = arith.constant 1.000000e+00 : f32
    %154 = vector.broadcast %cst_52 : f32 to vector<2x128xf32>
    %155 = arith.addf %154, %153 : vector<2x128xf32>
    %156 = arith.divf %154, %155 : vector<2x128xf32>
    %157 = arith.mulf %148, %128 : vector<2x128xf32>
    %158 = arith.mulf %142, %150 : vector<2x128xf32>
    %159 = arith.addf %157, %158 : vector<2x128xf32>
    %160 = math.tanh %159 : vector<2x128xf32>
    %161 = arith.mulf %156, %160 : vector<2x128xf32>
    %162 = arith.truncf %161 : vector<2x128xf32> to vector<2x128xbf16>
    %c8_53 = arith.constant 8 : index
    %c0_54 = arith.constant 0 : index
    %163 = vector.load %arg11[%c8_53, %c0_54] : memref<16x128xf32, #tpu.memory_space<vmem>>, vector<2x128xf32>
    tpu.vector_store %arg11[%c8_53, %c0_54], %161 {strides = array<i32>} : memref<16x128xf32, #tpu.memory_space<vmem>>, vector<2x128xf32>,
    %c10 = arith.constant 10 : index
    %c0_55 = arith.constant 0 : index
    %164 = vector.load %arg10[%c10, %c0_55] : memref<16x512xf32, #tpu.memory_space<vmem>>, vector<2x512xf32>
    %c0_56 = arith.constant 0 : index
    %c0_57 = arith.constant 0 : index
    %165 = vector.load %arg4[%c0_56, %c0_57] : memref<128x512xbf16, #tpu.memory_space<vmem>>, vector<128x512xbf16>
    %cst_58 = arith.constant dense<0.000000e+00> : vector<2x512xf32>
    %166 = tpu.matmul %162, %165, %cst_58 {dimension_numbers = #tpu.dot_dimension_numbers<[1], [0], [0], [1], [0, 0, 1, 1], [], []>} : vector<2x128xbf16>, vector<128x512xbf16>, vector<2x512xf32> -> vector<2x512xf32>
    %167 = arith.addf %164, %166 : vector<2x512xf32>
    %168 = vector.extract_strided_slice %167 {offsets = [0, 0], sizes = [2, 128], strides = [1, 1]} : vector<2x512xf32> to vector<2x128xf32>
    %169 = arith.negf %168 : vector<2x128xf32>
    %170 = math.exp %169 : vector<2x128xf32>
    %cst_59 = arith.constant 1.000000e+00 : f32
    %171 = vector.broadcast %cst_59 : f32 to vector<2x128xf32>
    %172 = arith.addf %171, %170 : vector<2x128xf32>
    %173 = arith.divf %171, %172 : vector<2x128xf32>
    %174 = vector.extract_strided_slice %167 {offsets = [0, 128], sizes = [2, 128], strides = [1, 1]} : vector<2x512xf32> to vector<2x128xf32>
    %175 = arith.negf %174 : vector<2x128xf32>
    %176 = math.exp %175 : vector<2x128xf32>
    %cst_60 = arith.constant 1.000000e+00 : f32
    %177 = vector.broadcast %cst_60 : f32 to vector<2x128xf32>
    %178 = arith.addf %177, %176 : vector<2x128xf32>
    %179 = arith.divf %177, %178 : vector<2x128xf32>
    %180 = vector.extract_strided_slice %167 {offsets = [0, 256], sizes = [2, 128], strides = [1, 1]} : vector<2x512xf32> to vector<2x128xf32>
    %181 = math.tanh %180 : vector<2x128xf32>
    %182 = vector.extract_strided_slice %167 {offsets = [0, 384], sizes = [2, 128], strides = [1, 1]} : vector<2x512xf32> to vector<2x128xf32>
    %183 = arith.negf %182 : vector<2x128xf32>
    %184 = math.exp %183 : vector<2x128xf32>
    %cst_61 = arith.constant 1.000000e+00 : f32
    %185 = vector.broadcast %cst_61 : f32 to vector<2x128xf32>
    %186 = arith.addf %185, %184 : vector<2x128xf32>
    %187 = arith.divf %185, %186 : vector<2x128xf32>
    %188 = arith.mulf %179, %159 : vector<2x128xf32>
    %189 = arith.mulf %173, %181 : vector<2x128xf32>
    %190 = arith.addf %188, %189 : vector<2x128xf32>
    %191 = math.tanh %190 : vector<2x128xf32>
    %192 = arith.mulf %187, %191 : vector<2x128xf32>
    %193 = arith.truncf %192 : vector<2x128xf32> to vector<2x128xbf16>
    %c10_62 = arith.constant 10 : index
    %c0_63 = arith.constant 0 : index
    %194 = vector.load %arg11[%c10_62, %c0_63] : memref<16x128xf32, #tpu.memory_space<vmem>>, vector<2x128xf32>
    tpu.vector_store %arg11[%c10_62, %c0_63], %192 {strides = array<i32>} : memref<16x128xf32, #tpu.memory_space<vmem>>, vector<2x128xf32>,
    %c12 = arith.constant 12 : index
    %c0_64 = arith.constant 0 : index
    %195 = vector.load %arg10[%c12, %c0_64] : memref<16x512xf32, #tpu.memory_space<vmem>>, vector<2x512xf32>
    %c0_65 = arith.constant 0 : index
    %c0_66 = arith.constant 0 : index
    %196 = vector.load %arg4[%c0_65, %c0_66] : memref<128x512xbf16, #tpu.memory_space<vmem>>, vector<128x512xbf16>
    %cst_67 = arith.constant dense<0.000000e+00> : vector<2x512xf32>
    %197 = tpu.matmul %193, %196, %cst_67 {dimension_numbers = #tpu.dot_dimension_numbers<[1], [0], [0], [1], [0, 0, 1, 1], [], []>} : vector<2x128xbf16>, vector<128x512xbf16>, vector<2x512xf32> -> vector<2x512xf32>
    %198 = arith.addf %195, %197 : vector<2x512xf32>
    %199 = vector.extract_strided_slice %198 {offsets = [0, 0], sizes = [2, 128], strides = [1, 1]} : vector<2x512xf32> to vector<2x128xf32>
    %200 = arith.negf %199 : vector<2x128xf32>
    %201 = math.exp %200 : vector<2x128xf32>
    %cst_68 = arith.constant 1.000000e+00 : f32
    %202 = vector.broadcast %cst_68 : f32 to vector<2x128xf32>
    %203 = arith.addf %202, %201 : vector<2x128xf32>
    %204 = arith.divf %202, %203 : vector<2x128xf32>
    %205 = vector.extract_strided_slice %198 {offsets = [0, 128], sizes = [2, 128], strides = [1, 1]} : vector<2x512xf32> to vector<2x128xf32>
    %206 = arith.negf %205 : vector<2x128xf32>
    %207 = math.exp %206 : vector<2x128xf32>
    %cst_69 = arith.constant 1.000000e+00 : f32
    %208 = vector.broadcast %cst_69 : f32 to vector<2x128xf32>
    %209 = arith.addf %208, %207 : vector<2x128xf32>
    %210 = arith.divf %208, %209 : vector<2x128xf32>
    %211 = vector.extract_strided_slice %198 {offsets = [0, 256], sizes = [2, 128], strides = [1, 1]} : vector<2x512xf32> to vector<2x128xf32>
    %212 = math.tanh %211 : vector<2x128xf32>
    %213 = vector.extract_strided_slice %198 {offsets = [0, 384], sizes = [2, 128], strides = [1, 1]} : vector<2x512xf32> to vector<2x128xf32>
    %214 = arith.negf %213 : vector<2x128xf32>
    %215 = math.exp %214 : vector<2x128xf32>
    %cst_70 = arith.constant 1.000000e+00 : f32
    %216 = vector.broadcast %cst_70 : f32 to vector<2x128xf32>
    %217 = arith.addf %216, %215 : vector<2x128xf32>
    %218 = arith.divf %216, %217 : vector<2x128xf32>
    %219 = arith.mulf %210, %190 : vector<2x128xf32>
    %220 = arith.mulf %204, %212 : vector<2x128xf32>
    %221 = arith.addf %219, %220 : vector<2x128xf32>
    %222 = math.tanh %221 : vector<2x128xf32>
    %223 = arith.mulf %218, %222 : vector<2x128xf32>
    %224 = arith.truncf %223 : vector<2x128xf32> to vector<2x128xbf16>
    %c12_71 = arith.constant 12 : index
    %c0_72 = arith.constant 0 : index
    %225 = vector.load %arg11[%c12_71, %c0_72] : memref<16x128xf32, #tpu.memory_space<vmem>>, vector<2x128xf32>
    tpu.vector_store %arg11[%c12_71, %c0_72], %223 {strides = array<i32>} : memref<16x128xf32, #tpu.memory_space<vmem>>, vector<2x128xf32>,
    %c14 = arith.constant 14 : index
    %c0_73 = arith.constant 0 : index
    %226 = vector.load %arg10[%c14, %c0_73] : memref<16x512xf32, #tpu.memory_space<vmem>>, vector<2x512xf32>
    %c0_74 = arith.constant 0 : index
    %c0_75 = arith.constant 0 : index
    %227 = vector.load %arg4[%c0_74, %c0_75] : memref<128x512xbf16, #tpu.memory_space<vmem>>, vector<128x512xbf16>
    %cst_76 = arith.constant dense<0.000000e+00> : vector<2x512xf32>
    %228 = tpu.matmul %224, %227, %cst_76 {dimension_numbers = #tpu.dot_dimension_numbers<[1], [0], [0], [1], [0, 0, 1, 1], [], []>} : vector<2x128xbf16>, vector<128x512xbf16>, vector<2x512xf32> -> vector<2x512xf32>
    %229 = arith.addf %226, %228 : vector<2x512xf32>
    %230 = vector.extract_strided_slice %229 {offsets = [0, 0], sizes = [2, 128], strides = [1, 1]} : vector<2x512xf32> to vector<2x128xf32>
    %231 = arith.negf %230 : vector<2x128xf32>
    %232 = math.exp %231 : vector<2x128xf32>
    %cst_77 = arith.constant 1.000000e+00 : f32
    %233 = vector.broadcast %cst_77 : f32 to vector<2x128xf32>
    %234 = arith.addf %233, %232 : vector<2x128xf32>
    %235 = arith.divf %233, %234 : vector<2x128xf32>
    %236 = vector.extract_strided_slice %229 {offsets = [0, 128], sizes = [2, 128], strides = [1, 1]} : vector<2x512xf32> to vector<2x128xf32>
    %237 = arith.negf %236 : vector<2x128xf32>
    %238 = math.exp %237 : vector<2x128xf32>
    %cst_78 = arith.constant 1.000000e+00 : f32
    %239 = vector.broadcast %cst_78 : f32 to vector<2x128xf32>
    %240 = arith.addf %239, %238 : vector<2x128xf32>
    %241 = arith.divf %239, %240 : vector<2x128xf32>
    %242 = vector.extract_strided_slice %229 {offsets = [0, 256], sizes = [2, 128], strides = [1, 1]} : vector<2x512xf32> to vector<2x128xf32>
    %243 = math.tanh %242 : vector<2x128xf32>
    %244 = vector.extract_strided_slice %229 {offsets = [0, 384], sizes = [2, 128], strides = [1, 1]} : vector<2x512xf32> to vector<2x128xf32>
    %245 = arith.negf %244 : vector<2x128xf32>
    %246 = math.exp %245 : vector<2x128xf32>
    %cst_79 = arith.constant 1.000000e+00 : f32
    %247 = vector.broadcast %cst_79 : f32 to vector<2x128xf32>
    %248 = arith.addf %247, %246 : vector<2x128xf32>
    %249 = arith.divf %247, %248 : vector<2x128xf32>
    %250 = arith.mulf %241, %221 : vector<2x128xf32>
    %251 = arith.mulf %235, %243 : vector<2x128xf32>
    %252 = arith.addf %250, %251 : vector<2x128xf32>
    %253 = math.tanh %252 : vector<2x128xf32>
    %254 = arith.mulf %249, %253 : vector<2x128xf32>
    %c14_80 = arith.constant 14 : index
    %c0_81 = arith.constant 0 : index
    %255 = vector.load %arg11[%c14_80, %c0_81] : memref<16x128xf32, #tpu.memory_space<vmem>>, vector<2x128xf32>
    tpu.vector_store %arg11[%c14_80, %c0_81], %254 {strides = array<i32>} : memref<16x128xf32, #tpu.memory_space<vmem>>, vector<2x128xf32>,
    %256 = tpu.iota {dimensions = array<i32: 1>} : vector<2x128xi32>
    %c64_i32 = arith.constant 64 : i32
    %257 = vector.broadcast %c64_i32 : i32 to vector<2x128xi32>
    %258 = arith.cmpi slt, %256, %257 : vector<2x128xi32>
    %c0_82 = arith.constant 0 : index
    %c0_83 = arith.constant 0 : index
    %259 = vector.load %arg11[%c0_82, %c0_83] : memref<16x128xf32, #tpu.memory_space<vmem>>, vector<2x128xf32>
    %c14_84 = arith.constant 14 : index
    %c0_85 = arith.constant 0 : index
    %260 = vector.load %arg11[%c14_84, %c0_85] : memref<16x128xf32, #tpu.memory_space<vmem>>, vector<2x128xf32>
    %261 = arith.select %258, %259, %260 : vector<2x128xi1>, vector<2x128xf32>
    %c0_86 = arith.constant 0 : index
    %c0_87 = arith.constant 0 : index
    %262 = vector.load %arg12[%c0_86, %c0_87] : memref<16x128xf32, #tpu.memory_space<vmem>>, vector<2x128xf32>
    tpu.vector_store %arg12[%c0_86, %c0_87], %261 {strides = array<i32>} : memref<16x128xf32, #tpu.memory_space<vmem>>, vector<2x128xf32>,
    %c2_88 = arith.constant 2 : index
    %c0_89 = arith.constant 0 : index
    %263 = vector.load %arg11[%c2_88, %c0_89] : memref<16x128xf32, #tpu.memory_space<vmem>>, vector<2x128xf32>
    %c12_90 = arith.constant 12 : index
    %c0_91 = arith.constant 0 : index
    %264 = vector.load %arg11[%c12_90, %c0_91] : memref<16x128xf32, #tpu.memory_space<vmem>>, vector<2x128xf32>
    %265 = arith.select %258, %263, %264 : vector<2x128xi1>, vector<2x128xf32>
    %c2_92 = arith.constant 2 : index
    %c0_93 = arith.constant 0 : index
    %266 = vector.load %arg12[%c2_92, %c0_93] : memref<16x128xf32, #tpu.memory_space<vmem>>, vector<2x128xf32>
    tpu.vector_store %arg12[%c2_92, %c0_93], %265 {strides = array<i32>} : memref<16x128xf32, #tpu.memory_space<vmem>>, vector<2x128xf32>,
    %c4_94 = arith.constant 4 : index
    %c0_95 = arith.constant 0 : index
    %267 = vector.load %arg11[%c4_94, %c0_95] : memref<16x128xf32, #tpu.memory_space<vmem>>, vector<2x128xf32>
    %c10_96 = arith.constant 10 : index
    %c0_97 = arith.constant 0 : index
    %268 = vector.load %arg11[%c10_96, %c0_97] : memref<16x128xf32, #tpu.memory_space<vmem>>, vector<2x128xf32>
    %269 = arith.select %258, %267, %268 : vector<2x128xi1>, vector<2x128xf32>
    %c4_98 = arith.constant 4 : index
    %c0_99 = arith.constant 0 : index
    %270 = vector.load %arg12[%c4_98, %c0_99] : memref<16x128xf32, #tpu.memory_space<vmem>>, vector<2x128xf32>
    tpu.vector_store %arg12[%c4_98, %c0_99], %269 {strides = array<i32>} : memref<16x128xf32, #tpu.memory_space<vmem>>, vector<2x128xf32>,
    %c6_100 = arith.constant 6 : index
    %c0_101 = arith.constant 0 : index
    %271 = vector.load %arg11[%c6_100, %c0_101] : memref<16x128xf32, #tpu.memory_space<vmem>>, vector<2x128xf32>
    %c8_102 = arith.constant 8 : index
    %c0_103 = arith.constant 0 : index
    %272 = vector.load %arg11[%c8_102, %c0_103] : memref<16x128xf32, #tpu.memory_space<vmem>>, vector<2x128xf32>
    %273 = arith.select %258, %271, %272 : vector<2x128xi1>, vector<2x128xf32>
    %c6_104 = arith.constant 6 : index
    %c0_105 = arith.constant 0 : index
    %274 = vector.load %arg12[%c6_104, %c0_105] : memref<16x128xf32, #tpu.memory_space<vmem>>, vector<2x128xf32>
    tpu.vector_store %arg12[%c6_104, %c0_105], %273 {strides = array<i32>} : memref<16x128xf32, #tpu.memory_space<vmem>>, vector<2x128xf32>,
    %c8_106 = arith.constant 8 : index
    %c0_107 = arith.constant 0 : index
    %275 = vector.load %arg11[%c8_106, %c0_107] : memref<16x128xf32, #tpu.memory_space<vmem>>, vector<2x128xf32>
    %c6_108 = arith.constant 6 : index
    %c0_109 = arith.constant 0 : index
    %276 = vector.load %arg11[%c6_108, %c0_109] : memref<16x128xf32, #tpu.memory_space<vmem>>, vector<2x128xf32>
    %277 = arith.select %258, %275, %276 : vector<2x128xi1>, vector<2x128xf32>
    %c8_110 = arith.constant 8 : index
    %c0_111 = arith.constant 0 : index
    %278 = vector.load %arg12[%c8_110, %c0_111] : memref<16x128xf32, #tpu.memory_space<vmem>>, vector<2x128xf32>
    tpu.vector_store %arg12[%c8_110, %c0_111], %277 {strides = array<i32>} : memref<16x128xf32, #tpu.memory_space<vmem>>, vector<2x128xf32>,
    %c10_112 = arith.constant 10 : index
    %c0_113 = arith.constant 0 : index
    %279 = vector.load %arg11[%c10_112, %c0_113] : memref<16x128xf32, #tpu.memory_space<vmem>>, vector<2x128xf32>
    %c4_114 = arith.constant 4 : index
    %c0_115 = arith.constant 0 : index
    %280 = vector.load %arg11[%c4_114, %c0_115] : memref<16x128xf32, #tpu.memory_space<vmem>>, vector<2x128xf32>
    %281 = arith.select %258, %279, %280 : vector<2x128xi1>, vector<2x128xf32>
    %c10_116 = arith.constant 10 : index
    %c0_117 = arith.constant 0 : index
    %282 = vector.load %arg12[%c10_116, %c0_117] : memref<16x128xf32, #tpu.memory_space<vmem>>, vector<2x128xf32>
    tpu.vector_store %arg12[%c10_116, %c0_117], %281 {strides = array<i32>} : memref<16x128xf32, #tpu.memory_space<vmem>>, vector<2x128xf32>,
    %c12_118 = arith.constant 12 : index
    %c0_119 = arith.constant 0 : index
    %283 = vector.load %arg11[%c12_118, %c0_119] : memref<16x128xf32, #tpu.memory_space<vmem>>, vector<2x128xf32>
    %c2_120 = arith.constant 2 : index
    %c0_121 = arith.constant 0 : index
    %284 = vector.load %arg11[%c2_120, %c0_121] : memref<16x128xf32, #tpu.memory_space<vmem>>, vector<2x128xf32>
    %285 = arith.select %258, %283, %284 : vector<2x128xi1>, vector<2x128xf32>
    %c12_122 = arith.constant 12 : index
    %c0_123 = arith.constant 0 : index
    %286 = vector.load %arg12[%c12_122, %c0_123] : memref<16x128xf32, #tpu.memory_space<vmem>>, vector<2x128xf32>
    tpu.vector_store %arg12[%c12_122, %c0_123], %285 {strides = array<i32>} : memref<16x128xf32, #tpu.memory_space<vmem>>, vector<2x128xf32>,
    %c14_124 = arith.constant 14 : index
    %c0_125 = arith.constant 0 : index
    %287 = vector.load %arg11[%c14_124, %c0_125] : memref<16x128xf32, #tpu.memory_space<vmem>>, vector<2x128xf32>
    %c0_126 = arith.constant 0 : index
    %c0_127 = arith.constant 0 : index
    %288 = vector.load %arg11[%c0_126, %c0_127] : memref<16x128xf32, #tpu.memory_space<vmem>>, vector<2x128xf32>
    %289 = arith.select %258, %287, %288 : vector<2x128xi1>, vector<2x128xf32>
    %c14_128 = arith.constant 14 : index
    %c0_129 = arith.constant 0 : index
    %290 = vector.load %arg12[%c14_128, %c0_129] : memref<16x128xf32, #tpu.memory_space<vmem>>, vector<2x128xf32>
    tpu.vector_store %arg12[%c14_128, %c0_129], %289 {strides = array<i32>} : memref<16x128xf32, #tpu.memory_space<vmem>>, vector<2x128xf32>,
    %c0_130 = arith.constant 0 : index
    %c0_131 = arith.constant 0 : index
    %291 = vector.load %arg12[%c0_130, %c0_131] : memref<16x128xf32, #tpu.memory_space<vmem>>, vector<16x128xf32>
    %292 = arith.truncf %291 : vector<16x128xf32> to vector<16x128xbf16>
    %c0_132 = arith.constant 0 : index
    %c0_133 = arith.constant 0 : index
    %293 = vector.load %arg5[%c0_132, %c0_133] : memref<128x128xbf16, #tpu.memory_space<vmem>>, vector<128x128xbf16>
    %cst_134 = arith.constant dense<0.000000e+00> : vector<16x128xf32>
    %294 = tpu.matmul %292, %293, %cst_134 {dimension_numbers = #tpu.dot_dimension_numbers<[1], [0], [0], [1], [0, 0, 1, 1], [], []>} : vector<16x128xbf16>, vector<128x128xbf16>, vector<16x128xf32> -> vector<16x128xf32>
    %c0_135 = arith.constant 0 : index
    %c0_136 = arith.constant 0 : index
    %295 = vector.load %arg6[%c0_135, %c0_136] : memref<1x128xf32, #tpu.memory_space<vmem>>, vector<1x128xf32>
    %296 = vector.broadcast %295 : vector<1x128xf32> to vector<16x128xf32>
    %297 = arith.addf %294, %296 : vector<16x128xf32>
    %cst_137 = arith.constant 0.000000e+00 : f32
    %298 = vector.broadcast %cst_137 : f32 to vector<16x128xf32>
    %299 = arith.maximumf %297, %298 : vector<16x128xf32>
    %300 = arith.truncf %299 : vector<16x128xf32> to vector<16x128xbf16>
    %c0_138 = arith.constant 0 : index
    %c0_139 = arith.constant 0 : index
    %301 = vector.load %arg7[%c0_138, %c0_139] : memref<128x128xbf16, #tpu.memory_space<vmem>>, vector<128x128xbf16>
    %cst_140 = arith.constant dense<0.000000e+00> : vector<16x128xf32>
    %302 = tpu.matmul %300, %301, %cst_140 {dimension_numbers = #tpu.dot_dimension_numbers<[1], [0], [0], [1], [0, 0, 1, 1], [], []>} : vector<16x128xbf16>, vector<128x128xbf16>, vector<16x128xf32> -> vector<16x128xf32>
    %c0_141 = arith.constant 0 : index
    %c0_142 = arith.constant 0 : index
    %303 = vector.load %arg8[%c0_141, %c0_142] : memref<1x128xf32, #tpu.memory_space<vmem>>, vector<1x128xf32>
    %304 = vector.broadcast %303 : vector<1x128xf32> to vector<16x128xf32>
    %305 = arith.addf %302, %304 : vector<16x128xf32>
    %c0_143 = arith.constant 0 : index
    %c0_144 = arith.constant 0 : index
    %306 = vector.load %arg9[%c0_143, %c0_144] : memref<16x128xf32, #tpu.memory_space<vmem>>, vector<16x128xf32>
    tpu.vector_store %arg9[%c0_143, %c0_144], %305 {strides = array<i32>} : memref<16x128xf32, #tpu.memory_space<vmem>>, vector<16x128xf32>,
    return
  }
  func.func @transform_0(%arg0: i32) -> (i32, i32) {
    %c0_i32 = arith.constant 0 : i32
    %c0_i32_0 = arith.constant 0 : i32
    %c0_i32_1 = arith.constant 0 : i32
    return %c0_i32, %c0_i32_0 : i32, i32
  }
  func.func @transform_1(%arg0: i32) -> (i32, i32) {
    %c0_i32 = arith.constant 0 : i32
    %c0_i32_0 = arith.constant 0 : i32
    %c0_i32_1 = arith.constant 0 : i32
    return %c0_i32, %c0_i32_0 : i32, i32
  }
  func.func @transform_2(%arg0: i32) -> (i32, i32) {
    %c0_i32 = arith.constant 0 : i32
    %c0_i32_0 = arith.constant 0 : i32
    %c0_i32_1 = arith.constant 0 : i32
    return %c0_i32, %c0_i32_0 : i32, i32
  }
  func.func @transform_3(%arg0: i32) -> (i32, i32) {
    %c0_i32 = arith.constant 0 : i32
    %c0_i32_0 = arith.constant 0 : i32
    %c0_i32_1 = arith.constant 0 : i32
    return %c0_i32, %c0_i32_0 : i32, i32
  }
  func.func @transform_4(%arg0: i32) -> (i32, i32) {
    %c0_i32 = arith.constant 0 : i32
    %c0_i32_0 = arith.constant 0 : i32
    %c0_i32_1 = arith.constant 0 : i32
    return %c0_i32, %c0_i32_0 : i32, i32
  }
  func.func @transform_5(%arg0: i32) -> (i32, i32) {
    %c0_i32 = arith.constant 0 : i32
    %c0_i32_0 = arith.constant 0 : i32
    %c0_i32_1 = arith.constant 0 : i32
    return %c0_i32, %c0_i32_0 : i32, i32
  }
  func.func @transform_6(%arg0: i32) -> (i32, i32) {
    %c0_i32 = arith.constant 0 : i32
    %c0_i32_0 = arith.constant 0 : i32
    %c0_i32_1 = arith.constant 0 : i32
    return %c0_i32, %c0_i32_0 : i32, i32
  }
  func.func @transform_7(%arg0: i32) -> (i32, i32) {
    %c0_i32 = arith.constant 0 : i32
    %c0_i32_0 = arith.constant 0 : i32
    %c0_i32_1 = arith.constant 0 : i32
    return %c0_i32, %c0_i32_0 : i32, i32
  }
  func.func @transform_8(%arg0: i32) -> (i32, i32) {
    %c0_i32 = arith.constant 0 : i32
    %c0_i32_0 = arith.constant 0 : i32
    %c0_i32_1 = arith.constant 0 : i32
    return %c0_i32, %c0_i32_0 : i32, i32
  }
}

</mosaic_0001>

<llo_original>
// kernel: tpu_custom_call.1
$region0: #{tpu_custom_call.1}
  #allocation0 [shape = 'u32[]', space=smem, size = 0x4, offset = 0x4, fixed_abs, tag = 'smem constant byte address 0x4 - core index']
  #allocation1 [shape = 'u32[144,128]{1,0:T(1,128)}', space=vmem, size = 0x12000, scoped, tag = 'internal scratch']
  #allocation2 [shape = 'f32[16,512]{1,0:T(8,128)}', space=vmem, size = 0x8000, scoped, tag = 'scratch operand']
  #allocation3 [shape = 'f32[16,128]{1,0:T(8,128)}', space=vmem, size = 0x2000, scoped, tag = 'scratch operand']
  #allocation4 [shape = 'f32[16,128]{1,0:T(8,128)}', space=vmem, size = 0x2000, scoped, tag = 'scratch operand']
  %s0 = inlined_call_operand.hbm [shape: bf16[16,128], index: 0, kind: input, shape index: {}]
  %s1 = inlined_call_operand.hbm [shape: bf16[128,512], index: 1, kind: input, shape index: {}]
  %s2 = inlined_call_operand.hbm [shape: f32[1,512], index: 2, kind: input, shape index: {}]
  %s3 = inlined_call_operand.hbm [shape: bf16[128,512], index: 3, kind: input, shape index: {}]
  %s4 = inlined_call_operand.hbm [shape: bf16[128,128], index: 4, kind: input, shape index: {}]
  %s5 = inlined_call_operand.vmem [shape: f32[1,128], index: 5, kind: input, shape index: {}]
  %s6 = inlined_call_operand.hbm [shape: bf16[128,128], index: 6, kind: input, shape index: {}]
  %s7 = inlined_call_operand.vmem [shape: f32[1,128], index: 7, kind: input, shape index: {}]
  %s8 = inlined_call_operand.hbm [shape: f32[16,128], index: 8, kind: output, shape index: {}]
  %s9 = sld [smem:[#allocation0]]
  $region66: #{tpu_custom_call.1} parent=0
    _
  %s11 = ssub.s32 1, %s9
  %s12 = scalar_select 0, %s11, %s9
  $region1: #{tpu_custom_call.1} parent=0
    #allocation5 [shape = 'u8[4096]{0}', space=vmem, size = 0x1000, scoped, tag = 'input window, operand 0, single buffered']
    #allocation6 [shape = 's32[1]{0}', space=sflag, size = 0x4, scoped, tag = 'scoped memory for tpu_custom_call.1']
    #allocation7 [shape = 's32[1]{0}', space=sflag, size = 0x4, scoped, tag = 'scoped memory for tpu_custom_call.1']
    #allocation8 [shape = 'u8[131072]{0}', space=vmem, size = 0x20000, scoped, tag = 'input window, operand 1, single buffered']
    #allocation9 [shape = 's32[1]{0}', space=sflag, size = 0x4, scoped, tag = 'scoped memory for tpu_custom_call.1']
    #allocation10 [shape = 'u8[2048]{0}', space=vmem, size = 0x800, scoped, tag = 'input window, operand 2, single buffered']
    #allocation11 [shape = 'u8[131072]{0}', space=vmem, size = 0x20000, scoped, tag = 'input window, operand 3, single buffered']
    #allocation12 [shape = 's32[1]{0}', space=sflag, size = 0x4, scoped, tag = 'scoped memory for tpu_custom_call.1']
    #allocation13 [shape = 'u8[32768]{0}', space=vmem, size = 0x8000, scoped, tag = 'input window, operand 4, single buffered']
    #allocation14 [shape = 'u8[32768]{0}', space=vmem, size = 0x8000, scoped, tag = 'input window, operand 6, single buffered']
    #allocation15 [shape = 's32[1]{0}', space=sflag, size = 0x4, scoped, tag = 'scoped memory for tpu_custom_call.1']
    #allocation16 [shape = 'u8[8192]{0}', space=vmem, size = 0x2000, scoped, tag = 'output window, operand 0, single buffered']
    %13 = vsyncpa [#allocation6], 0
    %14 = vsyncpa [#allocation9], 0
    %15 = vsyncpa [#allocation12], 0
    %16 = vsyncpa [#allocation15], 0
    %17 = vsyncpa [#allocation7], 0
    // Predicated region
    $region2: #{tpu_custom_call.1} parent=1 // pred_check
      _
    $region3: #{tpu_custom_call.1} parent=1 // pred_check_branch
      %19 = sbr.rel (0) target = $region5
    $region4: #{tpu_custom_call.1} parent=1 // pred_region
      %s21 = ssub.s32 128, 128
      %22 = vsyncadd [#allocation6], %s21
      %s23 = sshll.u32 [#allocation5], 4
      %s24 = int_to_ptr.vmem [resolvable:$true] %s23
      %29 = dma.hbm_to_vmem [thread:$0]  %s0, 128, %s24, [#allocation6], 64, 64, 4
    $region5: #{tpu_custom_call.1} parent=1 // pred_fallthru
      _
    // Predicated region
    $region6: #{tpu_custom_call.1} parent=1 // pred_check
      _
    $region7: #{tpu_custom_call.1} parent=1 // pred_check_branch
      %31 = sbr.rel (0) target = $region9
    $region8: #{tpu_custom_call.1} parent=1 // pred_region
      %s33 = ssub.s32 4096, 4096
      %34 = vsyncadd [#allocation9], %s33
      %s35 = sshll.u32 [#allocation8], 4
      %s36 = int_to_ptr.vmem [resolvable:$true] %s35
      %41 = dma.hbm_to_vmem [thread:$0]  %s1, 4096, %s36, [#allocation9], 256, 256, 16
    $region9: #{tpu_custom_call.1} parent=1 // pred_fallthru
      _
    // Predicated region
    $region10: #{tpu_custom_call.1} parent=1 // pred_check
      _
    $region11: #{tpu_custom_call.1} parent=1 // pred_check_branch
      %43 = sbr.rel (0) target = $region13
    $region12: #{tpu_custom_call.1} parent=1 // pred_region
      %s45 = ssub.s32 64, 64
      %46 = vsyncadd [#allocation9], %s45
      %s48 = sshll.u32 [#allocation10], 4
      %s49 = int_to_ptr.vmem [resolvable:$true] %s48
      %51 = dma.hbm_to_vmem [thread:$0]  %s2, 64, %s49, [#allocation9]
    $region13: #{tpu_custom_call.1} parent=1 // pred_fallthru
      _
    // Predicated region
    $region14: #{tpu_custom_call.1} parent=1 // pred_check
      _
    $region15: #{tpu_custom_call.1} parent=1 // pred_check_branch
      %53 = sbr.rel (0) target = $region17
    $region16: #{tpu_custom_call.1} parent=1 // pred_region
      %s55 = ssub.s32 4096, 4096
      %56 = vsyncadd [#allocation12], %s55
      %s57 = sshll.u32 [#allocation11], 4
      %s58 = int_to_ptr.vmem [resolvable:$true] %s57
      %63 = dma.hbm_to_vmem [thread:$0]  %s3, 4096, %s58, [#allocation12], 256, 256, 16
    $region17: #{tpu_custom_call.1} parent=1 // pred_fallthru
      _
    // Predicated region
    $region18: #{tpu_custom_call.1} parent=1 // pred_check
      _
    $region19: #{tpu_custom_call.1} parent=1 // pred_check_branch
      %65 = sbr.rel (0) target = $region21
    $region20: #{tpu_custom_call.1} parent=1 // pred_region
      %s67 = ssub.s32 1024, 1024
      %68 = vsyncadd [#allocation12], %s67
      %s69 = sshll.u32 [#allocation13], 4
      %s70 = int_to_ptr.vmem [resolvable:$true] %s69
      %75 = dma.hbm_to_vmem [thread:$0]  %s4, 1024, %s70, [#allocation12], 64, 64, 4
    $region21: #{tpu_custom_call.1} parent=1 // pred_fallthru
      _
    // Predicated region
    $region22: #{tpu_custom_call.1} parent=1 // pred_check
      _
    $region23: #{tpu_custom_call.1} parent=1 // pred_check_branch
      %77 = sbr.rel (0) target = $region25
    $region24: #{tpu_custom_call.1} parent=1 // pred_region
      _
    $region25: #{tpu_custom_call.1} parent=1 // pred_fallthru
      _
    // Predicated region
    $region26: #{tpu_custom_call.1} parent=1 // pred_check
      _
    $region27: #{tpu_custom_call.1} parent=1 // pred_check_branch
      %79 = sbr.rel (0) target = $region29
    $region28: #{tpu_custom_call.1} parent=1 // pred_region
      %s81 = ssub.s32 1024, 1024
      %82 = vsyncadd [#allocation15], %s81
      %s83 = sshll.u32 [#allocation14], 4
      %s84 = int_to_ptr.vmem [resolvable:$true] %s83
      %89 = dma.hbm_to_vmem [thread:$0]  %s6, 1024, %s84, [#allocation15], 64, 64, 4
    $region29: #{tpu_custom_call.1} parent=1 // pred_fallthru
      _
    // Predicated region
    $region30: #{tpu_custom_call.1} parent=1 // pred_check
      _
    $region31: #{tpu_custom_call.1} parent=1 // pred_check_branch
      %91 = sbr.rel (0) target = $region33
    $region32: #{tpu_custom_call.1} parent=1 // pred_region
      _
    $region33: #{tpu_custom_call.1} parent=1 // pred_fallthru
      _
    // Predicated region
    $region34: #{tpu_custom_call.1} parent=1 // pred_check
      _
    $region35: #{tpu_custom_call.1} parent=1 // pred_check_branch
      %93 = sbr.rel (0) target = $region37
    $region36: #{tpu_custom_call.1} parent=1 // pred_region
      %94 = dma.done [#allocation6], 128
    $region37: #{tpu_custom_call.1} parent=1 // pred_fallthru
      _
    // Predicated region
    $region38: #{tpu_custom_call.1} parent=1 // pred_check
      _
    $region39: #{tpu_custom_call.1} parent=1 // pred_check_branch
      %96 = sbr.rel (0) target = $region41
    $region40: #{tpu_custom_call.1} parent=1 // pred_region
      %97 = dma.done [#allocation9], 4096
    $region41: #{tpu_custom_call.1} parent=1 // pred_fallthru
      _
    // Predicated region
    $region42: #{tpu_custom_call.1} parent=1 // pred_check
      _
    $region43: #{tpu_custom_call.1} parent=1 // pred_check_branch
      %99 = sbr.rel (0) target = $region45
    $region44: #{tpu_custom_call.1} parent=1 // pred_region
      %100 = dma.done [#allocation9], 64
    $region45: #{tpu_custom_call.1} parent=1 // pred_fallthru
      _
    // Predicated region
    $region46: #{tpu_custom_call.1} parent=1 // pred_check
      _
    $region47: #{tpu_custom_call.1} parent=1 // pred_check_branch
      %102 = sbr.rel (0) target = $region49
    $region48: #{tpu_custom_call.1} parent=1 // pred_region
      %103 = dma.done [#allocation12], 4096
    $region49: #{tpu_custom_call.1} parent=1 // pred_fallthru
      _
    // Predicated region
    $region50: #{tpu_custom_call.1} parent=1 // pred_check
      _
    $region51: #{tpu_custom_call.1} parent=1 // pred_check_branch
      %105 = sbr.rel (0) target = $region53
    $region52: #{tpu_custom_call.1} parent=1 // pred_region
      %106 = dma.done [#allocation12], 1024
    $region53: #{tpu_custom_call.1} parent=1 // pred_fallthru
      _
    // Predicated region
    $region54: #{tpu_custom_call.1} parent=1 // pred_check
      _
    $region55: #{tpu_custom_call.1} parent=1 // pred_check_branch
      %108 = sbr.rel (0) target = $region57
    $region56: #{tpu_custom_call.1} parent=1 // pred_region
      %109 = dma.done [#allocation15], 1024
    $region57: #{tpu_custom_call.1} parent=1 // pred_fallthru
      _
    %v111 = vld [vmem:[#allocation5] sm:$0xf]
    %v112 = vld [vmem:[#allocation5 + $0x4] sm:$0xf]
    %v113 = vld [vmem:[#allocation8] sm:$0xff]
    %v114 = vld [vmem:[#allocation8 + $0x8] sm:$0xff]
    %v115 = vld [vmem:[#allocation8 + $0x10] sm:$0xff]
    %v116 = vld [vmem:[#allocation8 + $0x18] sm:$0xff]
    %v117 = vld [vmem:[#allocation8 + $0x20] sm:$0xff]
    %v118 = vld [vmem:[#allocation8 + $0x28] sm:$0xff]
    %v119 = vld [vmem:[#allocation8 + $0x30] sm:$0xff]
    %v120 = vld [vmem:[#allocation8 + $0x38] sm:$0xff]
    %v121 = vld [vmem:[#allocation8 + $0x40] sm:$0xff]
    %v122 = vld [vmem:[#allocation8 + $0x48] sm:$0xff]
    %v123 = vld [vmem:[#allocation8 + $0x50] sm:$0xff]
    %v124 = vld [vmem:[#allocation8 + $0x58] sm:$0xff]
    %v125 = vld [vmem:[#allocation8 + $0x60] sm:$0xff]
    %v126 = vld [vmem:[#allocation8 + $0x68] sm:$0xff]
    %v127 = vld [vmem:[#allocation8 + $0x70] sm:$0xff]
    %v128 = vld [vmem:[#allocation8 + $0x78] sm:$0xff]
    %v129 = vld [vmem:[#allocation8 + $0x80] sm:$0xff]
    %v130 = vld [vmem:[#allocation8 + $0x88] sm:$0xff]
    %v131 = vld [vmem:[#allocation8 + $0x90] sm:$0xff]
    %v132 = vld [vmem:[#allocation8 + $0x98] sm:$0xff]
    %v133 = vld [vmem:[#allocation8 + $0xa0] sm:$0xff]
    %v134 = vld [vmem:[#allocation8 + $0xa8] sm:$0xff]
    %v135 = vld [vmem:[#allocation8 + $0xb0] sm:$0xff]
    %v136 = vld [vmem:[#allocation8 + $0xb8] sm:$0xff]
    %v137 = vld [vmem:[#allocation8 + $0xc0] sm:$0xff]
    %v138 = vld [vmem:[#allocation8 + $0xc8] sm:$0xff]
    %v139 = vld [vmem:[#allocation8 + $0xd0] sm:$0xff]
    %v140 = vld [vmem:[#allocation8 + $0xd8] sm:$0xff]
    %v141 = vld [vmem:[#allocation8 + $0xe0] sm:$0xff]
    %v142 = vld [vmem:[#allocation8 + $0xe8] sm:$0xff]
    %v143 = vld [vmem:[#allocation8 + $0xf0] sm:$0xff]
    %v144 = vld [vmem:[#allocation8 + $0xf8] sm:$0xff]
    %v145 = vld [vmem:[#allocation10] sm:$0xf]
    %v147 = vlaneseq
    %v148 = vshrl.u32 %v147, 7
    %v149 = vsub.s32 0, %v148
    %v150 = vrot.slane %v145, %v149
    %v151 = vlaneseq
    %v152 = vshrl.u32 %v151, 7
    %v153 = vsub.s32 1, %v152
    %v154 = vrot.slane %v145, %v153
    %v155 = vlaneseq
    %v156 = vshrl.u32 %v155, 7
    %v157 = vsub.s32 2, %v156
    %v158 = vrot.slane %v145, %v157
    %v159 = vlaneseq
    %v160 = vshrl.u32 %v159, 7
    %v161 = vsub.s32 3, %v160
    %v162 = vrot.slane %v145, %v161
    %v169 = vunpack.c.l.b16 %v111
    %v170 = vunpack.c.l.b16 %v112
    %v171 = vpack.c.b16 %v170, %v169
    %v205 = vunpack.c.l.b16 %v113
    %v206 = vunpack.c.h.b16 %v113
    %v207 = vunpack.c.l.b16 %v114
    %v208 = vunpack.c.h.b16 %v114
    %v209 = vunpack.c.l.b16 %v115
    %v210 = vunpack.c.h.b16 %v115
    %v211 = vunpack.c.l.b16 %v116
    %v212 = vunpack.c.h.b16 %v116
    %v213 = vunpack.c.l.b16 %v117
    %v214 = vunpack.c.h.b16 %v117
    %v215 = vunpack.c.l.b16 %v118
    %v216 = vunpack.c.h.b16 %v118
    %v217 = vunpack.c.l.b16 %v119
    %v218 = vunpack.c.h.b16 %v119
    %v219 = vunpack.c.l.b16 %v120
    %v220 = vunpack.c.h.b16 %v120
    %v221 = vunpack.c.l.b16 %v121
    %v222 = vunpack.c.h.b16 %v121
    %v223 = vunpack.c.l.b16 %v122
    %v224 = vunpack.c.h.b16 %v122
    %v225 = vunpack.c.l.b16 %v123
    %v226 = vunpack.c.h.b16 %v123
    %v227 = vunpack.c.l.b16 %v124
    %v228 = vunpack.c.h.b16 %v124
    %v229 = vunpack.c.l.b16 %v125
    %v230 = vunpack.c.h.b16 %v125
    %v231 = vunpack.c.l.b16 %v126
    %v232 = vunpack.c.h.b16 %v126
    %v233 = vunpack.c.l.b16 %v127
    %v234 = vunpack.c.h.b16 %v127
    %v235 = vunpack.c.l.b16 %v128
    %v236 = vunpack.c.h.b16 %v128
    %v237 = vunpack.c.l.b16 %v129
    %v238 = vunpack.c.h.b16 %v129
    %v239 = vunpack.c.l.b16 %v130
    %v240 = vunpack.c.h.b16 %v130
    %v241 = vunpack.c.l.b16 %v131
    %v242 = vunpack.c.h.b16 %v131
    %v243 = vunpack.c.l.b16 %v132
    %v244 = vunpack.c.h.b16 %v132
    %v245 = vunpack.c.l.b16 %v133
    %v246 = vunpack.c.h.b16 %v133
    %v247 = vunpack.c.l.b16 %v134
    %v248 = vunpack.c.h.b16 %v134
    %v249 = vunpack.c.l.b16 %v135
    %v250 = vunpack.c.h.b16 %v135
    %v251 = vunpack.c.l.b16 %v136
    %v252 = vunpack.c.h.b16 %v136
    %v253 = vunpack.c.l.b16 %v137
    %v254 = vunpack.c.h.b16 %v137
    %v255 = vunpack.c.l.b16 %v138
    %v256 = vunpack.c.h.b16 %v138
    %v257 = vunpack.c.l.b16 %v139
    %v258 = vunpack.c.h.b16 %v139
    %v259 = vunpack.c.l.b16 %v140
    %v260 = vunpack.c.h.b16 %v140
    %v261 = vunpack.c.l.b16 %v141
    %v262 = vunpack.c.h.b16 %v141
    %v263 = vunpack.c.l.b16 %v142
    %v264 = vunpack.c.h.b16 %v142
    %v265 = vunpack.c.l.b16 %v143
    %v266 = vunpack.c.h.b16 %v143
    %v267 = vunpack.c.l.b16 %v144
    %v268 = vunpack.c.h.b16 %v144
    %v269 = vpack.c.b16 %v209, %v205
    %v270 = vpack.c.b16 %v210, %v206
    %v271 = vpack.c.b16 %v211, %v207
    %v272 = vpack.c.b16 %v212, %v208
    %v273 = vpack.c.b16 %v217, %v213
    %v274 = vpack.c.b16 %v218, %v214
    %v275 = vpack.c.b16 %v219, %v215
    %v276 = vpack.c.b16 %v220, %v216
    %v277 = vpack.c.b16 %v225, %v221
    %v278 = vpack.c.b16 %v226, %v222
    %v279 = vpack.c.b16 %v227, %v223
    %v280 = vpack.c.b16 %v228, %v224
    %v281 = vpack.c.b16 %v233, %v229
    %v282 = vpack.c.b16 %v234, %v230
    %v283 = vpack.c.b16 %v235, %v231
    %v284 = vpack.c.b16 %v236, %v232
    %v285 = vpack.c.b16 %v241, %v237
    %v286 = vpack.c.b16 %v242, %v238
    %v287 = vpack.c.b16 %v243, %v239
    %v288 = vpack.c.b16 %v244, %v240
    %v289 = vpack.c.b16 %v249, %v245
    %v290 = vpack.c.b16 %v250, %v246
    %v291 = vpack.c.b16 %v251, %v247
    %v292 = vpack.c.b16 %v252, %v248
    %v293 = vpack.c.b16 %v257, %v253
    %v294 = vpack.c.b16 %v258, %v254
    %v295 = vpack.c.b16 %v259, %v255
    %v296 = vpack.c.b16 %v260, %v256
    %v297 = vpack.c.b16 %v265, %v261
    %v298 = vpack.c.b16 %v266, %v262
    %v299 = vpack.c.b16 %v267, %v263
    %v300 = vpack.c.b16 %v268, %v264
    %333 = vmatprep.subr.bf16.mxu0 %v298
    %334 = vmatpush1.bf16.msra.mxu0 %v297
    %335 = vmatprep.subr.bf16.mxu0 %v294
    %336 = vmatpush1.bf16.msra.mxu0 %v293
    %337 = vmatprep.subr.bf16.mxu0 %v290
    %338 = vmatpush1.bf16.msra.mxu0 %v289
    %339 = vmatprep.subr.bf16.mxu0 %v286
    %340 = vmatpush1.bf16.msra.mxu0 %v285
    %341 = vmatprep.subr.bf16.mxu0 %v282
    %342 = vmatpush1.bf16.msra.mxu0 %v281
    %343 = vmatprep.subr.bf16.mxu0 %v278
    %344 = vmatpush1.bf16.msra.mxu0 %v277
    %345 = vmatprep.subr.bf16.mxu0 %v274
    %346 = vmatpush1.bf16.msra.mxu0 %v273
    %347 = vmatprep.subr.bf16.mxu0 %v270
    %348 = vmatpush1.bf16.msra.mxu0 %v269
    %349 = vmatprep.subr.bf16.mxu0 0
    %350 = vmatpush2.bf16.msra.mxu0 0
    %351 = vmatprep.subr.bf16.mxu0 0
    %352 = vmatpush2.bf16.msra.mxu0 0
    %353 = vmatprep.subr.bf16.mxu0 0
    %354 = vmatpush2.bf16.msra.mxu0 0
    %355 = vmatprep.subr.bf16.mxu0 0
    %356 = vmatpush2.bf16.msra.mxu0 0
    %357 = vmatprep.subr.bf16.mxu0 0
    %358 = vmatpush2.bf16.msra.mxu0 0
    %359 = vmatprep.subr.bf16.mxu0 0
    %360 = vmatpush2.bf16.msra.mxu0 0
    %361 = vmatprep.subr.bf16.mxu0 0
    %362 = vmatpush2.bf16.msra.mxu0 0
    %363 = vmatprep.subr.bf16.mxu0 0
    %364 = vmatpush2.bf16.msra.mxu0 0
    %365 = vmatprep.mubr.bf16.mxu0 0
    %366 = vmatmul.mubr.bf16.gmra.mxu0 %v171
    %v367 = vpop.f32.mrf.mxu0
    %v368 = vadd.f32 %v150, %v367
    %v369 = vpop.f32.mrf.mxu0
    %v370 = vadd.f32 %v154, %v369
    %v371 = vpop.f32.mrf.mxu0
    %v372 = vadd.f32 %v150, %v371
    %v373 = vpop.f32.mrf.mxu0
    %v374 = vadd.f32 %v154, %v373
    %375 = vdwg.mxu0
    %376 = vmatprep.subr.bf16.mxu0 %v300
    %377 = vmatpush1.bf16.msra.mxu0 %v299
    %378 = vmatprep.subr.bf16.mxu0 %v296
    %379 = vmatpush1.bf16.msra.mxu0 %v295
    %380 = vmatprep.subr.bf16.mxu0 %v292
    %381 = vmatpush1.bf16.msra.mxu0 %v291
    %382 = vmatprep.subr.bf16.mxu0 %v288
    %383 = vmatpush1.bf16.msra.mxu0 %v287
    %384 = vmatprep.subr.bf16.mxu0 %v284
    %385 = vmatpush1.bf16.msra.mxu0 %v283
    %386 = vmatprep.subr.bf16.mxu0 %v280
    %387 = vmatpush1.bf16.msra.mxu0 %v279
    %388 = vmatprep.subr.bf16.mxu0 %v276
    %389 = vmatpush1.bf16.msra.mxu0 %v275
    %390 = vmatprep.subr.bf16.mxu0 %v272
    %391 = vmatpush1.bf16.msra.mxu0 %v271
    %392 = vmatprep.subr.bf16.mxu0 0
    %393 = vmatpush2.bf16.msra.mxu0 0
    %394 = vmatprep.subr.bf16.mxu0 0
    %395 = vmatpush2.bf16.msra.mxu0 0
    %396 = vmatprep.subr.bf16.mxu0 0
    %397 = vmatpush2.bf16.msra.mxu0 0
    %398 = vmatprep.subr.bf16.mxu0 0
    %399 = vmatpush2.bf16.msra.mxu0 0
    %400 = vmatprep.subr.bf16.mxu0 0
    %401 = vmatpush2.bf16.msra.mxu0 0
    %402 = vmatprep.subr.bf16.mxu0 0
    %403 = vmatpush2.bf16.msra.mxu0 0
    %404 = vmatprep.subr.bf16.mxu0 0
    %405 = vmatpush2.bf16.msra.mxu0 0
    %406 = vmatprep.subr.bf16.mxu0 0
    %407 = vmatpush2.bf16.msra.mxu0 0
    %408 = vmatprep.mubr.bf16.mxu0 0
    %409 = vmatmul.mubr.bf16.gmra.mxu0 %v171
    %v410 = vpop.f32.mrf.mxu0
    %v411 = vadd.f32 %v158, %v410
    %v412 = vpop.f32.mrf.mxu0
    %v413 = vadd.f32 %v162, %v412
    %v414 = vpop.f32.mrf.mxu0
    %v415 = vadd.f32 %v158, %v414
    %v416 = vpop.f32.mrf.mxu0
    %v417 = vadd.f32 %v162, %v416
    %418 = vdwg.mxu0
    %419 = vst [vmem:[#allocation2] sm:$0xff] %v368
    %420 = vst [vmem:[#allocation2 + $0x8] sm:$0xff] %v370
    %421 = vst [vmem:[#allocation2 + $0x10] sm:$0xff] %v411
    %422 = vst [vmem:[#allocation2 + $0x18] sm:$0xff] %v413
    %423 = vst [vmem:[#allocation2 + $0x20] sm:$0xff] %v372
    %424 = vst [vmem:[#allocation2 + $0x28] sm:$0xff] %v374
    %425 = vst [vmem:[#allocation2 + $0x30] sm:$0xff] %v415
    %426 = vst [vmem:[#allocation2 + $0x38] sm:$0xff] %v417
    %v427 = vld [vmem:[#allocation2] sm:$0x3]
    %v428 = vld [vmem:[#allocation2 + $0x8] sm:$0x3]
    %v429 = vld [vmem:[#allocation2 + $0x10] sm:$0x3]
    %v430 = vld [vmem:[#allocation2 + $0x18] sm:$0x3]
    %v431 = vld [vmem:[#allocation11] sm:$0xff]
    %v432 = vld [vmem:[#allocation11 + $0x8] sm:$0xff]
    %v433 = vld [vmem:[#allocation11 + $0x10] sm:$0xff]
    %v434 = vld [vmem:[#allocation11 + $0x18] sm:$0xff]
    %v435 = vld [vmem:[#allocation11 + $0x20] sm:$0xff]
    %v436 = vld [vmem:[#allocation11 + $0x28] sm:$0xff]
    %v437 = vld [vmem:[#allocation11 + $0x30] sm:$0xff]
    %v438 = vld [vmem:[#allocation11 + $0x38] sm:$0xff]
    %v439 = vld [vmem:[#allocation11 + $0x40] sm:$0xff]
    %v440 = vld [vmem:[#allocation11 + $0x48] sm:$0xff]
    %v441 = vld [vmem:[#allocation11 + $0x50] sm:$0xff]
    %v442 = vld [vmem:[#allocation11 + $0x58] sm:$0xff]
    %v443 = vld [vmem:[#allocation11 + $0x60] sm:$0xff]
    %v444 = vld [vmem:[#allocation11 + $0x68] sm:$0xff]
    %v445 = vld [vmem:[#allocation11 + $0x70] sm:$0xff]
    %v446 = vld [vmem:[#allocation11 + $0x78] sm:$0xff]
    %v447 = vld [vmem:[#allocation11 + $0x80] sm:$0xff]
    %v448 = vld [vmem:[#allocation11 + $0x88] sm:$0xff]
    %v449 = vld [vmem:[#allocation11 + $0x90] sm:$0xff]
    %v450 = vld [vmem:[#allocation11 + $0x98] sm:$0xff]
    %v451 = vld [vmem:[#allocation11 + $0xa0] sm:$0xff]
    %v452 = vld [vmem:[#allocation11 + $0xa8] sm:$0xff]
    %v453 = vld [vmem:[#allocation11 + $0xb0] sm:$0xff]
    %v454 = vld [vmem:[#allocation11 + $0xb8] sm:$0xff]
    %v455 = vld [vmem:[#allocation11 + $0xc0] sm:$0xff]
    %v456 = vld [vmem:[#allocation11 + $0xc8] sm:$0xff]
    %v457 = vld [vmem:[#allocation11 + $0xd0] sm:$0xff]
    %v458 = vld [vmem:[#allocation11 + $0xd8] sm:$0xff]
    %v459 = vld [vmem:[#allocation11 + $0xe0] sm:$0xff]
    %v460 = vld [vmem:[#allocation11 + $0xe8] sm:$0xff]
    %v461 = vld [vmem:[#allocation11 + $0xf0] sm:$0xff]
    %v462 = vld [vmem:[#allocation11 + $0xf8] sm:$0xff]
    %v495 = vunpack.c.l.b16 %v431
    %v496 = vunpack.c.h.b16 %v431
    %v497 = vunpack.c.l.b16 %v432
    %v498 = vunpack.c.h.b16 %v432
    %v499 = vunpack.c.l.b16 %v433
    %v500 = vunpack.c.h.b16 %v433
    %v501 = vunpack.c.l.b16 %v434
    %v502 = vunpack.c.h.b16 %v434
    %v503 = vunpack.c.l.b16 %v435
    %v504 = vunpack.c.h.b16 %v435
    %v505 = vunpack.c.l.b16 %v436
    %v506 = vunpack.c.h.b16 %v436
    %v507 = vunpack.c.l.b16 %v437
    %v508 = vunpack.c.h.b16 %v437
    %v509 = vunpack.c.l.b16 %v438
    %v510 = vunpack.c.h.b16 %v438
    %v511 = vunpack.c.l.b16 %v439
    %v512 = vunpack.c.h.b16 %v439
    %v513 = vunpack.c.l.b16 %v440
    %v514 = vunpack.c.h.b16 %v440
    %v515 = vunpack.c.l.b16 %v441
    %v516 = vunpack.c.h.b16 %v441
    %v517 = vunpack.c.l.b16 %v442
    %v518 = vunpack.c.h.b16 %v442
    %v519 = vunpack.c.l.b16 %v443
    %v520 = vunpack.c.h.b16 %v443
    %v521 = vunpack.c.l.b16 %v444
    %v522 = vunpack.c.h.b16 %v444
    %v523 = vunpack.c.l.b16 %v445
    %v524 = vunpack.c.h.b16 %v445
    %v525 = vunpack.c.l.b16 %v446
    %v526 = vunpack.c.h.b16 %v446
    %v527 = vunpack.c.l.b16 %v447
    %v528 = vunpack.c.h.b16 %v447
    %v529 = vunpack.c.l.b16 %v448
    %v530 = vunpack.c.h.b16 %v448
    %v531 = vunpack.c.l.b16 %v449
    %v532 = vunpack.c.h.b16 %v449
    %v533 = vunpack.c.l.b16 %v450
    %v534 = vunpack.c.h.b16 %v450
    %v535 = vunpack.c.l.b16 %v451
    %v536 = vunpack.c.h.b16 %v451
    %v537 = vunpack.c.l.b16 %v452
    %v538 = vunpack.c.h.b16 %v452
    %v539 = vunpack.c.l.b16 %v453
    %v540 = vunpack.c.h.b16 %v453
    %v541 = vunpack.c.l.b16 %v454
    %v542 = vunpack.c.h.b16 %v454
    %v543 = vunpack.c.l.b16 %v455
    %v544 = vunpack.c.h.b16 %v455
    %v545 = vunpack.c.l.b16 %v456
    %v546 = vunpack.c.h.b16 %v456
    %v547 = vunpack.c.l.b16 %v457
    %v548 = vunpack.c.h.b16 %v457
    %v549 = vunpack.c.l.b16 %v458
    %v550 = vunpack.c.h.b16 %v458
    %v551 = vunpack.c.l.b16 %v459
    %v552 = vunpack.c.h.b16 %v459
    %v553 = vunpack.c.l.b16 %v460
    %v554 = vunpack.c.h.b16 %v460
    %v555 = vunpack.c.l.b16 %v461
    %v556 = vunpack.c.h.b16 %v461
    %v557 = vunpack.c.l.b16 %v462
    %v558 = vunpack.c.h.b16 %v462
    %v559 = vpack.c.b16 %v499, %v495
    %v560 = vpack.c.b16 %v500, %v496
    %v561 = vpack.c.b16 %v501, %v497
    %v562 = vpack.c.b16 %v502, %v498
    %v563 = vpack.c.b16 %v507, %v503
    %v564 = vpack.c.b16 %v508, %v504
    %v565 = vpack.c.b16 %v509, %v505
    %v566 = vpack.c.b16 %v510, %v506
    %v567 = vpack.c.b16 %v515, %v511
    %v568 = vpack.c.b16 %v516, %v512
    %v569 = vpack.c.b16 %v517, %v513
    %v570 = vpack.c.b16 %v518, %v514
    %v571 = vpack.c.b16 %v523, %v519
    %v572 = vpack.c.b16 %v524, %v520
    %v573 = vpack.c.b16 %v525, %v521
    %v574 = vpack.c.b16 %v526, %v522
    %v575 = vpack.c.b16 %v531, %v527
    %v576 = vpack.c.b16 %v532, %v528
    %v577 = vpack.c.b16 %v533, %v529
    %v578 = vpack.c.b16 %v534, %v530
    %v579 = vpack.c.b16 %v539, %v535
    %v580 = vpack.c.b16 %v540, %v536
    %v581 = vpack.c.b16 %v541, %v537
    %v582 = vpack.c.b16 %v542, %v538
    %v583 = vpack.c.b16 %v547, %v543
    %v584 = vpack.c.b16 %v548, %v544
    %v585 = vpack.c.b16 %v549, %v545
    %v586 = vpack.c.b16 %v550, %v546
    %v587 = vpack.c.b16 %v555, %v551
    %v588 = vpack.c.b16 %v556, %v552
    %v589 = vpack.c.b16 %v557, %v553
    %v590 = vpack.c.b16 %v558, %v554
    %623 = vmatprep.subr.bf16.mxu0 %v588
    %624 = vmatpush1.bf16.msra.mxu0 %v587
    %625 = vmatprep.subr.bf16.mxu0 %v584
    %626 = vmatpush1.bf16.msra.mxu0 %v583
    %627 = vmatprep.subr.bf16.mxu0 %v580
    %628 = vmatpush1.bf16.msra.mxu0 %v579
    %629 = vmatprep.subr.bf16.mxu0 %v576
    %630 = vmatpush1.bf16.msra.mxu0 %v575
    %631 = vmatprep.subr.bf16.mxu0 %v572
    %632 = vmatpush1.bf16.msra.mxu0 %v571
    %633 = vmatprep.subr.bf16.mxu0 %v568
    %634 = vmatpush1.bf16.msra.mxu0 %v567
    %635 = vmatprep.subr.bf16.mxu0 %v564
    %636 = vmatpush1.bf16.msra.mxu0 %v563
    %637 = vmatprep.subr.bf16.mxu0 %v560
    %638 = vmatpush1.bf16.msra.mxu0 %v559
    %639 = vmatprep.subr.bf16.mxu0 0
    %640 = vmatpush2.bf16.msra.mxu0 0
    %641 = vmatprep.subr.bf16.mxu0 0
    %642 = vmatpush2.bf16.msra.mxu0 0
    %643 = vmatprep.subr.bf16.mxu0 0
    %644 = vmatpush2.bf16.msra.mxu0 0
    %645 = vmatprep.subr.bf16.mxu0 0
    %646 = vmatpush2.bf16.msra.mxu0 0
    %647 = vmatprep.subr.bf16.mxu0 0
    %648 = vmatpush2.bf16.msra.mxu0 0
    %649 = vmatprep.subr.bf16.mxu0 0
    %650 = vmatpush2.bf16.msra.mxu0 0
    %651 = vmatprep.subr.bf16.mxu0 0
    %652 = vmatpush2.bf16.msra.mxu0 0
    %653 = vmatprep.subr.bf16.mxu0 0
    %654 = vmatpush2.bf16.msra.mxu0 0
    %655 = vmatprep.mubr.bf16.mxu0 0
    %656 = vmatmul.mubr.bf16.gmra.mxu0 0
    %v657 = vpop.f32.mrf.mxu0
    %v658 = vadd.f32 0.0, %v657
    %v659 = vpop.f32.mrf.mxu0
    %v660 = vadd.f32 0.0, %v659
    %v661 = vpop.f32.mrf.mxu0
    %v662 = vpop.f32.mrf.mxu0
    %663 = vdwg.mxu0
    %664 = vmatprep.subr.bf16.mxu0 %v590
    %665 = vmatpush1.bf16.msra.mxu0 %v589
    %666 = vmatprep.subr.bf16.mxu0 %v586
    %667 = vmatpush1.bf16.msra.mxu0 %v585
    %668 = vmatprep.subr.bf16.mxu0 %v582
    %669 = vmatpush1.bf16.msra.mxu0 %v581
    %670 = vmatprep.subr.bf16.mxu0 %v578
    %671 = vmatpush1.bf16.msra.mxu0 %v577
    %672 = vmatprep.subr.bf16.mxu0 %v574
    %673 = vmatpush1.bf16.msra.mxu0 %v573
    %674 = vmatprep.subr.bf16.mxu0 %v570
    %675 = vmatpush1.bf16.msra.mxu0 %v569
    %676 = vmatprep.subr.bf16.mxu0 %v566
    %677 = vmatpush1.bf16.msra.mxu0 %v565
    %678 = vmatprep.subr.bf16.mxu0 %v562
    %679 = vmatpush1.bf16.msra.mxu0 %v561
    %680 = vmatprep.subr.bf16.mxu0 0
    %681 = vmatpush2.bf16.msra.mxu0 0
    %682 = vmatprep.subr.bf16.mxu0 0
    %683 = vmatpush2.bf16.msra.mxu0 0
    %684 = vmatprep.subr.bf16.mxu0 0
    %685 = vmatpush2.bf16.msra.mxu0 0
    %686 = vmatprep.subr.bf16.mxu0 0
    %687 = vmatpush2.bf16.msra.mxu0 0
    %688 = vmatprep.subr.bf16.mxu0 0
    %689 = vmatpush2.bf16.msra.mxu0 0
    %690 = vmatprep.subr.bf16.mxu0 0
    %691 = vmatpush2.bf16.msra.mxu0 0
    %692 = vmatprep.subr.bf16.mxu0 0
    %693 = vmatpush2.bf16.msra.mxu0 0
    %694 = vmatprep.subr.bf16.mxu0 0
    %695 = vmatpush2.bf16.msra.mxu0 0
    %696 = vmatprep.mubr.bf16.mxu0 0
    %697 = vmatmul.mubr.bf16.gmra.mxu0 0
    %v698 = vpop.f32.mrf.mxu0
    %v699 = vadd.f32 0.0, %v698
    %v700 = vpop.f32.mrf.mxu0
    %v701 = vadd.f32 0.0, %v700
    %v702 = vpop.f32.mrf.mxu0
    %v703 = vpop.f32.mrf.mxu0
    %704 = vdwg.mxu0
    %v705 = vadd.f32 %v427, %v658
    %v706 = vadd.f32 %v428, %v660
    %v707 = vadd.f32 %v429, %v699
    %v708 = vadd.f32 %v430, %v701
    %v709 = vxor.u32 %v705, 2147483648
    %v710 = vmul.f32 %v709, 1.442695
    %v711 = vpow.pop %v710
    %v712 = vadd.f32 %v711, 1.0
    %v713 = vrcp.pop %v712
    %v714 = vmul.f32 1.0, %v713
    %v715 = vxor.u32 %v706, 2147483648
    %v716 = vmul.f32 %v715, 1.442695
    %v717 = vpow.pop %v716
    %v718 = vadd.f32 %v717, 1.0
    %v719 = vrcp.pop %v718
    %v720 = vmul.f32 1.0, %v719
    %v721 = vtanh.pop %v707
    %v722 = vxor.u32 %v708, 2147483648
    %v723 = vmul.f32 %v722, 1.442695
    %v724 = vpow.pop %v723
    %v725 = vadd.f32 %v724, 1.0
    %v726 = vrcp.pop %v725
    %v727 = vmul.f32 1.0, %v726
    %v728 = vmul.f32 %v720, 0.0
    %v729 = vmul.f32 %v714, %v721
    %v730 = vadd.f32 %v728, %v729
    %v731 = vtanh.pop %v730
    %v732 = vmul.f32 %v727, %v731
    %v733 = vpack.c.bf16 %v732, %v732
    %734 = vst [vmem:[#allocation3] sm:$0x3] %v732
    %v735 = vld [vmem:[#allocation2] sm:$0xc]
    %v736 = vld [vmem:[#allocation2 + $0x8] sm:$0xc]
    %v737 = vld [vmem:[#allocation2 + $0x10] sm:$0xc]
    %v738 = vld [vmem:[#allocation2 + $0x18] sm:$0xc]
    %v739 = vld [vmem:[#allocation11] sm:$0xff]
    %v740 = vld [vmem:[#allocation11 + $0x8] sm:$0xff]
    %v741 = vld [vmem:[#allocation11 + $0x10] sm:$0xff]
    %v742 = vld [vmem:[#allocation11 + $0x18] sm:$0xff]
    %v743 = vld [vmem:[#allocation11 + $0x20] sm:$0xff]
    %v744 = vld [vmem:[#allocation11 + $0x28] sm:$0xff]
    %v745 = vld [vmem:[#allocation11 + $0x30] sm:$0xff]
    %v746 = vld [vmem:[#allocation11 + $0x38] sm:$0xff]
    %v747 = vld [vmem:[#allocation11 + $0x40] sm:$0xff]
    %v748 = vld [vmem:[#allocation11 + $0x48] sm:$0xff]
    %v749 = vld [vmem:[#allocation11 + $0x50] sm:$0xff]
    %v750 = vld [vmem:[#allocation11 + $0x58] sm:$0xff]
    %v751 = vld [vmem:[#allocation11 + $0x60] sm:$0xff]
    %v752 = vld [vmem:[#allocation11 + $0x68] sm:$0xff]
    %v753 = vld [vmem:[#allocation11 + $0x70] sm:$0xff]
    %v754 = vld [vmem:[#allocation11 + $0x78] sm:$0xff]
    %v755 = vld [vmem:[#allocation11 + $0x80] sm:$0xff]
    %v756 = vld [vmem:[#allocation11 + $0x88] sm:$0xff]
    %v757 = vld [vmem:[#allocation11 + $0x90] sm:$0xff]
    %v758 = vld [vmem:[#allocation11 + $0x98] sm:$0xff]
    %v759 = vld [vmem:[#allocation11 + $0xa0] sm:$0xff]
    %v760 = vld [vmem:[#allocation11 + $0xa8] sm:$0xff]
    %v761 = vld [vmem:[#allocation11 + $0xb0] sm:$0xff]
    %v762 = vld [vmem:[#allocation11 + $0xb8] sm:$0xff]
    %v763 = vld [vmem:[#allocation11 + $0xc0] sm:$0xff]
    %v764 = vld [vmem:[#allocation11 + $0xc8] sm:$0xff]
    %v765 = vld [vmem:[#allocation11 + $0xd0] sm:$0xff]
    %v766 = vld [vmem:[#allocation11 + $0xd8] sm:$0xff]
    %v767 = vld [vmem:[#allocation11 + $0xe0] sm:$0xff]
    %v768 = vld [vmem:[#allocation11 + $0xe8] sm:$0xff]
    %v769 = vld [vmem:[#allocation11 + $0xf0] sm:$0xff]
    %v770 = vld [vmem:[#allocation11 + $0xf8] sm:$0xff]
    %v803 = vunpack.c.l.b16 %v739
    %v804 = vunpack.c.h.b16 %v739
    %v805 = vunpack.c.l.b16 %v740
    %v806 = vunpack.c.h.b16 %v740
    %v807 = vunpack.c.l.b16 %v741
    %v808 = vunpack.c.h.b16 %v741
    %v809 = vunpack.c.l.b16 %v742
    %v810 = vunpack.c.h.b16 %v742
    %v811 = vunpack.c.l.b16 %v743
    %v812 = vunpack.c.h.b16 %v743
    %v813 = vunpack.c.l.b16 %v744
    %v814 = vunpack.c.h.b16 %v744
    %v815 = vunpack.c.l.b16 %v745
    %v816 = vunpack.c.h.b16 %v745
    %v817 = vunpack.c.l.b16 %v746
    %v818 = vunpack.c.h.b16 %v746
    %v819 = vunpack.c.l.b16 %v747
    %v820 = vunpack.c.h.b16 %v747
    %v821 = vunpack.c.l.b16 %v748
    %v822 = vunpack.c.h.b16 %v748
    %v823 = vunpack.c.l.b16 %v749
    %v824 = vunpack.c.h.b16 %v749
    %v825 = vunpack.c.l.b16 %v750
    %v826 = vunpack.c.h.b16 %v750
    %v827 = vunpack.c.l.b16 %v751
    %v828 = vunpack.c.h.b16 %v751
    %v829 = vunpack.c.l.b16 %v752
    %v830 = vunpack.c.h.b16 %v752
    %v831 = vunpack.c.l.b16 %v753
    %v832 = vunpack.c.h.b16 %v753
    %v833 = vunpack.c.l.b16 %v754
    %v834 = vunpack.c.h.b16 %v754
    %v835 = vunpack.c.l.b16 %v755
    %v836 = vunpack.c.h.b16 %v755
    %v837 = vunpack.c.l.b16 %v756
    %v838 = vunpack.c.h.b16 %v756
    %v839 = vunpack.c.l.b16 %v757
    %v840 = vunpack.c.h.b16 %v757
    %v841 = vunpack.c.l.b16 %v758
    %v842 = vunpack.c.h.b16 %v758
    %v843 = vunpack.c.l.b16 %v759
    %v844 = vunpack.c.h.b16 %v759
    %v845 = vunpack.c.l.b16 %v760
    %v846 = vunpack.c.h.b16 %v760
    %v847 = vunpack.c.l.b16 %v761
    %v848 = vunpack.c.h.b16 %v761
    %v849 = vunpack.c.l.b16 %v762
    %v850 = vunpack.c.h.b16 %v762
    %v851 = vunpack.c.l.b16 %v763
    %v852 = vunpack.c.h.b16 %v763
    %v853 = vunpack.c.l.b16 %v764
    %v854 = vunpack.c.h.b16 %v764
    %v855 = vunpack.c.l.b16 %v765
    %v856 = vunpack.c.h.b16 %v765
    %v857 = vunpack.c.l.b16 %v766
    %v858 = vunpack.c.h.b16 %v766
    %v859 = vunpack.c.l.b16 %v767
    %v860 = vunpack.c.h.b16 %v767
    %v861 = vunpack.c.l.b16 %v768
    %v862 = vunpack.c.h.b16 %v768
    %v863 = vunpack.c.l.b16 %v769
    %v864 = vunpack.c.h.b16 %v769
    %v865 = vunpack.c.l.b16 %v770
    %v866 = vunpack.c.h.b16 %v770
    %v867 = vpack.c.b16 %v807, %v803
    %v868 = vpack.c.b16 %v808, %v804
    %v869 = vpack.c.b16 %v809, %v805
    %v870 = vpack.c.b16 %v810, %v806
    %v871 = vpack.c.b16 %v815, %v811
    %v872 = vpack.c.b16 %v816, %v812
    %v873 = vpack.c.b16 %v817, %v813
    %v874 = vpack.c.b16 %v818, %v814
    %v875 = vpack.c.b16 %v823, %v819
    %v876 = vpack.c.b16 %v824, %v820
    %v877 = vpack.c.b16 %v825, %v821
    %v878 = vpack.c.b16 %v826, %v822
    %v879 = vpack.c.b16 %v831, %v827
    %v880 = vpack.c.b16 %v832, %v828
    %v881 = vpack.c.b16 %v833, %v829
    %v882 = vpack.c.b16 %v834, %v830
    %v883 = vpack.c.b16 %v839, %v835
    %v884 = vpack.c.b16 %v840, %v836
    %v885 = vpack.c.b16 %v841, %v837
    %v886 = vpack.c.b16 %v842, %v838
    %v887 = vpack.c.b16 %v847, %v843
    %v888 = vpack.c.b16 %v848, %v844
    %v889 = vpack.c.b16 %v849, %v845
    %v890 = vpack.c.b16 %v850, %v846
    %v891 = vpack.c.b16 %v855, %v851
    %v892 = vpack.c.b16 %v856, %v852
    %v893 = vpack.c.b16 %v857, %v853
    %v894 = vpack.c.b16 %v858, %v854
    %v895 = vpack.c.b16 %v863, %v859
    %v896 = vpack.c.b16 %v864, %v860
    %v897 = vpack.c.b16 %v865, %v861
    %v898 = vpack.c.b16 %v866, %v862
    %931 = vmatprep.subr.bf16.mxu0 %v896
    %932 = vmatpush1.bf16.msra.mxu0 %v895
    %933 = vmatprep.subr.bf16.mxu0 %v892
    %934 = vmatpush1.bf16.msra.mxu0 %v891
    %935 = vmatprep.subr.bf16.mxu0 %v888
    %936 = vmatpush1.bf16.msra.mxu0 %v887
    %937 = vmatprep.subr.bf16.mxu0 %v884
    %938 = vmatpush1.bf16.msra.mxu0 %v883
    %939 = vmatprep.subr.bf16.mxu0 %v880
    %940 = vmatpush1.bf16.msra.mxu0 %v879
    %941 = vmatprep.subr.bf16.mxu0 %v876
    %942 = vmatpush1.bf16.msra.mxu0 %v875
    %943 = vmatprep.subr.bf16.mxu0 %v872
    %944 = vmatpush1.bf16.msra.mxu0 %v871
    %945 = vmatprep.subr.bf16.mxu0 %v868
    %946 = vmatpush1.bf16.msra.mxu0 %v867
    %947 = vmatprep.subr.bf16.mxu0 0
    %948 = vmatpush2.bf16.msra.mxu0 0
    %949 = vmatprep.subr.bf16.mxu0 0
    %950 = vmatpush2.bf16.msra.mxu0 0
    %951 = vmatprep.subr.bf16.mxu0 0
    %952 = vmatpush2.bf16.msra.mxu0 0
    %953 = vmatprep.subr.bf16.mxu0 0
    %954 = vmatpush2.bf16.msra.mxu0 0
    %955 = vmatprep.subr.bf16.mxu0 0
    %956 = vmatpush2.bf16.msra.mxu0 0
    %957 = vmatprep.subr.bf16.mxu0 0
    %958 = vmatpush2.bf16.msra.mxu0 0
    %959 = vmatprep.subr.bf16.mxu0 0
    %960 = vmatpush2.bf16.msra.mxu0 0
    %961 = vmatprep.subr.bf16.mxu0 0
    %962 = vmatpush2.bf16.msra.mxu0 0
    %963 = vmatprep.mubr.bf16.mxu0 0
    %964 = vmatmul.mubr.bf16.gmra.mxu0 %v733
    %v965 = vpop.f32.mrf.mxu0
    %v966 = vadd.f32 0.0, %v965
    %v967 = vpop.f32.mrf.mxu0
    %v968 = vadd.f32 0.0, %v967
    %v969 = vpop.f32.mrf.mxu0
    %v970 = vpop.f32.mrf.mxu0
    %971 = vdwg.mxu0
    %972 = vmatprep.subr.bf16.mxu0 %v898
    %973 = vmatpush1.bf16.msra.mxu0 %v897
    %974 = vmatprep.subr.bf16.mxu0 %v894
    %975 = vmatpush1.bf16.msra.mxu0 %v893
    %976 = vmatprep.subr.bf16.mxu0 %v890
    %977 = vmatpush1.bf16.msra.mxu0 %v889
    %978 = vmatprep.subr.bf16.mxu0 %v886
    %979 = vmatpush1.bf16.msra.mxu0 %v885
    %980 = vmatprep.subr.bf16.mxu0 %v882
    %981 = vmatpush1.bf16.msra.mxu0 %v881
    %982 = vmatprep.subr.bf16.mxu0 %v878
    %983 = vmatpush1.bf16.msra.mxu0 %v877
    %984 = vmatprep.subr.bf16.mxu0 %v874
    %985 = vmatpush1.bf16.msra.mxu0 %v873
    %986 = vmatprep.subr.bf16.mxu0 %v870
    %987 = vmatpush1.bf16.msra.mxu0 %v869
    %988 = vmatprep.subr.bf16.mxu0 0
    %989 = vmatpush2.bf16.msra.mxu0 0
    %990 = vmatprep.subr.bf16.mxu0 0
    %991 = vmatpush2.bf16.msra.mxu0 0
    %992 = vmatprep.subr.bf16.mxu0 0
    %993 = vmatpush2.bf16.msra.mxu0 0
    %994 = vmatprep.subr.bf16.mxu0 0
    %995 = vmatpush2.bf16.msra.mxu0 0
    %996 = vmatprep.subr.bf16.mxu0 0
    %997 = vmatpush2.bf16.msra.mxu0 0
    %998 = vmatprep.subr.bf16.mxu0 0
    %999 = vmatpush2.bf16.msra.mxu0 0
    %1000 = vmatprep.subr.bf16.mxu0 0
    %1001 = vmatpush2.bf16.msra.mxu0 0
    %1002 = vmatprep.subr.bf16.mxu0 0
    %1003 = vmatpush2.bf16.msra.mxu0 0
    %1004 = vmatprep.mubr.bf16.mxu0 0
    %1005 = vmatmul.mubr.bf16.gmra.mxu0 %v733
    %v1006 = vpop.f32.mrf.mxu0
    %v1007 = vadd.f32 0.0, %v1006
    %v1008 = vpop.f32.mrf.mxu0
    %v1009 = vadd.f32 0.0, %v1008
    %v1010 = vpop.f32.mrf.mxu0
    %v1011 = vpop.f32.mrf.mxu0
    %1012 = vdwg.mxu0
    %v1017 = vrot.slane %v966, 6
    %v1018 = vrot.slane %v968, 6
    %v1019 = vrot.slane %v1007, 6
    %v1020 = vrot.slane %v1009, 6
    %v1025 = vadd.f32 %v735, %v1017
    %v1026 = vadd.f32 %v736, %v1018
    %v1027 = vadd.f32 %v737, %v1019
    %v1028 = vadd.f32 %v738, %v1020
    %v1029 = vxor.u32 %v1025, 2147483648
    %v1030 = vmul.f32 %v1029, 1.442695
    %v1031 = vpow.pop %v1030
    %v1032 = vadd.f32 %v1031, 1.0
    %v1033 = vrcp.pop %v1032
    %v1034 = vmul.f32 1.0, %v1033
    %v1035 = vxor.u32 %v1026, 2147483648
    %v1036 = vmul.f32 %v1035, 1.442695
    %v1037 = vpow.pop %v1036
    %v1038 = vadd.f32 %v1037, 1.0
    %v1039 = vrcp.pop %v1038
    %v1040 = vmul.f32 1.0, %v1039
    %v1041 = vtanh.pop %v1027
    %v1042 = vxor.u32 %v1028, 2147483648
    %v1043 = vmul.f32 %v1042, 1.442695
    %v1044 = vpow.pop %v1043
    %v1045 = vadd.f32 %v1044, 1.0
    %v1046 = vrcp.pop %v1045
    %v1047 = vmul.f32 1.0, %v1046
    %v1049 = vrot.slane %v730, 6
    %v1051 = vmul.f32 %v1040, %v1049
    %v1052 = vmul.f32 %v1034, %v1041
    %v1053 = vadd.f32 %v1051, %v1052
    %v1054 = vtanh.pop %v1053
    %v1055 = vmul.f32 %v1047, %v1054
    %v1056 = vpack.c.bf16 %v1055, %v1055
    %1057 = vst [vmem:[#allocation3] sm:$0xc] %v1055
    %v1058 = vld [vmem:[#allocation2] sm:$0x30]
    %v1059 = vld [vmem:[#allocation2 + $0x8] sm:$0x30]
    %v1060 = vld [vmem:[#allocation2 + $0x10] sm:$0x30]
    %v1061 = vld [vmem:[#allocation2 + $0x18] sm:$0x30]
    %v1062 = vld [vmem:[#allocation11] sm:$0xff]
    %v1063 = vld [vmem:[#allocation11 + $0x8] sm:$0xff]
    %v1064 = vld [vmem:[#allocation11 + $0x10] sm:$0xff]
    %v1065 = vld [vmem:[#allocation11 + $0x18] sm:$0xff]
    %v1066 = vld [vmem:[#allocation11 + $0x20] sm:$0xff]
    %v1067 = vld [vmem:[#allocation11 + $0x28] sm:$0xff]
    %v1068 = vld [vmem:[#allocation11 + $0x30] sm:$0xff]
    %v1069 = vld [vmem:[#allocation11 + $0x38] sm:$0xff]
    %v1070 = vld [vmem:[#allocation11 + $0x40] sm:$0xff]
    %v1071 = vld [vmem:[#allocation11 + $0x48] sm:$0xff]
    %v1072 = vld [vmem:[#allocation11 + $0x50] sm:$0xff]
    %v1073 = vld [vmem:[#allocation11 + $0x58] sm:$0xff]
    %v1074 = vld [vmem:[#allocation11 + $0x60] sm:$0xff]
    %v1075 = vld [vmem:[#allocation11 + $0x68] sm:$0xff]
    %v1076 = vld [vmem:[#allocation11 + $0x70] sm:$0xff]
    %v1077 = vld [vmem:[#allocation11 + $0x78] sm:$0xff]
    %v1078 = vld [vmem:[#allocation11 + $0x80] sm:$0xff]
    %v1079 = vld [vmem:[#allocation11 + $0x88] sm:$0xff]
    %v1080 = vld [vmem:[#allocation11 + $0x90] sm:$0xff]
    %v1081 = vld [vmem:[#allocation11 + $0x98] sm:$0xff]
    %v1082 = vld [vmem:[#allocation11 + $0xa0] sm:$0xff]
    %v1083 = vld [vmem:[#allocation11 + $0xa8] sm:$0xff]
    %v1084 = vld [vmem:[#allocation11 + $0xb0] sm:$0xff]
    %v1085 = vld [vmem:[#allocation11 + $0xb8] sm:$0xff]
    %v1086 = vld [vmem:[#allocation11 + $0xc0] sm:$0xff]
    %v1087 = vld [vmem:[#allocation11 + $0xc8] sm:$0xff]
    %v1088 = vld [vmem:[#allocation11 + $0xd0] sm:$0xff]
    %v1089 = vld [vmem:[#allocation11 + $0xd8] sm:$0xff]
    %v1090 = vld [vmem:[#allocation11 + $0xe0] sm:$0xff]
    %v1091 = vld [vmem:[#allocation11 + $0xe8] sm:$0xff]
    %v1092 = vld [vmem:[#allocation11 + $0xf0] sm:$0xff]
    %v1093 = vld [vmem:[#allocation11 + $0xf8] sm:$0xff]
    %v1095 = vrot.slane %v1056, 1
    %v1129 = vunpack.c.l.b16 %v1062
    %v1130 = vunpack.c.h.b16 %v1062
    %v1131 = vunpack.c.l.b16 %v1063
    %v1132 = vunpack.c.h.b16 %v1063
    %v1133 = vunpack.c.l.b16 %v1064
    %v1134 = vunpack.c.h.b16 %v1064
    %v1135 = vunpack.c.l.b16 %v1065
    %v1136 = vunpack.c.h.b16 %v1065
    %v1137 = vunpack.c.l.b16 %v1066
    %v1138 = vunpack.c.h.b16 %v1066
    %v1139 = vunpack.c.l.b16 %v1067
    %v1140 = vunpack.c.h.b16 %v1067
    %v1141 = vunpack.c.l.b16 %v1068
    %v1142 = vunpack.c.h.b16 %v1068
    %v1143 = vunpack.c.l.b16 %v1069
    %v1144 = vunpack.c.h.b16 %v1069
    %v1145 = vunpack.c.l.b16 %v1070
    %v1146 = vunpack.c.h.b16 %v1070
    %v1147 = vunpack.c.l.b16 %v1071
    %v1148 = vunpack.c.h.b16 %v1071
    %v1149 = vunpack.c.l.b16 %v1072
    %v1150 = vunpack.c.h.b16 %v1072
    %v1151 = vunpack.c.l.b16 %v1073
    %v1152 = vunpack.c.h.b16 %v1073
    %v1153 = vunpack.c.l.b16 %v1074
    %v1154 = vunpack.c.h.b16 %v1074
    %v1155 = vunpack.c.l.b16 %v1075
    %v1156 = vunpack.c.h.b16 %v1075
    %v1157 = vunpack.c.l.b16 %v1076
    %v1158 = vunpack.c.h.b16 %v1076
    %v1159 = vunpack.c.l.b16 %v1077
    %v1160 = vunpack.c.h.b16 %v1077
    %v1161 = vunpack.c.l.b16 %v1078
    %v1162 = vunpack.c.h.b16 %v1078
    %v1163 = vunpack.c.l.b16 %v1079
    %v1164 = vunpack.c.h.b16 %v1079
    %v1165 = vunpack.c.l.b16 %v1080
    %v1166 = vunpack.c.h.b16 %v1080
    %v1167 = vunpack.c.l.b16 %v1081
    %v1168 = vunpack.c.h.b16 %v1081
    %v1169 = vunpack.c.l.b16 %v1082
    %v1170 = vunpack.c.h.b16 %v1082
    %v1171 = vunpack.c.l.b16 %v1083
    %v1172 = vunpack.c.h.b16 %v1083
    %v1173 = vunpack.c.l.b16 %v1084
    %v1174 = vunpack.c.h.b16 %v1084
    %v1175 = vunpack.c.l.b16 %v1085
    %v1176 = vunpack.c.h.b16 %v1085
    %v1177 = vunpack.c.l.b16 %v1086
    %v1178 = vunpack.c.h.b16 %v1086
    %v1179 = vunpack.c.l.b16 %v1087
    %v1180 = vunpack.c.h.b16 %v1087
    %v1181 = vunpack.c.l.b16 %v1088
    %v1182 = vunpack.c.h.b16 %v1088
    %v1183 = vunpack.c.l.b16 %v1089
    %v1184 = vunpack.c.h.b16 %v1089
    %v1185 = vunpack.c.l.b16 %v1090
    %v1186 = vunpack.c.h.b16 %v1090
    %v1187 = vunpack.c.l.b16 %v1091
    %v1188 = vunpack.c.h.b16 %v1091
    %v1189 = vunpack.c.l.b16 %v1092
    %v1190 = vunpack.c.h.b16 %v1092
    %v1191 = vunpack.c.l.b16 %v1093
    %v1192 = vunpack.c.h.b16 %v1093
    %v1193 = vpack.c.b16 %v1133, %v1129
    %v1194 = vpack.c.b16 %v1134, %v1130
    %v1195 = vpack.c.b16 %v1135, %v1131
    %v1196 = vpack.c.b16 %v1136, %v1132
    %v1197 = vpack.c.b16 %v1141, %v1137
    %v1198 = vpack.c.b16 %v1142, %v1138
    %v1199 = vpack.c.b16 %v1143, %v1139
    %v1200 = vpack.c.b16 %v1144, %v1140
    %v1201 = vpack.c.b16 %v1149, %v1145
    %v1202 = vpack.c.b16 %v1150, %v1146
    %v1203 = vpack.c.b16 %v1151, %v1147
    %v1204 = vpack.c.b16 %v1152, %v1148
    %v1205 = vpack.c.b16 %v1157, %v1153
    %v1206 = vpack.c.b16 %v1158, %v1154
    %v1207 = vpack.c.b16 %v1159, %v1155
    %v1208 = vpack.c.b16 %v1160, %v1156
    %v1209 = vpack.c.b16 %v1165, %v1161
    %v1210 = vpack.c.b16 %v1166, %v1162
    %v1211 = vpack.c.b16 %v1167, %v1163
    %v1212 = vpack.c.b16 %v1168, %v1164
    %v1213 = vpack.c.b16 %v1173, %v1169
    %v1214 = vpack.c.b16 %v1174, %v1170
    %v1215 = vpack.c.b16 %v1175, %v1171
    %v1216 = vpack.c.b16 %v1176, %v1172
    %v1217 = vpack.c.b16 %v1181, %v1177
    %v1218 = vpack.c.b16 %v1182, %v1178
    %v1219 = vpack.c.b16 %v1183, %v1179
    %v1220 = vpack.c.b16 %v1184, %v1180
    %v1221 = vpack.c.b16 %v1189, %v1185
    %v1222 = vpack.c.b16 %v1190, %v1186
    %v1223 = vpack.c.b16 %v1191, %v1187
    %v1224 = vpack.c.b16 %v1192, %v1188
    %1257 = vmatprep.subr.bf16.mxu0 %v1222
    %1258 = vmatpush1.bf16.msra.mxu0 %v1221
    %1259 = vmatprep.subr.bf16.mxu0 %v1218
    %1260 = vmatpush1.bf16.msra.mxu0 %v1217
    %1261 = vmatprep.subr.bf16.mxu0 %v1214
    %1262 = vmatpush1.bf16.msra.mxu0 %v1213
    %1263 = vmatprep.subr.bf16.mxu0 %v1210
    %1264 = vmatpush1.bf16.msra.mxu0 %v1209
    %1265 = vmatprep.subr.bf16.mxu0 %v1206
    %1266 = vmatpush1.bf16.msra.mxu0 %v1205
    %1267 = vmatprep.subr.bf16.mxu0 %v1202
    %1268 = vmatpush1.bf16.msra.mxu0 %v1201
    %1269 = vmatprep.subr.bf16.mxu0 %v1198
    %1270 = vmatpush1.bf16.msra.mxu0 %v1197
    %1271 = vmatprep.subr.bf16.mxu0 %v1194
    %1272 = vmatpush1.bf16.msra.mxu0 %v1193
    %1273 = vmatprep.subr.bf16.mxu0 0
    %1274 = vmatpush2.bf16.msra.mxu0 0
    %1275 = vmatprep.subr.bf16.mxu0 0
    %1276 = vmatpush2.bf16.msra.mxu0 0
    %1277 = vmatprep.subr.bf16.mxu0 0
    %1278 = vmatpush2.bf16.msra.mxu0 0
    %1279 = vmatprep.subr.bf16.mxu0 0
    %1280 = vmatpush2.bf16.msra.mxu0 0
    %1281 = vmatprep.subr.bf16.mxu0 0
    %1282 = vmatpush2.bf16.msra.mxu0 0
    %1283 = vmatprep.subr.bf16.mxu0 0
    %1284 = vmatpush2.bf16.msra.mxu0 0
    %1285 = vmatprep.subr.bf16.mxu0 0
    %1286 = vmatpush2.bf16.msra.mxu0 0
    %1287 = vmatprep.subr.bf16.mxu0 0
    %1288 = vmatpush2.bf16.msra.mxu0 0
    %1289 = vmatprep.mubr.bf16.mxu0 0
    %1290 = vmatmul.mubr.bf16.gmra.mxu0 %v1095
    %v1291 = vpop.f32.mrf.mxu0
    %v1292 = vadd.f32 0.0, %v1291
    %v1293 = vpop.f32.mrf.mxu0
    %v1294 = vadd.f32 0.0, %v1293
    %v1295 = vpop.f32.mrf.mxu0
    %v1296 = vpop.f32.mrf.mxu0
    %1297 = vdwg.mxu0
    %1298 = vmatprep.subr.bf16.mxu0 %v1224
    %1299 = vmatpush1.bf16.msra.mxu0 %v1223
    %1300 = vmatprep.subr.bf16.mxu0 %v1220
    %1301 = vmatpush1.bf16.msra.mxu0 %v1219
    %1302 = vmatprep.subr.bf16.mxu0 %v1216
    %1303 = vmatpush1.bf16.msra.mxu0 %v1215
    %1304 = vmatprep.subr.bf16.mxu0 %v1212
    %1305 = vmatpush1.bf16.msra.mxu0 %v1211
    %1306 = vmatprep.subr.bf16.mxu0 %v1208
    %1307 = vmatpush1.bf16.msra.mxu0 %v1207
    %1308 = vmatprep.subr.bf16.mxu0 %v1204
    %1309 = vmatpush1.bf16.msra.mxu0 %v1203
    %1310 = vmatprep.subr.bf16.mxu0 %v1200
    %1311 = vmatpush1.bf16.msra.mxu0 %v1199
    %1312 = vmatprep.subr.bf16.mxu0 %v1196
    %1313 = vmatpush1.bf16.msra.mxu0 %v1195
    %1314 = vmatprep.subr.bf16.mxu0 0
    %1315 = vmatpush2.bf16.msra.mxu0 0
    %1316 = vmatprep.subr.bf16.mxu0 0
    %1317 = vmatpush2.bf16.msra.mxu0 0
    %1318 = vmatprep.subr.bf16.mxu0 0
    %1319 = vmatpush2.bf16.msra.mxu0 0
    %1320 = vmatprep.subr.bf16.mxu0 0
    %1321 = vmatpush2.bf16.msra.mxu0 0
    %1322 = vmatprep.subr.bf16.mxu0 0
    %1323 = vmatpush2.bf16.msra.mxu0 0
    %1324 = vmatprep.subr.bf16.mxu0 0
    %1325 = vmatpush2.bf16.msra.mxu0 0
    %1326 = vmatprep.subr.bf16.mxu0 0
    %1327 = vmatpush2.bf16.msra.mxu0 0
    %1328 = vmatprep.subr.bf16.mxu0 0
    %1329 = vmatpush2.bf16.msra.mxu0 0
    %1330 = vmatprep.mubr.bf16.mxu0 0
    %1331 = vmatmul.mubr.bf16.gmra.mxu0 %v1095
    %v1332 = vpop.f32.mrf.mxu0
    %v1333 = vadd.f32 0.0, %v1332
    %v1334 = vpop.f32.mrf.mxu0
    %v1335 = vadd.f32 0.0, %v1334
    %v1336 = vpop.f32.mrf.mxu0
    %v1337 = vpop.f32.mrf.mxu0
    %1338 = vdwg.mxu0
    %v1343 = vrot.slane %v1292, 4
    %v1344 = vrot.slane %v1294, 4
    %v1345 = vrot.slane %v1333, 4
    %v1346 = vrot.slane %v1335, 4
    %v1351 = vadd.f32 %v1058, %v1343
    %v1352 = vadd.f32 %v1059, %v1344
    %v1353 = vadd.f32 %v1060, %v1345
    %v1354 = vadd.f32 %v1061, %v1346
    %v1355 = vxor.u32 %v1351, 2147483648
    %v1356 = vmul.f32 %v1355, 1.442695
    %v1357 = vpow.pop %v1356
    %v1358 = vadd.f32 %v1357, 1.0
    %v1359 = vrcp.pop %v1358
    %v1360 = vmul.f32 1.0, %v1359
    %v1361 = vxor.u32 %v1352, 2147483648
    %v1362 = vmul.f32 %v1361, 1.442695
    %v1363 = vpow.pop %v1362
    %v1364 = vadd.f32 %v1363, 1.0
    %v1365 = vrcp.pop %v1364
    %v1366 = vmul.f32 1.0, %v1365
    %v1367 = vtanh.pop %v1353
    %v1368 = vxor.u32 %v1354, 2147483648
    %v1369 = vmul.f32 %v1368, 1.442695
    %v1370 = vpow.pop %v1369
    %v1371 = vadd.f32 %v1370, 1.0
    %v1372 = vrcp.pop %v1371
    %v1373 = vmul.f32 1.0, %v1372
    %v1375 = vrot.slane %v1053, 6
    %v1377 = vmul.f32 %v1366, %v1375
    %v1378 = vmul.f32 %v1360, %v1367
    %v1379 = vadd.f32 %v1377, %v1378
    %v1380 = vtanh.pop %v1379
    %v1381 = vmul.f32 %v1373, %v1380
    %v1382 = vpack.c.bf16 %v1381, %v1381
    %1383 = vst [vmem:[#allocation3] sm:$0x30] %v1381
    %v1384 = vld [vmem:[#allocation2] sm:$0xc0]
    %v1385 = vld [vmem:[#allocation2 + $0x8] sm:$0xc0]
    %v1386 = vld [vmem:[#allocation2 + $0x10] sm:$0xc0]
    %v1387 = vld [vmem:[#allocation2 + $0x18] sm:$0xc0]
    %v1388 = vld [vmem:[#allocation11] sm:$0xff]
    %v1389 = vld [vmem:[#allocation11 + $0x8] sm:$0xff]
    %v1390 = vld [vmem:[#allocation11 + $0x10] sm:$0xff]
    %v1391 = vld [vmem:[#allocation11 + $0x18] sm:$0xff]
    %v1392 = vld [vmem:[#allocation11 + $0x20] sm:$0xff]
    %v1393 = vld [vmem:[#allocation11 + $0x28] sm:$0xff]
    %v1394 = vld [vmem:[#allocation11 + $0x30] sm:$0xff]
    %v1395 = vld [vmem:[#allocation11 + $0x38] sm:$0xff]
    %v1396 = vld [vmem:[#allocation11 + $0x40] sm:$0xff]
    %v1397 = vld [vmem:[#allocation11 + $0x48] sm:$0xff]
    %v1398 = vld [vmem:[#allocation11 + $0x50] sm:$0xff]
    %v1399 = vld [vmem:[#allocation11 + $0x58] sm:$0xff]
    %v1400 = vld [vmem:[#allocation11 + $0x60] sm:$0xff]
    %v1401 = vld [vmem:[#allocation11 + $0x68] sm:$0xff]
    %v1402 = vld [vmem:[#allocation11 + $0x70] sm:$0xff]
    %v1403 = vld [vmem:[#allocation11 + $0x78] sm:$0xff]
    %v1404 = vld [vmem:[#allocation11 + $0x80] sm:$0xff]
    %v1405 = vld [vmem:[#allocation11 + $0x88] sm:$0xff]
    %v1406 = vld [vmem:[#allocation11 + $0x90] sm:$0xff]
    %v1407 = vld [vmem:[#allocation11 + $0x98] sm:$0xff]
    %v1408 = vld [vmem:[#allocation11 + $0xa0] sm:$0xff]
    %v1409 = vld [vmem:[#allocation11 + $0xa8] sm:$0xff]
    %v1410 = vld [vmem:[#allocation11 + $0xb0] sm:$0xff]
    %v1411 = vld [vmem:[#allocation11 + $0xb8] sm:$0xff]
    %v1412 = vld [vmem:[#allocation11 + $0xc0] sm:$0xff]
    %v1413 = vld [vmem:[#allocation11 + $0xc8] sm:$0xff]
    %v1414 = vld [vmem:[#allocation11 + $0xd0] sm:$0xff]
    %v1415 = vld [vmem:[#allocation11 + $0xd8] sm:$0xff]
    %v1416 = vld [vmem:[#allocation11 + $0xe0] sm:$0xff]
    %v1417 = vld [vmem:[#allocation11 + $0xe8] sm:$0xff]
    %v1418 = vld [vmem:[#allocation11 + $0xf0] sm:$0xff]
    %v1419 = vld [vmem:[#allocation11 + $0xf8] sm:$0xff]
    %v1421 = vrot.slane %v1382, 2
    %v1455 = vunpack.c.l.b16 %v1388
    %v1456 = vunpack.c.h.b16 %v1388
    %v1457 = vunpack.c.l.b16 %v1389
    %v1458 = vunpack.c.h.b16 %v1389
    %v1459 = vunpack.c.l.b16 %v1390
    %v1460 = vunpack.c.h.b16 %v1390
    %v1461 = vunpack.c.l.b16 %v1391
    %v1462 = vunpack.c.h.b16 %v1391
    %v1463 = vunpack.c.l.b16 %v1392
    %v1464 = vunpack.c.h.b16 %v1392
    %v1465 = vunpack.c.l.b16 %v1393
    %v1466 = vunpack.c.h.b16 %v1393
    %v1467 = vunpack.c.l.b16 %v1394
    %v1468 = vunpack.c.h.b16 %v1394
    %v1469 = vunpack.c.l.b16 %v1395
    %v1470 = vunpack.c.h.b16 %v1395
    %v1471 = vunpack.c.l.b16 %v1396
    %v1472 = vunpack.c.h.b16 %v1396
    %v1473 = vunpack.c.l.b16 %v1397
    %v1474 = vunpack.c.h.b16 %v1397
    %v1475 = vunpack.c.l.b16 %v1398
    %v1476 = vunpack.c.h.b16 %v1398
    %v1477 = vunpack.c.l.b16 %v1399
    %v1478 = vunpack.c.h.b16 %v1399
    %v1479 = vunpack.c.l.b16 %v1400
    %v1480 = vunpack.c.h.b16 %v1400
    %v1481 = vunpack.c.l.b16 %v1401
    %v1482 = vunpack.c.h.b16 %v1401
    %v1483 = vunpack.c.l.b16 %v1402
    %v1484 = vunpack.c.h.b16 %v1402
    %v1485 = vunpack.c.l.b16 %v1403
    %v1486 = vunpack.c.h.b16 %v1403
    %v1487 = vunpack.c.l.b16 %v1404
    %v1488 = vunpack.c.h.b16 %v1404
    %v1489 = vunpack.c.l.b16 %v1405
    %v1490 = vunpack.c.h.b16 %v1405
    %v1491 = vunpack.c.l.b16 %v1406
    %v1492 = vunpack.c.h.b16 %v1406
    %v1493 = vunpack.c.l.b16 %v1407
    %v1494 = vunpack.c.h.b16 %v1407
    %v1495 = vunpack.c.l.b16 %v1408
    %v1496 = vunpack.c.h.b16 %v1408
    %v1497 = vunpack.c.l.b16 %v1409
    %v1498 = vunpack.c.h.b16 %v1409
    %v1499 = vunpack.c.l.b16 %v1410
    %v1500 = vunpack.c.h.b16 %v1410
    %v1501 = vunpack.c.l.b16 %v1411
    %v1502 = vunpack.c.h.b16 %v1411
    %v1503 = vunpack.c.l.b16 %v1412
    %v1504 = vunpack.c.h.b16 %v1412
    %v1505 = vunpack.c.l.b16 %v1413
    %v1506 = vunpack.c.h.b16 %v1413
    %v1507 = vunpack.c.l.b16 %v1414
    %v1508 = vunpack.c.h.b16 %v1414
    %v1509 = vunpack.c.l.b16 %v1415
    %v1510 = vunpack.c.h.b16 %v1415
    %v1511 = vunpack.c.l.b16 %v1416
    %v1512 = vunpack.c.h.b16 %v1416
    %v1513 = vunpack.c.l.b16 %v1417
    %v1514 = vunpack.c.h.b16 %v1417
    %v1515 = vunpack.c.l.b16 %v1418
    %v1516 = vunpack.c.h.b16 %v1418
    %v1517 = vunpack.c.l.b16 %v1419
    %v1518 = vunpack.c.h.b16 %v1419
    %v1519 = vpack.c.b16 %v1459, %v1455
    %v1520 = vpack.c.b16 %v1460, %v1456
    %v1521 = vpack.c.b16 %v1461, %v1457
    %v1522 = vpack.c.b16 %v1462, %v1458
    %v1523 = vpack.c.b16 %v1467, %v1463
    %v1524 = vpack.c.b16 %v1468, %v1464
    %v1525 = vpack.c.b16 %v1469, %v1465
    %v1526 = vpack.c.b16 %v1470, %v1466
    %v1527 = vpack.c.b16 %v1475, %v1471
    %v1528 = vpack.c.b16 %v1476, %v1472
    %v1529 = vpack.c.b16 %v1477, %v1473
    %v1530 = vpack.c.b16 %v1478, %v1474
    %v1531 = vpack.c.b16 %v1483, %v1479
    %v1532 = vpack.c.b16 %v1484, %v1480
    %v1533 = vpack.c.b16 %v1485, %v1481
    %v1534 = vpack.c.b16 %v1486, %v1482
    %v1535 = vpack.c.b16 %v1491, %v1487
    %v1536 = vpack.c.b16 %v1492, %v1488
    %v1537 = vpack.c.b16 %v1493, %v1489
    %v1538 = vpack.c.b16 %v1494, %v1490
    %v1539 = vpack.c.b16 %v1499, %v1495
    %v1540 = vpack.c.b16 %v1500, %v1496
    %v1541 = vpack.c.b16 %v1501, %v1497
    %v1542 = vpack.c.b16 %v1502, %v1498
    %v1543 = vpack.c.b16 %v1507, %v1503
    %v1544 = vpack.c.b16 %v1508, %v1504
    %v1545 = vpack.c.b16 %v1509, %v1505
    %v1546 = vpack.c.b16 %v1510, %v1506
    %v1547 = vpack.c.b16 %v1515, %v1511
    %v1548 = vpack.c.b16 %v1516, %v1512
    %v1549 = vpack.c.b16 %v1517, %v1513
    %v1550 = vpack.c.b16 %v1518, %v1514
    %1583 = vmatprep.subr.bf16.mxu0 %v1548
    %1584 = vmatpush1.bf16.msra.mxu0 %v1547
    %1585 = vmatprep.subr.bf16.mxu0 %v1544
    %1586 = vmatpush1.bf16.msra.mxu0 %v1543
    %1587 = vmatprep.subr.bf16.mxu0 %v1540
    %1588 = vmatpush1.bf16.msra.mxu0 %v1539
    %1589 = vmatprep.subr.bf16.mxu0 %v1536
    %1590 = vmatpush1.bf16.msra.mxu0 %v1535
    %1591 = vmatprep.subr.bf16.mxu0 %v1532
    %1592 = vmatpush1.bf16.msra.mxu0 %v1531
    %1593 = vmatprep.subr.bf16.mxu0 %v1528
    %1594 = vmatpush1.bf16.msra.mxu0 %v1527
    %1595 = vmatprep.subr.bf16.mxu0 %v1524
    %1596 = vmatpush1.bf16.msra.mxu0 %v1523
    %1597 = vmatprep.subr.bf16.mxu0 %v1520
    %1598 = vmatpush1.bf16.msra.mxu0 %v1519
    %1599 = vmatprep.subr.bf16.mxu0 0
    %1600 = vmatpush2.bf16.msra.mxu0 0
    %1601 = vmatprep.subr.bf16.mxu0 0
    %1602 = vmatpush2.bf16.msra.mxu0 0
    %1603 = vmatprep.subr.bf16.mxu0 0
    %1604 = vmatpush2.bf16.msra.mxu0 0
    %1605 = vmatprep.subr.bf16.mxu0 0
    %1606 = vmatpush2.bf16.msra.mxu0 0
    %1607 = vmatprep.subr.bf16.mxu0 0
    %1608 = vmatpush2.bf16.msra.mxu0 0
    %1609 = vmatprep.subr.bf16.mxu0 0
    %1610 = vmatpush2.bf16.msra.mxu0 0
    %1611 = vmatprep.subr.bf16.mxu0 0
    %1612 = vmatpush2.bf16.msra.mxu0 0
    %1613 = vmatprep.subr.bf16.mxu0 0
    %1614 = vmatpush2.bf16.msra.mxu0 0
    %1615 = vmatprep.mubr.bf16.mxu0 0
    %1616 = vmatmul.mubr.bf16.gmra.mxu0 %v1421
    %v1617 = vpop.f32.mrf.mxu0
    %v1618 = vadd.f32 0.0, %v1617
    %v1619 = vpop.f32.mrf.mxu0
    %v1620 = vadd.f32 0.0, %v1619
    %v1621 = vpop.f32.mrf.mxu0
    %v1622 = vpop.f32.mrf.mxu0
    %1623 = vdwg.mxu0
    %1624 = vmatprep.subr.bf16.mxu0 %v1550
    %1625 = vmatpush1.bf16.msra.mxu0 %v1549
    %1626 = vmatprep.subr.bf16.mxu0 %v1546
    %1627 = vmatpush1.bf16.msra.mxu0 %v1545
    %1628 = vmatprep.subr.bf16.mxu0 %v1542
    %1629 = vmatpush1.bf16.msra.mxu0 %v1541
    %1630 = vmatprep.subr.bf16.mxu0 %v1538
    %1631 = vmatpush1.bf16.msra.mxu0 %v1537
    %1632 = vmatprep.subr.bf16.mxu0 %v1534
    %1633 = vmatpush1.bf16.msra.mxu0 %v1533
    %1634 = vmatprep.subr.bf16.mxu0 %v1530
    %1635 = vmatpush1.bf16.msra.mxu0 %v1529
    %1636 = vmatprep.subr.bf16.mxu0 %v1526
    %1637 = vmatpush1.bf16.msra.mxu0 %v1525
    %1638 = vmatprep.subr.bf16.mxu0 %v1522
    %1639 = vmatpush1.bf16.msra.mxu0 %v1521
    %1640 = vmatprep.subr.bf16.mxu0 0
    %1641 = vmatpush2.bf16.msra.mxu0 0
    %1642 = vmatprep.subr.bf16.mxu0 0
    %1643 = vmatpush2.bf16.msra.mxu0 0
    %1644 = vmatprep.subr.bf16.mxu0 0
    %1645 = vmatpush2.bf16.msra.mxu0 0
    %1646 = vmatprep.subr.bf16.mxu0 0
    %1647 = vmatpush2.bf16.msra.mxu0 0
    %1648 = vmatprep.subr.bf16.mxu0 0
    %1649 = vmatpush2.bf16.msra.mxu0 0
    %1650 = vmatprep.subr.bf16.mxu0 0
    %1651 = vmatpush2.bf16.msra.mxu0 0
    %1652 = vmatprep.subr.bf16.mxu0 0
    %1653 = vmatpush2.bf16.msra.mxu0 0
    %1654 = vmatprep.subr.bf16.mxu0 0
    %1655 = vmatpush2.bf16.msra.mxu0 0
    %1656 = vmatprep.mubr.bf16.mxu0 0
    %1657 = vmatmul.mubr.bf16.gmra.mxu0 %v1421
    %v1658 = vpop.f32.mrf.mxu0
    %v1659 = vadd.f32 0.0, %v1658
    %v1660 = vpop.f32.mrf.mxu0
    %v1661 = vadd.f32 0.0, %v1660
    %v1662 = vpop.f32.mrf.mxu0
    %v1663 = vpop.f32.mrf.mxu0
    %1664 = vdwg.mxu0
    %v1669 = vrot.slane %v1618, 2
    %v1670 = vrot.slane %v1620, 2
    %v1671 = vrot.slane %v1659, 2
    %v1672 = vrot.slane %v1661, 2
    %v1677 = vadd.f32 %v1384, %v1669
    %v1678 = vadd.f32 %v1385, %v1670
    %v1679 = vadd.f32 %v1386, %v1671
    %v1680 = vadd.f32 %v1387, %v1672
    %v1681 = vxor.u32 %v1677, 2147483648
    %v1682 = vmul.f32 %v1681, 1.442695
    %v1683 = vpow.pop %v1682
    %v1684 = vadd.f32 %v1683, 1.0
    %v1685 = vrcp.pop %v1684
    %v1686 = vmul.f32 1.0, %v1685
    %v1687 = vxor.u32 %v1678, 2147483648
    %v1688 = vmul.f32 %v1687, 1.442695
    %v1689 = vpow.pop %v1688
    %v1690 = vadd.f32 %v1689, 1.0
    %v1691 = vrcp.pop %v1690
    %v1692 = vmul.f32 1.0, %v1691
    %v1693 = vtanh.pop %v1679
    %v1694 = vxor.u32 %v1680, 2147483648
    %v1695 = vmul.f32 %v1694, 1.442695
    %v1696 = vpow.pop %v1695
    %v1697 = vadd.f32 %v1696, 1.0
    %v1698 = vrcp.pop %v1697
    %v1699 = vmul.f32 1.0, %v1698
    %v1701 = vrot.slane %v1379, 6
    %v1703 = vmul.f32 %v1692, %v1701
    %v1704 = vmul.f32 %v1686, %v1693
    %v1705 = vadd.f32 %v1703, %v1704
    %v1706 = vtanh.pop %v1705
    %v1707 = vmul.f32 %v1699, %v1706
    %v1708 = vpack.c.bf16 %v1707, %v1707
    %1709 = vst [vmem:[#allocation3] sm:$0xc0] %v1707
    %v1710 = vld [vmem:[#allocation2 + $0x20] sm:$0x3]
    %v1711 = vld [vmem:[#allocation2 + $0x28] sm:$0x3]
    %v1712 = vld [vmem:[#allocation2 + $0x30] sm:$0x3]
    %v1713 = vld [vmem:[#allocation2 + $0x38] sm:$0x3]
    %v1714 = vld [vmem:[#allocation11] sm:$0xff]
    %v1715 = vld [vmem:[#allocation11 + $0x8] sm:$0xff]
    %v1716 = vld [vmem:[#allocation11 + $0x10] sm:$0xff]
    %v1717 = vld [vmem:[#allocation11 + $0x18] sm:$0xff]
    %v1718 = vld [vmem:[#allocation11 + $0x20] sm:$0xff]
    %v1719 = vld [vmem:[#allocation11 + $0x28] sm:$0xff]
    %v1720 = vld [vmem:[#allocation11 + $0x30] sm:$0xff]
    %v1721 = vld [vmem:[#allocation11 + $0x38] sm:$0xff]
    %v1722 = vld [vmem:[#allocation11 + $0x40] sm:$0xff]
    %v1723 = vld [vmem:[#allocation11 + $0x48] sm:$0xff]
    %v1724 = vld [vmem:[#allocation11 + $0x50] sm:$0xff]
    %v1725 = vld [vmem:[#allocation11 + $0x58] sm:$0xff]
    %v1726 = vld [vmem:[#allocation11 + $0x60] sm:$0xff]
    %v1727 = vld [vmem:[#allocation11 + $0x68] sm:$0xff]
    %v1728 = vld [vmem:[#allocation11 + $0x70] sm:$0xff]
    %v1729 = vld [vmem:[#allocation11 + $0x78] sm:$0xff]
    %v1730 = vld [vmem:[#allocation11 + $0x80] sm:$0xff]
    %v1731 = vld [vmem:[#allocation11 + $0x88] sm:$0xff]
    %v1732 = vld [vmem:[#allocation11 + $0x90] sm:$0xff]
    %v1733 = vld [vmem:[#allocation11 + $0x98] sm:$0xff]
    %v1734 = vld [vmem:[#allocation11 + $0xa0] sm:$0xff]
    %v1735 = vld [vmem:[#allocation11 + $0xa8] sm:$0xff]
    %v1736 = vld [vmem:[#allocation11 + $0xb0] sm:$0xff]
    %v1737 = vld [vmem:[#allocation11 + $0xb8] sm:$0xff]
    %v1738 = vld [vmem:[#allocation11 + $0xc0] sm:$0xff]
    %v1739 = vld [vmem:[#allocation11 + $0xc8] sm:$0xff]
    %v1740 = vld [vmem:[#allocation11 + $0xd0] sm:$0xff]
    %v1741 = vld [vmem:[#allocation11 + $0xd8] sm:$0xff]
    %v1742 = vld [vmem:[#allocation11 + $0xe0] sm:$0xff]
    %v1743 = vld [vmem:[#allocation11 + $0xe8] sm:$0xff]
    %v1744 = vld [vmem:[#allocation11 + $0xf0] sm:$0xff]
    %v1745 = vld [vmem:[#allocation11 + $0xf8] sm:$0xff]
    %v1747 = vrot.slane %v1708, 3
    %v1781 = vunpack.c.l.b16 %v1714
    %v1782 = vunpack.c.h.b16 %v1714
    %v1783 = vunpack.c.l.b16 %v1715
    %v1784 = vunpack.c.h.b16 %v1715
    %v1785 = vunpack.c.l.b16 %v1716
    %v1786 = vunpack.c.h.b16 %v1716
    %v1787 = vunpack.c.l.b16 %v1717
    %v1788 = vunpack.c.h.b16 %v1717
    %v1789 = vunpack.c.l.b16 %v1718
    %v1790 = vunpack.c.h.b16 %v1718
    %v1791 = vunpack.c.l.b16 %v1719
    %v1792 = vunpack.c.h.b16 %v1719
    %v1793 = vunpack.c.l.b16 %v1720
    %v1794 = vunpack.c.h.b16 %v1720
    %v1795 = vunpack.c.l.b16 %v1721
    %v1796 = vunpack.c.h.b16 %v1721
    %v1797 = vunpack.c.l.b16 %v1722
    %v1798 = vunpack.c.h.b16 %v1722
    %v1799 = vunpack.c.l.b16 %v1723
    %v1800 = vunpack.c.h.b16 %v1723
    %v1801 = vunpack.c.l.b16 %v1724
    %v1802 = vunpack.c.h.b16 %v1724
    %v1803 = vunpack.c.l.b16 %v1725
    %v1804 = vunpack.c.h.b16 %v1725
    %v1805 = vunpack.c.l.b16 %v1726
    %v1806 = vunpack.c.h.b16 %v1726
    %v1807 = vunpack.c.l.b16 %v1727
    %v1808 = vunpack.c.h.b16 %v1727
    %v1809 = vunpack.c.l.b16 %v1728
    %v1810 = vunpack.c.h.b16 %v1728
    %v1811 = vunpack.c.l.b16 %v1729
    %v1812 = vunpack.c.h.b16 %v1729
    %v1813 = vunpack.c.l.b16 %v1730
    %v1814 = vunpack.c.h.b16 %v1730
    %v1815 = vunpack.c.l.b16 %v1731
    %v1816 = vunpack.c.h.b16 %v1731
    %v1817 = vunpack.c.l.b16 %v1732
    %v1818 = vunpack.c.h.b16 %v1732
    %v1819 = vunpack.c.l.b16 %v1733
    %v1820 = vunpack.c.h.b16 %v1733
    %v1821 = vunpack.c.l.b16 %v1734
    %v1822 = vunpack.c.h.b16 %v1734
    %v1823 = vunpack.c.l.b16 %v1735
    %v1824 = vunpack.c.h.b16 %v1735
    %v1825 = vunpack.c.l.b16 %v1736
    %v1826 = vunpack.c.h.b16 %v1736
    %v1827 = vunpack.c.l.b16 %v1737
    %v1828 = vunpack.c.h.b16 %v1737
    %v1829 = vunpack.c.l.b16 %v1738
    %v1830 = vunpack.c.h.b16 %v1738
    %v1831 = vunpack.c.l.b16 %v1739
    %v1832 = vunpack.c.h.b16 %v1739
    %v1833 = vunpack.c.l.b16 %v1740
    %v1834 = vunpack.c.h.b16 %v1740
    %v1835 = vunpack.c.l.b16 %v1741
    %v1836 = vunpack.c.h.b16 %v1741
    %v1837 = vunpack.c.l.b16 %v1742
    %v1838 = vunpack.c.h.b16 %v1742
    %v1839 = vunpack.c.l.b16 %v1743
    %v1840 = vunpack.c.h.b16 %v1743
    %v1841 = vunpack.c.l.b16 %v1744
    %v1842 = vunpack.c.h.b16 %v1744
    %v1843 = vunpack.c.l.b16 %v1745
    %v1844 = vunpack.c.h.b16 %v1745
    %v1845 = vpack.c.b16 %v1785, %v1781
    %v1846 = vpack.c.b16 %v1786, %v1782
    %v1847 = vpack.c.b16 %v1787, %v1783
    %v1848 = vpack.c.b16 %v1788, %v1784
    %v1849 = vpack.c.b16 %v1793, %v1789
    %v1850 = vpack.c.b16 %v1794, %v1790
    %v1851 = vpack.c.b16 %v1795, %v1791
    %v1852 = vpack.c.b16 %v1796, %v1792
    %v1853 = vpack.c.b16 %v1801, %v1797
    %v1854 = vpack.c.b16 %v1802, %v1798
    %v1855 = vpack.c.b16 %v1803, %v1799
    %v1856 = vpack.c.b16 %v1804, %v1800
    %v1857 = vpack.c.b16 %v1809, %v1805
    %v1858 = vpack.c.b16 %v1810, %v1806
    %v1859 = vpack.c.b16 %v1811, %v1807
    %v1860 = vpack.c.b16 %v1812, %v1808
    %v1861 = vpack.c.b16 %v1817, %v1813
    %v1862 = vpack.c.b16 %v1818, %v1814
    %v1863 = vpack.c.b16 %v1819, %v1815
    %v1864 = vpack.c.b16 %v1820, %v1816
    %v1865 = vpack.c.b16 %v1825, %v1821
    %v1866 = vpack.c.b16 %v1826, %v1822
    %v1867 = vpack.c.b16 %v1827, %v1823
    %v1868 = vpack.c.b16 %v1828, %v1824
    %v1869 = vpack.c.b16 %v1833, %v1829
    %v1870 = vpack.c.b16 %v1834, %v1830
    %v1871 = vpack.c.b16 %v1835, %v1831
    %v1872 = vpack.c.b16 %v1836, %v1832
    %v1873 = vpack.c.b16 %v1841, %v1837
    %v1874 = vpack.c.b16 %v1842, %v1838
    %v1875 = vpack.c.b16 %v1843, %v1839
    %v1876 = vpack.c.b16 %v1844, %v1840
    %1909 = vmatprep.subr.bf16.mxu0 %v1874
    %1910 = vmatpush1.bf16.msra.mxu0 %v1873
    %1911 = vmatprep.subr.bf16.mxu0 %v1870
    %1912 = vmatpush1.bf16.msra.mxu0 %v1869
    %1913 = vmatprep.subr.bf16.mxu0 %v1866
    %1914 = vmatpush1.bf16.msra.mxu0 %v1865
    %1915 = vmatprep.subr.bf16.mxu0 %v1862
    %1916 = vmatpush1.bf16.msra.mxu0 %v1861
    %1917 = vmatprep.subr.bf16.mxu0 %v1858
    %1918 = vmatpush1.bf16.msra.mxu0 %v1857
    %1919 = vmatprep.subr.bf16.mxu0 %v1854
    %1920 = vmatpush1.bf16.msra.mxu0 %v1853
    %1921 = vmatprep.subr.bf16.mxu0 %v1850
    %1922 = vmatpush1.bf16.msra.mxu0 %v1849
    %1923 = vmatprep.subr.bf16.mxu0 %v1846
    %1924 = vmatpush1.bf16.msra.mxu0 %v1845
    %1925 = vmatprep.subr.bf16.mxu0 0
    %1926 = vmatpush2.bf16.msra.mxu0 0
    %1927 = vmatprep.subr.bf16.mxu0 0
    %1928 = vmatpush2.bf16.msra.mxu0 0
    %1929 = vmatprep.subr.bf16.mxu0 0
    %1930 = vmatpush2.bf16.msra.mxu0 0
    %1931 = vmatprep.subr.bf16.mxu0 0
    %1932 = vmatpush2.bf16.msra.mxu0 0
    %1933 = vmatprep.subr.bf16.mxu0 0
    %1934 = vmatpush2.bf16.msra.mxu0 0
    %1935 = vmatprep.subr.bf16.mxu0 0
    %1936 = vmatpush2.bf16.msra.mxu0 0
    %1937 = vmatprep.subr.bf16.mxu0 0
    %1938 = vmatpush2.bf16.msra.mxu0 0
    %1939 = vmatprep.subr.bf16.mxu0 0
    %1940 = vmatpush2.bf16.msra.mxu0 0
    %1941 = vmatprep.mubr.bf16.mxu0 0
    %1942 = vmatmul.mubr.bf16.gmra.mxu0 %v1747
    %v1943 = vpop.f32.mrf.mxu0
    %v1944 = vadd.f32 0.0, %v1943
    %v1945 = vpop.f32.mrf.mxu0
    %v1946 = vadd.f32 0.0, %v1945
    %v1947 = vpop.f32.mrf.mxu0
    %v1948 = vpop.f32.mrf.mxu0
    %1949 = vdwg.mxu0
    %1950 = vmatprep.subr.bf16.mxu0 %v1876
    %1951 = vmatpush1.bf16.msra.mxu0 %v1875
    %1952 = vmatprep.subr.bf16.mxu0 %v1872
    %1953 = vmatpush1.bf16.msra.mxu0 %v1871
    %1954 = vmatprep.subr.bf16.mxu0 %v1868
    %1955 = vmatpush1.bf16.msra.mxu0 %v1867
    %1956 = vmatprep.subr.bf16.mxu0 %v1864
    %1957 = vmatpush1.bf16.msra.mxu0 %v1863
    %1958 = vmatprep.subr.bf16.mxu0 %v1860
    %1959 = vmatpush1.bf16.msra.mxu0 %v1859
    %1960 = vmatprep.subr.bf16.mxu0 %v1856
    %1961 = vmatpush1.bf16.msra.mxu0 %v1855
    %1962 = vmatprep.subr.bf16.mxu0 %v1852
    %1963 = vmatpush1.bf16.msra.mxu0 %v1851
    %1964 = vmatprep.subr.bf16.mxu0 %v1848
    %1965 = vmatpush1.bf16.msra.mxu0 %v1847
    %1966 = vmatprep.subr.bf16.mxu0 0
    %1967 = vmatpush2.bf16.msra.mxu0 0
    %1968 = vmatprep.subr.bf16.mxu0 0
    %1969 = vmatpush2.bf16.msra.mxu0 0
    %1970 = vmatprep.subr.bf16.mxu0 0
    %1971 = vmatpush2.bf16.msra.mxu0 0
    %1972 = vmatprep.subr.bf16.mxu0 0
    %1973 = vmatpush2.bf16.msra.mxu0 0
    %1974 = vmatprep.subr.bf16.mxu0 0
    %1975 = vmatpush2.bf16.msra.mxu0 0
    %1976 = vmatprep.subr.bf16.mxu0 0
    %1977 = vmatpush2.bf16.msra.mxu0 0
    %1978 = vmatprep.subr.bf16.mxu0 0
    %1979 = vmatpush2.bf16.msra.mxu0 0
    %1980 = vmatprep.subr.bf16.mxu0 0
    %1981 = vmatpush2.bf16.msra.mxu0 0
    %1982 = vmatprep.mubr.bf16.mxu0 0
    %1983 = vmatmul.mubr.bf16.gmra.mxu0 %v1747
    %v1984 = vpop.f32.mrf.mxu0
    %v1985 = vadd.f32 0.0, %v1984
    %v1986 = vpop.f32.mrf.mxu0
    %v1987 = vadd.f32 0.0, %v1986
    %v1988 = vpop.f32.mrf.mxu0
    %v1989 = vpop.f32.mrf.mxu0
    %1990 = vdwg.mxu0
    %v1991 = vadd.f32 %v1710, %v1944
    %v1992 = vadd.f32 %v1711, %v1946
    %v1993 = vadd.f32 %v1712, %v1985
    %v1994 = vadd.f32 %v1713, %v1987
    %v1995 = vxor.u32 %v1991, 2147483648
    %v1996 = vmul.f32 %v1995, 1.442695
    %v1997 = vpow.pop %v1996
    %v1998 = vadd.f32 %v1997, 1.0
    %v1999 = vrcp.pop %v1998
    %v2000 = vmul.f32 1.0, %v1999
    %v2001 = vxor.u32 %v1992, 2147483648
    %v2002 = vmul.f32 %v2001, 1.442695
    %v2003 = vpow.pop %v2002
    %v2004 = vadd.f32 %v2003, 1.0
    %v2005 = vrcp.pop %v2004
    %v2006 = vmul.f32 1.0, %v2005
    %v2007 = vtanh.pop %v1993
    %v2008 = vxor.u32 %v1994, 2147483648
    %v2009 = vmul.f32 %v2008, 1.442695
    %v2010 = vpow.pop %v2009
    %v2011 = vadd.f32 %v2010, 1.0
    %v2012 = vrcp.pop %v2011
    %v2013 = vmul.f32 1.0, %v2012
    %v2015 = vrot.slane %v1705, 6
    %v2017 = vmul.f32 %v2006, %v2015
    %v2018 = vmul.f32 %v2000, %v2007
    %v2019 = vadd.f32 %v2017, %v2018
    %v2020 = vtanh.pop %v2019
    %v2021 = vmul.f32 %v2013, %v2020
    %v2022 = vpack.c.bf16 %v2021, %v2021
    %2023 = vst [vmem:[#allocation3 + $0x8] sm:$0x3] %v2021
    %v2024 = vld [vmem:[#allocation2 + $0x20] sm:$0xc]
    %v2025 = vld [vmem:[#allocation2 + $0x28] sm:$0xc]
    %v2026 = vld [vmem:[#allocation2 + $0x30] sm:$0xc]
    %v2027 = vld [vmem:[#allocation2 + $0x38] sm:$0xc]
    %v2028 = vld [vmem:[#allocation11] sm:$0xff]
    %v2029 = vld [vmem:[#allocation11 + $0x8] sm:$0xff]
    %v2030 = vld [vmem:[#allocation11 + $0x10] sm:$0xff]
    %v2031 = vld [vmem:[#allocation11 + $0x18] sm:$0xff]
    %v2032 = vld [vmem:[#allocation11 + $0x20] sm:$0xff]
    %v2033 = vld [vmem:[#allocation11 + $0x28] sm:$0xff]
    %v2034 = vld [vmem:[#allocation11 + $0x30] sm:$0xff]
    %v2035 = vld [vmem:[#allocation11 + $0x38] sm:$0xff]
    %v2036 = vld [vmem:[#allocation11 + $0x40] sm:$0xff]
    %v2037 = vld [vmem:[#allocation11 + $0x48] sm:$0xff]
    %v2038 = vld [vmem:[#allocation11 + $0x50] sm:$0xff]
    %v2039 = vld [vmem:[#allocation11 + $0x58] sm:$0xff]
    %v2040 = vld [vmem:[#allocation11 + $0x60] sm:$0xff]
    %v2041 = vld [vmem:[#allocation11 + $0x68] sm:$0xff]
    %v2042 = vld [vmem:[#allocation11 + $0x70] sm:$0xff]
    %v2043 = vld [vmem:[#allocation11 + $0x78] sm:$0xff]
    %v2044 = vld [vmem:[#allocation11 + $0x80] sm:$0xff]
    %v2045 = vld [vmem:[#allocation11 + $0x88] sm:$0xff]
    %v2046 = vld [vmem:[#allocation11 + $0x90] sm:$0xff]
    %v2047 = vld [vmem:[#allocation11 + $0x98] sm:$0xff]
    %v2048 = vld [vmem:[#allocation11 + $0xa0] sm:$0xff]
    %v2049 = vld [vmem:[#allocation11 + $0xa8] sm:$0xff]
    %v2050 = vld [vmem:[#allocation11 + $0xb0] sm:$0xff]
    %v2051 = vld [vmem:[#allocation11 + $0xb8] sm:$0xff]
    %v2052 = vld [vmem:[#allocation11 + $0xc0] sm:$0xff]
    %v2053 = vld [vmem:[#allocation11 + $0xc8] sm:$0xff]
    %v2054 = vld [vmem:[#allocation11 + $0xd0] sm:$0xff]
    %v2055 = vld [vmem:[#allocation11 + $0xd8] sm:$0xff]
    %v2056 = vld [vmem:[#allocation11 + $0xe0] sm:$0xff]
    %v2057 = vld [vmem:[#allocation11 + $0xe8] sm:$0xff]
    %v2058 = vld [vmem:[#allocation11 + $0xf0] sm:$0xff]
    %v2059 = vld [vmem:[#allocation11 + $0xf8] sm:$0xff]
    %v2092 = vunpack.c.l.b16 %v2028
    %v2093 = vunpack.c.h.b16 %v2028
    %v2094 = vunpack.c.l.b16 %v2029
    %v2095 = vunpack.c.h.b16 %v2029
    %v2096 = vunpack.c.l.b16 %v2030
    %v2097 = vunpack.c.h.b16 %v2030
    %v2098 = vunpack.c.l.b16 %v2031
    %v2099 = vunpack.c.h.b16 %v2031
    %v2100 = vunpack.c.l.b16 %v2032
    %v2101 = vunpack.c.h.b16 %v2032
    %v2102 = vunpack.c.l.b16 %v2033
    %v2103 = vunpack.c.h.b16 %v2033
    %v2104 = vunpack.c.l.b16 %v2034
    %v2105 = vunpack.c.h.b16 %v2034
    %v2106 = vunpack.c.l.b16 %v2035
    %v2107 = vunpack.c.h.b16 %v2035
    %v2108 = vunpack.c.l.b16 %v2036
    %v2109 = vunpack.c.h.b16 %v2036
    %v2110 = vunpack.c.l.b16 %v2037
    %v2111 = vunpack.c.h.b16 %v2037
    %v2112 = vunpack.c.l.b16 %v2038
    %v2113 = vunpack.c.h.b16 %v2038
    %v2114 = vunpack.c.l.b16 %v2039
    %v2115 = vunpack.c.h.b16 %v2039
    %v2116 = vunpack.c.l.b16 %v2040
    %v2117 = vunpack.c.h.b16 %v2040
    %v2118 = vunpack.c.l.b16 %v2041
    %v2119 = vunpack.c.h.b16 %v2041
    %v2120 = vunpack.c.l.b16 %v2042
    %v2121 = vunpack.c.h.b16 %v2042
    %v2122 = vunpack.c.l.b16 %v2043
    %v2123 = vunpack.c.h.b16 %v2043
    %v2124 = vunpack.c.l.b16 %v2044
    %v2125 = vunpack.c.h.b16 %v2044
    %v2126 = vunpack.c.l.b16 %v2045
    %v2127 = vunpack.c.h.b16 %v2045
    %v2128 = vunpack.c.l.b16 %v2046
    %v2129 = vunpack.c.h.b16 %v2046
    %v2130 = vunpack.c.l.b16 %v2047
    %v2131 = vunpack.c.h.b16 %v2047
    %v2132 = vunpack.c.l.b16 %v2048
    %v2133 = vunpack.c.h.b16 %v2048
    %v2134 = vunpack.c.l.b16 %v2049
    %v2135 = vunpack.c.h.b16 %v2049
    %v2136 = vunpack.c.l.b16 %v2050
    %v2137 = vunpack.c.h.b16 %v2050
    %v2138 = vunpack.c.l.b16 %v2051
    %v2139 = vunpack.c.h.b16 %v2051
    %v2140 = vunpack.c.l.b16 %v2052
    %v2141 = vunpack.c.h.b16 %v2052
    %v2142 = vunpack.c.l.b16 %v2053
    %v2143 = vunpack.c.h.b16 %v2053
    %v2144 = vunpack.c.l.b16 %v2054
    %v2145 = vunpack.c.h.b16 %v2054
    %v2146 = vunpack.c.l.b16 %v2055
    %v2147 = vunpack.c.h.b16 %v2055
    %v2148 = vunpack.c.l.b16 %v2056
    %v2149 = vunpack.c.h.b16 %v2056
    %v2150 = vunpack.c.l.b16 %v2057
    %v2151 = vunpack.c.h.b16 %v2057
    %v2152 = vunpack.c.l.b16 %v2058
    %v2153 = vunpack.c.h.b16 %v2058
    %v2154 = vunpack.c.l.b16 %v2059
    %v2155 = vunpack.c.h.b16 %v2059
    %v2156 = vpack.c.b16 %v2096, %v2092
    %v2157 = vpack.c.b16 %v2097, %v2093
    %v2158 = vpack.c.b16 %v2098, %v2094
    %v2159 = vpack.c.b16 %v2099, %v2095
    %v2160 = vpack.c.b16 %v2104, %v2100
    %v2161 = vpack.c.b16 %v2105, %v2101
    %v2162 = vpack.c.b16 %v2106, %v2102
    %v2163 = vpack.c.b16 %v2107, %v2103
    %v2164 = vpack.c.b16 %v2112, %v2108
    %v2165 = vpack.c.b16 %v2113, %v2109
    %v2166 = vpack.c.b16 %v2114, %v2110
    %v2167 = vpack.c.b16 %v2115, %v2111
    %v2168 = vpack.c.b16 %v2120, %v2116
    %v2169 = vpack.c.b16 %v2121, %v2117
    %v2170 = vpack.c.b16 %v2122, %v2118
    %v2171 = vpack.c.b16 %v2123, %v2119
    %v2172 = vpack.c.b16 %v2128, %v2124
    %v2173 = vpack.c.b16 %v2129, %v2125
    %v2174 = vpack.c.b16 %v2130, %v2126
    %v2175 = vpack.c.b16 %v2131, %v2127
    %v2176 = vpack.c.b16 %v2136, %v2132
    %v2177 = vpack.c.b16 %v2137, %v2133
    %v2178 = vpack.c.b16 %v2138, %v2134
    %v2179 = vpack.c.b16 %v2139, %v2135
    %v2180 = vpack.c.b16 %v2144, %v2140
    %v2181 = vpack.c.b16 %v2145, %v2141
    %v2182 = vpack.c.b16 %v2146, %v2142
    %v2183 = vpack.c.b16 %v2147, %v2143
    %v2184 = vpack.c.b16 %v2152, %v2148
    %v2185 = vpack.c.b16 %v2153, %v2149
    %v2186 = vpack.c.b16 %v2154, %v2150
    %v2187 = vpack.c.b16 %v2155, %v2151
    %2220 = vmatprep.subr.bf16.mxu0 %v2185
    %2221 = vmatpush1.bf16.msra.mxu0 %v2184
    %2222 = vmatprep.subr.bf16.mxu0 %v2181
    %2223 = vmatpush1.bf16.msra.mxu0 %v2180
    %2224 = vmatprep.subr.bf16.mxu0 %v2177
    %2225 = vmatpush1.bf16.msra.mxu0 %v2176
    %2226 = vmatprep.subr.bf16.mxu0 %v2173
    %2227 = vmatpush1.bf16.msra.mxu0 %v2172
    %2228 = vmatprep.subr.bf16.mxu0 %v2169
    %2229 = vmatpush1.bf16.msra.mxu0 %v2168
    %2230 = vmatprep.subr.bf16.mxu0 %v2165
    %2231 = vmatpush1.bf16.msra.mxu0 %v2164
    %2232 = vmatprep.subr.bf16.mxu0 %v2161
    %2233 = vmatpush1.bf16.msra.mxu0 %v2160
    %2234 = vmatprep.subr.bf16.mxu0 %v2157
    %2235 = vmatpush1.bf16.msra.mxu0 %v2156
    %2236 = vmatprep.subr.bf16.mxu0 0
    %2237 = vmatpush2.bf16.msra.mxu0 0
    %2238 = vmatprep.subr.bf16.mxu0 0
    %2239 = vmatpush2.bf16.msra.mxu0 0
    %2240 = vmatprep.subr.bf16.mxu0 0
    %2241 = vmatpush2.bf16.msra.mxu0 0
    %2242 = vmatprep.subr.bf16.mxu0 0
    %2243 = vmatpush2.bf16.msra.mxu0 0
    %2244 = vmatprep.subr.bf16.mxu0 0
    %2245 = vmatpush2.bf16.msra.mxu0 0
    %2246 = vmatprep.subr.bf16.mxu0 0
    %2247 = vmatpush2.bf16.msra.mxu0 0
    %2248 = vmatprep.subr.bf16.mxu0 0
    %2249 = vmatpush2.bf16.msra.mxu0 0
    %2250 = vmatprep.subr.bf16.mxu0 0
    %2251 = vmatpush2.bf16.msra.mxu0 0
    %2252 = vmatprep.mubr.bf16.mxu0 0
    %2253 = vmatmul.mubr.bf16.gmra.mxu0 %v2022
    %v2254 = vpop.f32.mrf.mxu0
    %v2255 = vadd.f32 0.0, %v2254
    %v2256 = vpop.f32.mrf.mxu0
    %v2257 = vadd.f32 0.0, %v2256
    %v2258 = vpop.f32.mrf.mxu0
    %v2259 = vpop.f32.mrf.mxu0
    %2260 = vdwg.mxu0
    %2261 = vmatprep.subr.bf16.mxu0 %v2187
    %2262 = vmatpush1.bf16.msra.mxu0 %v2186
    %2263 = vmatprep.subr.bf16.mxu0 %v2183
    %2264 = vmatpush1.bf16.msra.mxu0 %v2182
    %2265 = vmatprep.subr.bf16.mxu0 %v2179
    %2266 = vmatpush1.bf16.msra.mxu0 %v2178
    %2267 = vmatprep.subr.bf16.mxu0 %v2175
    %2268 = vmatpush1.bf16.msra.mxu0 %v2174
    %2269 = vmatprep.subr.bf16.mxu0 %v2171
    %2270 = vmatpush1.bf16.msra.mxu0 %v2170
    %2271 = vmatprep.subr.bf16.mxu0 %v2167
    %2272 = vmatpush1.bf16.msra.mxu0 %v2166
    %2273 = vmatprep.subr.bf16.mxu0 %v2163
    %2274 = vmatpush1.bf16.msra.mxu0 %v2162
    %2275 = vmatprep.subr.bf16.mxu0 %v2159
    %2276 = vmatpush1.bf16.msra.mxu0 %v2158
    %2277 = vmatprep.subr.bf16.mxu0 0
    %2278 = vmatpush2.bf16.msra.mxu0 0
    %2279 = vmatprep.subr.bf16.mxu0 0
    %2280 = vmatpush2.bf16.msra.mxu0 0
    %2281 = vmatprep.subr.bf16.mxu0 0
    %2282 = vmatpush2.bf16.msra.mxu0 0
    %2283 = vmatprep.subr.bf16.mxu0 0
    %2284 = vmatpush2.bf16.msra.mxu0 0
    %2285 = vmatprep.subr.bf16.mxu0 0
    %2286 = vmatpush2.bf16.msra.mxu0 0
    %2287 = vmatprep.subr.bf16.mxu0 0
    %2288 = vmatpush2.bf16.msra.mxu0 0
    %2289 = vmatprep.subr.bf16.mxu0 0
    %2290 = vmatpush2.bf16.msra.mxu0 0
    %2291 = vmatprep.subr.bf16.mxu0 0
    %2292 = vmatpush2.bf16.msra.mxu0 0
    %2293 = vmatprep.mubr.bf16.mxu0 0
    %2294 = vmatmul.mubr.bf16.gmra.mxu0 %v2022
    %v2295 = vpop.f32.mrf.mxu0
    %v2296 = vadd.f32 0.0, %v2295
    %v2297 = vpop.f32.mrf.mxu0
    %v2298 = vadd.f32 0.0, %v2297
    %v2299 = vpop.f32.mrf.mxu0
    %v2300 = vpop.f32.mrf.mxu0
    %2301 = vdwg.mxu0
    %v2306 = vrot.slane %v2255, 6
    %v2307 = vrot.slane %v2257, 6
    %v2308 = vrot.slane %v2296, 6
    %v2309 = vrot.slane %v2298, 6
    %v2314 = vadd.f32 %v2024, %v2306
    %v2315 = vadd.f32 %v2025, %v2307
    %v2316 = vadd.f32 %v2026, %v2308
    %v2317 = vadd.f32 %v2027, %v2309
    %v2318 = vxor.u32 %v2314, 2147483648
    %v2319 = vmul.f32 %v2318, 1.442695
    %v2320 = vpow.pop %v2319
    %v2321 = vadd.f32 %v2320, 1.0
    %v2322 = vrcp.pop %v2321
    %v2323 = vmul.f32 1.0, %v2322
    %v2324 = vxor.u32 %v2315, 2147483648
    %v2325 = vmul.f32 %v2324, 1.442695
    %v2326 = vpow.pop %v2325
    %v2327 = vadd.f32 %v2326, 1.0
    %v2328 = vrcp.pop %v2327
    %v2329 = vmul.f32 1.0, %v2328
    %v2330 = vtanh.pop %v2316
    %v2331 = vxor.u32 %v2317, 2147483648
    %v2332 = vmul.f32 %v2331, 1.442695
    %v2333 = vpow.pop %v2332
    %v2334 = vadd.f32 %v2333, 1.0
    %v2335 = vrcp.pop %v2334
    %v2336 = vmul.f32 1.0, %v2335
    %v2338 = vrot.slane %v2019, 6
    %v2340 = vmul.f32 %v2329, %v2338
    %v2341 = vmul.f32 %v2323, %v2330
    %v2342 = vadd.f32 %v2340, %v2341
    %v2343 = vtanh.pop %v2342
    %v2344 = vmul.f32 %v2336, %v2343
    %v2345 = vpack.c.bf16 %v2344, %v2344
    %2346 = vst [vmem:[#allocation3 + $0x8] sm:$0xc] %v2344
    %v2347 = vld [vmem:[#allocation2 + $0x20] sm:$0x30]
    %v2348 = vld [vmem:[#allocation2 + $0x28] sm:$0x30]
    %v2349 = vld [vmem:[#allocation2 + $0x30] sm:$0x30]
    %v2350 = vld [vmem:[#allocation2 + $0x38] sm:$0x30]
    %v2351 = vld [vmem:[#allocation11] sm:$0xff]
    %v2352 = vld [vmem:[#allocation11 + $0x8] sm:$0xff]
    %v2353 = vld [vmem:[#allocation11 + $0x10] sm:$0xff]
    %v2354 = vld [vmem:[#allocation11 + $0x18] sm:$0xff]
    %v2355 = vld [vmem:[#allocation11 + $0x20] sm:$0xff]
    %v2356 = vld [vmem:[#allocation11 + $0x28] sm:$0xff]
    %v2357 = vld [vmem:[#allocation11 + $0x30] sm:$0xff]
    %v2358 = vld [vmem:[#allocation11 + $0x38] sm:$0xff]
    %v2359 = vld [vmem:[#allocation11 + $0x40] sm:$0xff]
    %v2360 = vld [vmem:[#allocation11 + $0x48] sm:$0xff]
    %v2361 = vld [vmem:[#allocation11 + $0x50] sm:$0xff]
    %v2362 = vld [vmem:[#allocation11 + $0x58] sm:$0xff]
    %v2363 = vld [vmem:[#allocation11 + $0x60] sm:$0xff]
    %v2364 = vld [vmem:[#allocation11 + $0x68] sm:$0xff]
    %v2365 = vld [vmem:[#allocation11 + $0x70] sm:$0xff]
    %v2366 = vld [vmem:[#allocation11 + $0x78] sm:$0xff]
    %v2367 = vld [vmem:[#allocation11 + $0x80] sm:$0xff]
    %v2368 = vld [vmem:[#allocation11 + $0x88] sm:$0xff]
    %v2369 = vld [vmem:[#allocation11 + $0x90] sm:$0xff]
    %v2370 = vld [vmem:[#allocation11 + $0x98] sm:$0xff]
    %v2371 = vld [vmem:[#allocation11 + $0xa0] sm:$0xff]
    %v2372 = vld [vmem:[#allocation11 + $0xa8] sm:$0xff]
    %v2373 = vld [vmem:[#allocation11 + $0xb0] sm:$0xff]
    %v2374 = vld [vmem:[#allocation11 + $0xb8] sm:$0xff]
    %v2375 = vld [vmem:[#allocation11 + $0xc0] sm:$0xff]
    %v2376 = vld [vmem:[#allocation11 + $0xc8] sm:$0xff]
    %v2377 = vld [vmem:[#allocation11 + $0xd0] sm:$0xff]
    %v2378 = vld [vmem:[#allocation11 + $0xd8] sm:$0xff]
    %v2379 = vld [vmem:[#allocation11 + $0xe0] sm:$0xff]
    %v2380 = vld [vmem:[#allocation11 + $0xe8] sm:$0xff]
    %v2381 = vld [vmem:[#allocation11 + $0xf0] sm:$0xff]
    %v2382 = vld [vmem:[#allocation11 + $0xf8] sm:$0xff]
    %v2384 = vrot.slane %v2345, 1
    %v2418 = vunpack.c.l.b16 %v2351
    %v2419 = vunpack.c.h.b16 %v2351
    %v2420 = vunpack.c.l.b16 %v2352
    %v2421 = vunpack.c.h.b16 %v2352
    %v2422 = vunpack.c.l.b16 %v2353
    %v2423 = vunpack.c.h.b16 %v2353
    %v2424 = vunpack.c.l.b16 %v2354
    %v2425 = vunpack.c.h.b16 %v2354
    %v2426 = vunpack.c.l.b16 %v2355
    %v2427 = vunpack.c.h.b16 %v2355
    %v2428 = vunpack.c.l.b16 %v2356
    %v2429 = vunpack.c.h.b16 %v2356
    %v2430 = vunpack.c.l.b16 %v2357
    %v2431 = vunpack.c.h.b16 %v2357
    %v2432 = vunpack.c.l.b16 %v2358
    %v2433 = vunpack.c.h.b16 %v2358
    %v2434 = vunpack.c.l.b16 %v2359
    %v2435 = vunpack.c.h.b16 %v2359
    %v2436 = vunpack.c.l.b16 %v2360
    %v2437 = vunpack.c.h.b16 %v2360
    %v2438 = vunpack.c.l.b16 %v2361
    %v2439 = vunpack.c.h.b16 %v2361
    %v2440 = vunpack.c.l.b16 %v2362
    %v2441 = vunpack.c.h.b16 %v2362
    %v2442 = vunpack.c.l.b16 %v2363
    %v2443 = vunpack.c.h.b16 %v2363
    %v2444 = vunpack.c.l.b16 %v2364
    %v2445 = vunpack.c.h.b16 %v2364
    %v2446 = vunpack.c.l.b16 %v2365
    %v2447 = vunpack.c.h.b16 %v2365
    %v2448 = vunpack.c.l.b16 %v2366
    %v2449 = vunpack.c.h.b16 %v2366
    %v2450 = vunpack.c.l.b16 %v2367
    %v2451 = vunpack.c.h.b16 %v2367
    %v2452 = vunpack.c.l.b16 %v2368
    %v2453 = vunpack.c.h.b16 %v2368
    %v2454 = vunpack.c.l.b16 %v2369
    %v2455 = vunpack.c.h.b16 %v2369
    %v2456 = vunpack.c.l.b16 %v2370
    %v2457 = vunpack.c.h.b16 %v2370
    %v2458 = vunpack.c.l.b16 %v2371
    %v2459 = vunpack.c.h.b16 %v2371
    %v2460 = vunpack.c.l.b16 %v2372
    %v2461 = vunpack.c.h.b16 %v2372
    %v2462 = vunpack.c.l.b16 %v2373
    %v2463 = vunpack.c.h.b16 %v2373
    %v2464 = vunpack.c.l.b16 %v2374
    %v2465 = vunpack.c.h.b16 %v2374
    %v2466 = vunpack.c.l.b16 %v2375
    %v2467 = vunpack.c.h.b16 %v2375
    %v2468 = vunpack.c.l.b16 %v2376
    %v2469 = vunpack.c.h.b16 %v2376
    %v2470 = vunpack.c.l.b16 %v2377
    %v2471 = vunpack.c.h.b16 %v2377
    %v2472 = vunpack.c.l.b16 %v2378
    %v2473 = vunpack.c.h.b16 %v2378
    %v2474 = vunpack.c.l.b16 %v2379
    %v2475 = vunpack.c.h.b16 %v2379
    %v2476 = vunpack.c.l.b16 %v2380
    %v2477 = vunpack.c.h.b16 %v2380
    %v2478 = vunpack.c.l.b16 %v2381
    %v2479 = vunpack.c.h.b16 %v2381
    %v2480 = vunpack.c.l.b16 %v2382
    %v2481 = vunpack.c.h.b16 %v2382
    %v2482 = vpack.c.b16 %v2422, %v2418
    %v2483 = vpack.c.b16 %v2423, %v2419
    %v2484 = vpack.c.b16 %v2424, %v2420
    %v2485 = vpack.c.b16 %v2425, %v2421
    %v2486 = vpack.c.b16 %v2430, %v2426
    %v2487 = vpack.c.b16 %v2431, %v2427
    %v2488 = vpack.c.b16 %v2432, %v2428
    %v2489 = vpack.c.b16 %v2433, %v2429
    %v2490 = vpack.c.b16 %v2438, %v2434
    %v2491 = vpack.c.b16 %v2439, %v2435
    %v2492 = vpack.c.b16 %v2440, %v2436
    %v2493 = vpack.c.b16 %v2441, %v2437
    %v2494 = vpack.c.b16 %v2446, %v2442
    %v2495 = vpack.c.b16 %v2447, %v2443
    %v2496 = vpack.c.b16 %v2448, %v2444
    %v2497 = vpack.c.b16 %v2449, %v2445
    %v2498 = vpack.c.b16 %v2454, %v2450
    %v2499 = vpack.c.b16 %v2455, %v2451
    %v2500 = vpack.c.b16 %v2456, %v2452
    %v2501 = vpack.c.b16 %v2457, %v2453
    %v2502 = vpack.c.b16 %v2462, %v2458
    %v2503 = vpack.c.b16 %v2463, %v2459
    %v2504 = vpack.c.b16 %v2464, %v2460
    %v2505 = vpack.c.b16 %v2465, %v2461
    %v2506 = vpack.c.b16 %v2470, %v2466
    %v2507 = vpack.c.b16 %v2471, %v2467
    %v2508 = vpack.c.b16 %v2472, %v2468
    %v2509 = vpack.c.b16 %v2473, %v2469
    %v2510 = vpack.c.b16 %v2478, %v2474
    %v2511 = vpack.c.b16 %v2479, %v2475
    %v2512 = vpack.c.b16 %v2480, %v2476
    %v2513 = vpack.c.b16 %v2481, %v2477
    %2546 = vmatprep.subr.bf16.mxu0 %v2511
    %2547 = vmatpush1.bf16.msra.mxu0 %v2510
    %2548 = vmatprep.subr.bf16.mxu0 %v2507
    %2549 = vmatpush1.bf16.msra.mxu0 %v2506
    %2550 = vmatprep.subr.bf16.mxu0 %v2503
    %2551 = vmatpush1.bf16.msra.mxu0 %v2502
    %2552 = vmatprep.subr.bf16.mxu0 %v2499
    %2553 = vmatpush1.bf16.msra.mxu0 %v2498
    %2554 = vmatprep.subr.bf16.mxu0 %v2495
    %2555 = vmatpush1.bf16.msra.mxu0 %v2494
    %2556 = vmatprep.subr.bf16.mxu0 %v2491
    %2557 = vmatpush1.bf16.msra.mxu0 %v2490
    %2558 = vmatprep.subr.bf16.mxu0 %v2487
    %2559 = vmatpush1.bf16.msra.mxu0 %v2486
    %2560 = vmatprep.subr.bf16.mxu0 %v2483
    %2561 = vmatpush1.bf16.msra.mxu0 %v2482
    %2562 = vmatprep.subr.bf16.mxu0 0
    %2563 = vmatpush2.bf16.msra.mxu0 0
    %2564 = vmatprep.subr.bf16.mxu0 0
    %2565 = vmatpush2.bf16.msra.mxu0 0
    %2566 = vmatprep.subr.bf16.mxu0 0
    %2567 = vmatpush2.bf16.msra.mxu0 0
    %2568 = vmatprep.subr.bf16.mxu0 0
    %2569 = vmatpush2.bf16.msra.mxu0 0
    %2570 = vmatprep.subr.bf16.mxu0 0
    %2571 = vmatpush2.bf16.msra.mxu0 0
    %2572 = vmatprep.subr.bf16.mxu0 0
    %2573 = vmatpush2.bf16.msra.mxu0 0
    %2574 = vmatprep.subr.bf16.mxu0 0
    %2575 = vmatpush2.bf16.msra.mxu0 0
    %2576 = vmatprep.subr.bf16.mxu0 0
    %2577 = vmatpush2.bf16.msra.mxu0 0
    %2578 = vmatprep.mubr.bf16.mxu0 0
    %2579 = vmatmul.mubr.bf16.gmra.mxu0 %v2384
    %v2580 = vpop.f32.mrf.mxu0
    %v2581 = vadd.f32 0.0, %v2580
    %v2582 = vpop.f32.mrf.mxu0
    %v2583 = vadd.f32 0.0, %v2582
    %v2584 = vpop.f32.mrf.mxu0
    %v2585 = vpop.f32.mrf.mxu0
    %2586 = vdwg.mxu0
    %2587 = vmatprep.subr.bf16.mxu0 %v2513
    %2588 = vmatpush1.bf16.msra.mxu0 %v2512
    %2589 = vmatprep.subr.bf16.mxu0 %v2509
    %2590 = vmatpush1.bf16.msra.mxu0 %v2508
    %2591 = vmatprep.subr.bf16.mxu0 %v2505
    %2592 = vmatpush1.bf16.msra.mxu0 %v2504
    %2593 = vmatprep.subr.bf16.mxu0 %v2501
    %2594 = vmatpush1.bf16.msra.mxu0 %v2500
    %2595 = vmatprep.subr.bf16.mxu0 %v2497
    %2596 = vmatpush1.bf16.msra.mxu0 %v2496
    %2597 = vmatprep.subr.bf16.mxu0 %v2493
    %2598 = vmatpush1.bf16.msra.mxu0 %v2492
    %2599 = vmatprep.subr.bf16.mxu0 %v2489
    %2600 = vmatpush1.bf16.msra.mxu0 %v2488
    %2601 = vmatprep.subr.bf16.mxu0 %v2485
    %2602 = vmatpush1.bf16.msra.mxu0 %v2484
    %2603 = vmatprep.subr.bf16.mxu0 0
    %2604 = vmatpush2.bf16.msra.mxu0 0
    %2605 = vmatprep.subr.bf16.mxu0 0
    %2606 = vmatpush2.bf16.msra.mxu0 0
    %2607 = vmatprep.subr.bf16.mxu0 0
    %2608 = vmatpush2.bf16.msra.mxu0 0
    %2609 = vmatprep.subr.bf16.mxu0 0
    %2610 = vmatpush2.bf16.msra.mxu0 0
    %2611 = vmatprep.subr.bf16.mxu0 0
    %2612 = vmatpush2.bf16.msra.mxu0 0
    %2613 = vmatprep.subr.bf16.mxu0 0
    %2614 = vmatpush2.bf16.msra.mxu0 0
    %2615 = vmatprep.subr.bf16.mxu0 0
    %2616 = vmatpush2.bf16.msra.mxu0 0
    %2617 = vmatprep.subr.bf16.mxu0 0
    %2618 = vmatpush2.bf16.msra.mxu0 0
    %2619 = vmatprep.mubr.bf16.mxu0 0
    %2620 = vmatmul.mubr.bf16.gmra.mxu0 %v2384
    %v2621 = vpop.f32.mrf.mxu0
    %v2622 = vadd.f32 0.0, %v2621
    %v2623 = vpop.f32.mrf.mxu0
    %v2624 = vadd.f32 0.0, %v2623
    %v2625 = vpop.f32.mrf.mxu0
    %v2626 = vpop.f32.mrf.mxu0
    %2627 = vdwg.mxu0
    %v2632 = vrot.slane %v2581, 4
    %v2633 = vrot.slane %v2583, 4
    %v2634 = vrot.slane %v2622, 4
    %v2635 = vrot.slane %v2624, 4
    %v2640 = vadd.f32 %v2347, %v2632
    %v2641 = vadd.f32 %v2348, %v2633
    %v2642 = vadd.f32 %v2349, %v2634
    %v2643 = vadd.f32 %v2350, %v2635
    %v2644 = vxor.u32 %v2640, 2147483648
    %v2645 = vmul.f32 %v2644, 1.442695
    %v2646 = vpow.pop %v2645
    %v2647 = vadd.f32 %v2646, 1.0
    %v2648 = vrcp.pop %v2647
    %v2649 = vmul.f32 1.0, %v2648
    %v2650 = vxor.u32 %v2641, 2147483648
    %v2651 = vmul.f32 %v2650, 1.442695
    %v2652 = vpow.pop %v2651
    %v2653 = vadd.f32 %v2652, 1.0
    %v2654 = vrcp.pop %v2653
    %v2655 = vmul.f32 1.0, %v2654
    %v2656 = vtanh.pop %v2642
    %v2657 = vxor.u32 %v2643, 2147483648
    %v2658 = vmul.f32 %v2657, 1.442695
    %v2659 = vpow.pop %v2658
    %v2660 = vadd.f32 %v2659, 1.0
    %v2661 = vrcp.pop %v2660
    %v2662 = vmul.f32 1.0, %v2661
    %v2664 = vrot.slane %v2342, 6
    %v2666 = vmul.f32 %v2655, %v2664
    %v2667 = vmul.f32 %v2649, %v2656
    %v2668 = vadd.f32 %v2666, %v2667
    %v2669 = vtanh.pop %v2668
    %v2670 = vmul.f32 %v2662, %v2669
    %v2671 = vpack.c.bf16 %v2670, %v2670
    %2672 = vst [vmem:[#allocation3 + $0x8] sm:$0x30] %v2670
    %v2673 = vld [vmem:[#allocation2 + $0x20] sm:$0xc0]
    %v2674 = vld [vmem:[#allocation2 + $0x28] sm:$0xc0]
    %v2675 = vld [vmem:[#allocation2 + $0x30] sm:$0xc0]
    %v2676 = vld [vmem:[#allocation2 + $0x38] sm:$0xc0]
    %v2677 = vld [vmem:[#allocation11] sm:$0xff]
    %v2678 = vld [vmem:[#allocation11 + $0x8] sm:$0xff]
    %v2679 = vld [vmem:[#allocation11 + $0x10] sm:$0xff]
    %v2680 = vld [vmem:[#allocation11 + $0x18] sm:$0xff]
    %v2681 = vld [vmem:[#allocation11 + $0x20] sm:$0xff]
    %v2682 = vld [vmem:[#allocation11 + $0x28] sm:$0xff]
    %v2683 = vld [vmem:[#allocation11 + $0x30] sm:$0xff]
    %v2684 = vld [vmem:[#allocation11 + $0x38] sm:$0xff]
    %v2685 = vld [vmem:[#allocation11 + $0x40] sm:$0xff]
    %v2686 = vld [vmem:[#allocation11 + $0x48] sm:$0xff]
    %v2687 = vld [vmem:[#allocation11 + $0x50] sm:$0xff]
    %v2688 = vld [vmem:[#allocation11 + $0x58] sm:$0xff]
    %v2689 = vld [vmem:[#allocation11 + $0x60] sm:$0xff]
    %v2690 = vld [vmem:[#allocation11 + $0x68] sm:$0xff]
    %v2691 = vld [vmem:[#allocation11 + $0x70] sm:$0xff]
    %v2692 = vld [vmem:[#allocation11 + $0x78] sm:$0xff]
    %v2693 = vld [vmem:[#allocation11 + $0x80] sm:$0xff]
    %v2694 = vld [vmem:[#allocation11 + $0x88] sm:$0xff]
    %v2695 = vld [vmem:[#allocation11 + $0x90] sm:$0xff]
    %v2696 = vld [vmem:[#allocation11 + $0x98] sm:$0xff]
    %v2697 = vld [vmem:[#allocation11 + $0xa0] sm:$0xff]
    %v2698 = vld [vmem:[#allocation11 + $0xa8] sm:$0xff]
    %v2699 = vld [vmem:[#allocation11 + $0xb0] sm:$0xff]
    %v2700 = vld [vmem:[#allocation11 + $0xb8] sm:$0xff]
    %v2701 = vld [vmem:[#allocation11 + $0xc0] sm:$0xff]
    %v2702 = vld [vmem:[#allocation11 + $0xc8] sm:$0xff]
    %v2703 = vld [vmem:[#allocation11 + $0xd0] sm:$0xff]
    %v2704 = vld [vmem:[#allocation11 + $0xd8] sm:$0xff]
    %v2705 = vld [vmem:[#allocation11 + $0xe0] sm:$0xff]
    %v2706 = vld [vmem:[#allocation11 + $0xe8] sm:$0xff]
    %v2707 = vld [vmem:[#allocation11 + $0xf0] sm:$0xff]
    %v2708 = vld [vmem:[#allocation11 + $0xf8] sm:$0xff]
    %v2710 = vrot.slane %v2671, 2
    %v2744 = vunpack.c.l.b16 %v2677
    %v2745 = vunpack.c.h.b16 %v2677
    %v2746 = vunpack.c.l.b16 %v2678
    %v2747 = vunpack.c.h.b16 %v2678
    %v2748 = vunpack.c.l.b16 %v2679
    %v2749 = vunpack.c.h.b16 %v2679
    %v2750 = vunpack.c.l.b16 %v2680
    %v2751 = vunpack.c.h.b16 %v2680
    %v2752 = vunpack.c.l.b16 %v2681
    %v2753 = vunpack.c.h.b16 %v2681
    %v2754 = vunpack.c.l.b16 %v2682
    %v2755 = vunpack.c.h.b16 %v2682
    %v2756 = vunpack.c.l.b16 %v2683
    %v2757 = vunpack.c.h.b16 %v2683
    %v2758 = vunpack.c.l.b16 %v2684
    %v2759 = vunpack.c.h.b16 %v2684
    %v2760 = vunpack.c.l.b16 %v2685
    %v2761 = vunpack.c.h.b16 %v2685
    %v2762 = vunpack.c.l.b16 %v2686
    %v2763 = vunpack.c.h.b16 %v2686
    %v2764 = vunpack.c.l.b16 %v2687
    %v2765 = vunpack.c.h.b16 %v2687
    %v2766 = vunpack.c.l.b16 %v2688
    %v2767 = vunpack.c.h.b16 %v2688
    %v2768 = vunpack.c.l.b16 %v2689
    %v2769 = vunpack.c.h.b16 %v2689
    %v2770 = vunpack.c.l.b16 %v2690
    %v2771 = vunpack.c.h.b16 %v2690
    %v2772 = vunpack.c.l.b16 %v2691
    %v2773 = vunpack.c.h.b16 %v2691
    %v2774 = vunpack.c.l.b16 %v2692
    %v2775 = vunpack.c.h.b16 %v2692
    %v2776 = vunpack.c.l.b16 %v2693
    %v2777 = vunpack.c.h.b16 %v2693
    %v2778 = vunpack.c.l.b16 %v2694
    %v2779 = vunpack.c.h.b16 %v2694
    %v2780 = vunpack.c.l.b16 %v2695
    %v2781 = vunpack.c.h.b16 %v2695
    %v2782 = vunpack.c.l.b16 %v2696
    %v2783 = vunpack.c.h.b16 %v2696
    %v2784 = vunpack.c.l.b16 %v2697
    %v2785 = vunpack.c.h.b16 %v2697
    %v2786 = vunpack.c.l.b16 %v2698
    %v2787 = vunpack.c.h.b16 %v2698
    %v2788 = vunpack.c.l.b16 %v2699
    %v2789 = vunpack.c.h.b16 %v2699
    %v2790 = vunpack.c.l.b16 %v2700
    %v2791 = vunpack.c.h.b16 %v2700
    %v2792 = vunpack.c.l.b16 %v2701
    %v2793 = vunpack.c.h.b16 %v2701
    %v2794 = vunpack.c.l.b16 %v2702
    %v2795 = vunpack.c.h.b16 %v2702
    %v2796 = vunpack.c.l.b16 %v2703
    %v2797 = vunpack.c.h.b16 %v2703
    %v2798 = vunpack.c.l.b16 %v2704
    %v2799 = vunpack.c.h.b16 %v2704
    %v2800 = vunpack.c.l.b16 %v2705
    %v2801 = vunpack.c.h.b16 %v2705
    %v2802 = vunpack.c.l.b16 %v2706
    %v2803 = vunpack.c.h.b16 %v2706
    %v2804 = vunpack.c.l.b16 %v2707
    %v2805 = vunpack.c.h.b16 %v2707
    %v2806 = vunpack.c.l.b16 %v2708
    %v2807 = vunpack.c.h.b16 %v2708
    %v2808 = vpack.c.b16 %v2748, %v2744
    %v2809 = vpack.c.b16 %v2749, %v2745
    %v2810 = vpack.c.b16 %v2750, %v2746
    %v2811 = vpack.c.b16 %v2751, %v2747
    %v2812 = vpack.c.b16 %v2756, %v2752
    %v2813 = vpack.c.b16 %v2757, %v2753
    %v2814 = vpack.c.b16 %v2758, %v2754
    %v2815 = vpack.c.b16 %v2759, %v2755
    %v2816 = vpack.c.b16 %v2764, %v2760
    %v2817 = vpack.c.b16 %v2765, %v2761
    %v2818 = vpack.c.b16 %v2766, %v2762
    %v2819 = vpack.c.b16 %v2767, %v2763
    %v2820 = vpack.c.b16 %v2772, %v2768
    %v2821 = vpack.c.b16 %v2773, %v2769
    %v2822 = vpack.c.b16 %v2774, %v2770
    %v2823 = vpack.c.b16 %v2775, %v2771
    %v2824 = vpack.c.b16 %v2780, %v2776
    %v2825 = vpack.c.b16 %v2781, %v2777
    %v2826 = vpack.c.b16 %v2782, %v2778
    %v2827 = vpack.c.b16 %v2783, %v2779
    %v2828 = vpack.c.b16 %v2788, %v2784
    %v2829 = vpack.c.b16 %v2789, %v2785
    %v2830 = vpack.c.b16 %v2790, %v2786
    %v2831 = vpack.c.b16 %v2791, %v2787
    %v2832 = vpack.c.b16 %v2796, %v2792
    %v2833 = vpack.c.b16 %v2797, %v2793
    %v2834 = vpack.c.b16 %v2798, %v2794
    %v2835 = vpack.c.b16 %v2799, %v2795
    %v2836 = vpack.c.b16 %v2804, %v2800
    %v2837 = vpack.c.b16 %v2805, %v2801
    %v2838 = vpack.c.b16 %v2806, %v2802
    %v2839 = vpack.c.b16 %v2807, %v2803
    %2872 = vmatprep.subr.bf16.mxu0 %v2837
    %2873 = vmatpush1.bf16.msra.mxu0 %v2836
    %2874 = vmatprep.subr.bf16.mxu0 %v2833
    %2875 = vmatpush1.bf16.msra.mxu0 %v2832
    %2876 = vmatprep.subr.bf16.mxu0 %v2829
    %2877 = vmatpush1.bf16.msra.mxu0 %v2828
    %2878 = vmatprep.subr.bf16.mxu0 %v2825
    %2879 = vmatpush1.bf16.msra.mxu0 %v2824
    %2880 = vmatprep.subr.bf16.mxu0 %v2821
    %2881 = vmatpush1.bf16.msra.mxu0 %v2820
    %2882 = vmatprep.subr.bf16.mxu0 %v2817
    %2883 = vmatpush1.bf16.msra.mxu0 %v2816
    %2884 = vmatprep.subr.bf16.mxu0 %v2813
    %2885 = vmatpush1.bf16.msra.mxu0 %v2812
    %2886 = vmatprep.subr.bf16.mxu0 %v2809
    %2887 = vmatpush1.bf16.msra.mxu0 %v2808
    %2888 = vmatprep.subr.bf16.mxu0 0
    %2889 = vmatpush2.bf16.msra.mxu0 0
    %2890 = vmatprep.subr.bf16.mxu0 0
    %2891 = vmatpush2.bf16.msra.mxu0 0
    %2892 = vmatprep.subr.bf16.mxu0 0
    %2893 = vmatpush2.bf16.msra.mxu0 0
    %2894 = vmatprep.subr.bf16.mxu0 0
    %2895 = vmatpush2.bf16.msra.mxu0 0
    %2896 = vmatprep.subr.bf16.mxu0 0
    %2897 = vmatpush2.bf16.msra.mxu0 0
    %2898 = vmatprep.subr.bf16.mxu0 0
    %2899 = vmatpush2.bf16.msra.mxu0 0
    %2900 = vmatprep.subr.bf16.mxu0 0
    %2901 = vmatpush2.bf16.msra.mxu0 0
    %2902 = vmatprep.subr.bf16.mxu0 0
    %2903 = vmatpush2.bf16.msra.mxu0 0
    %2904 = vmatprep.mubr.bf16.mxu0 0
    %2905 = vmatmul.mubr.bf16.gmra.mxu0 %v2710
    %v2906 = vpop.f32.mrf.mxu0
    %v2907 = vadd.f32 0.0, %v2906
    %v2908 = vpop.f32.mrf.mxu0
    %v2909 = vadd.f32 0.0, %v2908
    %v2910 = vpop.f32.mrf.mxu0
    %v2911 = vpop.f32.mrf.mxu0
    %2912 = vdwg.mxu0
    %2913 = vmatprep.subr.bf16.mxu0 %v2839
    %2914 = vmatpush1.bf16.msra.mxu0 %v2838
    %2915 = vmatprep.subr.bf16.mxu0 %v2835
    %2916 = vmatpush1.bf16.msra.mxu0 %v2834
    %2917 = vmatprep.subr.bf16.mxu0 %v2831
    %2918 = vmatpush1.bf16.msra.mxu0 %v2830
    %2919 = vmatprep.subr.bf16.mxu0 %v2827
    %2920 = vmatpush1.bf16.msra.mxu0 %v2826
    %2921 = vmatprep.subr.bf16.mxu0 %v2823
    %2922 = vmatpush1.bf16.msra.mxu0 %v2822
    %2923 = vmatprep.subr.bf16.mxu0 %v2819
    %2924 = vmatpush1.bf16.msra.mxu0 %v2818
    %2925 = vmatprep.subr.bf16.mxu0 %v2815
    %2926 = vmatpush1.bf16.msra.mxu0 %v2814
    %2927 = vmatprep.subr.bf16.mxu0 %v2811
    %2928 = vmatpush1.bf16.msra.mxu0 %v2810
    %2929 = vmatprep.subr.bf16.mxu0 0
    %2930 = vmatpush2.bf16.msra.mxu0 0
    %2931 = vmatprep.subr.bf16.mxu0 0
    %2932 = vmatpush2.bf16.msra.mxu0 0
    %2933 = vmatprep.subr.bf16.mxu0 0
    %2934 = vmatpush2.bf16.msra.mxu0 0
    %2935 = vmatprep.subr.bf16.mxu0 0
    %2936 = vmatpush2.bf16.msra.mxu0 0
    %2937 = vmatprep.subr.bf16.mxu0 0
    %2938 = vmatpush2.bf16.msra.mxu0 0
    %2939 = vmatprep.subr.bf16.mxu0 0
    %2940 = vmatpush2.bf16.msra.mxu0 0
    %2941 = vmatprep.subr.bf16.mxu0 0
    %2942 = vmatpush2.bf16.msra.mxu0 0
    %2943 = vmatprep.subr.bf16.mxu0 0
    %2944 = vmatpush2.bf16.msra.mxu0 0
    %2945 = vmatprep.mubr.bf16.mxu0 0
    %2946 = vmatmul.mubr.bf16.gmra.mxu0 %v2710
    %v2947 = vpop.f32.mrf.mxu0
    %v2948 = vadd.f32 0.0, %v2947
    %v2949 = vpop.f32.mrf.mxu0
    %v2950 = vadd.f32 0.0, %v2949
    %v2951 = vpop.f32.mrf.mxu0
    %v2952 = vpop.f32.mrf.mxu0
    %2953 = vdwg.mxu0
    %v2958 = vrot.slane %v2907, 2
    %v2959 = vrot.slane %v2909, 2
    %v2960 = vrot.slane %v2948, 2
    %v2961 = vrot.slane %v2950, 2
    %v2966 = vadd.f32 %v2673, %v2958
    %v2967 = vadd.f32 %v2674, %v2959
    %v2968 = vadd.f32 %v2675, %v2960
    %v2969 = vadd.f32 %v2676, %v2961
    %v2970 = vxor.u32 %v2966, 2147483648
    %v2971 = vmul.f32 %v2970, 1.442695
    %v2972 = vpow.pop %v2971
    %v2973 = vadd.f32 %v2972, 1.0
    %v2974 = vrcp.pop %v2973
    %v2975 = vmul.f32 1.0, %v2974
    %v2976 = vxor.u32 %v2967, 2147483648
    %v2977 = vmul.f32 %v2976, 1.442695
    %v2978 = vpow.pop %v2977
    %v2979 = vadd.f32 %v2978, 1.0
    %v2980 = vrcp.pop %v2979
    %v2981 = vmul.f32 1.0, %v2980
    %v2982 = vtanh.pop %v2968
    %v2983 = vxor.u32 %v2969, 2147483648
    %v2984 = vmul.f32 %v2983, 1.442695
    %v2985 = vpow.pop %v2984
    %v2986 = vadd.f32 %v2985, 1.0
    %v2987 = vrcp.pop %v2986
    %v2988 = vmul.f32 1.0, %v2987
    %v2990 = vrot.slane %v2668, 6
    %v2992 = vmul.f32 %v2981, %v2990
    %v2993 = vmul.f32 %v2975, %v2982
    %v2994 = vadd.f32 %v2992, %v2993
    %v2995 = vtanh.pop %v2994
    %v2996 = vmul.f32 %v2988, %v2995
    %2997 = vst [vmem:[#allocation3 + $0x8] sm:$0xc0] %v2996
    %v2998 = vlaneseq
    %v2999 = vand.u32 %v2998, 127
    %vm3000 = vcmp.lt.s32.totalorder %v2999, 64
    %v3001 = vld [vmem:[#allocation3] sm:$0x3]
    %v3002 = vld [vmem:[#allocation3 + $0xe] sm:$0x3]
    %v3003 = vsel %vm3000, %v3001, %v3002
    %3004 = vst [vmem:[#allocation4] sm:$0x3] %v3003
    %v3005 = vld [vmem:[#allocation3 + $0x2] sm:$0x3]
    %v3006 = vld [vmem:[#allocation3 + $0xc] sm:$0x3]
    %v3007 = vsel %vm3000, %v3005, %v3006
    %3008 = vst [vmem:[#allocation4 + $0x2] sm:$0x3] %v3007
    %v3009 = vld [vmem:[#allocation3 + $0x4] sm:$0x3]
    %v3010 = vld [vmem:[#allocation3 + $0xa] sm:$0x3]
    %v3011 = vsel %vm3000, %v3009, %v3010
    %3012 = vst [vmem:[#allocation4 + $0x4] sm:$0x3] %v3011
    %v3013 = vld [vmem:[#allocation3 + $0x6] sm:$0x3]
    %v3014 = vld [vmem:[#allocation3 + $0x8] sm:$0x3]
    %v3015 = vsel %vm3000, %v3013, %v3014
    %3016 = vst [vmem:[#allocation4 + $0x6] sm:$0x3] %v3015
    %v3017 = vld [vmem:[#allocation3 + $0x8] sm:$0x3]
    %v3018 = vld [vmem:[#allocation3 + $0x6] sm:$0x3]
    %v3019 = vsel %vm3000, %v3017, %v3018
    %3020 = vst [vmem:[#allocation4 + $0x8] sm:$0x3] %v3019
    %v3021 = vld [vmem:[#allocation3 + $0xa] sm:$0x3]
    %v3022 = vld [vmem:[#allocation3 + $0x4] sm:$0x3]
    %v3023 = vsel %vm3000, %v3021, %v3022
    %3024 = vst [vmem:[#allocation4 + $0xa] sm:$0x3] %v3023
    %v3025 = vld [vmem:[#allocation3 + $0xc] sm:$0x3]
    %v3026 = vld [vmem:[#allocation3 + $0x2] sm:$0x3]
    %v3027 = vsel %vm3000, %v3025, %v3026
    %3028 = vst [vmem:[#allocation4 + $0xc] sm:$0x3] %v3027
    %v3029 = vld [vmem:[#allocation3 + $0xe] sm:$0x3]
    %v3030 = vld [vmem:[#allocation3] sm:$0x3]
    %v3031 = vsel %vm3000, %v3029, %v3030
    %3032 = vst [vmem:[#allocation4 + $0xe] sm:$0x3] %v3031
    %v3033 = vld [vmem:[#allocation4] sm:$0xff]
    %v3034 = vld [vmem:[#allocation4 + $0x8] sm:$0xff]
    %v3035 = vpack.c.bf16 %v3034, %v3033
    %v3036 = vld [vmem:[#allocation13] sm:$0xf]
    %v3037 = vld [vmem:[#allocation13 + $0x4] sm:$0xf]
    %v3038 = vld [vmem:[#allocation13 + $0x8] sm:$0xf]
    %v3039 = vld [vmem:[#allocation13 + $0xc] sm:$0xf]
    %v3040 = vld [vmem:[#allocation13 + $0x10] sm:$0xf]
    %v3041 = vld [vmem:[#allocation13 + $0x14] sm:$0xf]
    %v3042 = vld [vmem:[#allocation13 + $0x18] sm:$0xf]
    %v3043 = vld [vmem:[#allocation13 + $0x1c] sm:$0xf]
    %v3044 = vld [vmem:[#allocation13 + $0x20] sm:$0xf]
    %v3045 = vld [vmem:[#allocation13 + $0x24] sm:$0xf]
    %v3046 = vld [vmem:[#allocation13 + $0x28] sm:$0xf]
    %v3047 = vld [vmem:[#allocation13 + $0x2c] sm:$0xf]
    %v3048 = vld [vmem:[#allocation13 + $0x30] sm:$0xf]
    %v3049 = vld [vmem:[#allocation13 + $0x34] sm:$0xf]
    %v3050 = vld [vmem:[#allocation13 + $0x38] sm:$0xf]
    %v3051 = vld [vmem:[#allocation13 + $0x3c] sm:$0xf]
    %v3052 = vld [vmem:[%s5] sm:$0x1]
    %v3054 = vlaneseq
    %v3055 = vshrl.u32 %v3054, 7
    %v3056 = vsub.s32 0, %v3055
    %v3057 = vrot.slane %v3052, %v3056
    %v3075 = vunpack.c.l.b16 %v3036
    %v3076 = vunpack.c.l.b16 %v3037
    %v3077 = vunpack.c.l.b16 %v3038
    %v3078 = vunpack.c.l.b16 %v3039
    %v3079 = vunpack.c.l.b16 %v3040
    %v3080 = vunpack.c.l.b16 %v3041
    %v3081 = vunpack.c.l.b16 %v3042
    %v3082 = vunpack.c.l.b16 %v3043
    %v3083 = vunpack.c.l.b16 %v3044
    %v3084 = vunpack.c.l.b16 %v3045
    %v3085 = vunpack.c.l.b16 %v3046
    %v3086 = vunpack.c.l.b16 %v3047
    %v3087 = vunpack.c.l.b16 %v3048
    %v3088 = vunpack.c.l.b16 %v3049
    %v3089 = vunpack.c.l.b16 %v3050
    %v3090 = vunpack.c.l.b16 %v3051
    %v3091 = vpack.c.b16 %v3076, %v3075
    %v3092 = vpack.c.b16 %v3078, %v3077
    %v3093 = vpack.c.b16 %v3080, %v3079
    %v3094 = vpack.c.b16 %v3082, %v3081
    %v3095 = vpack.c.b16 %v3084, %v3083
    %v3096 = vpack.c.b16 %v3086, %v3085
    %v3097 = vpack.c.b16 %v3088, %v3087
    %v3098 = vpack.c.b16 %v3090, %v3089
    %3107 = vmatprep.subr.bf16.mxu0 0
    %3108 = vmatpush1.bf16.msra.mxu0 %v3098
    %3109 = vmatprep.subr.bf16.mxu0 0
    %3110 = vmatpush1.bf16.msra.mxu0 %v3097
    %3111 = vmatprep.subr.bf16.mxu0 0
    %3112 = vmatpush1.bf16.msra.mxu0 %v3096
    %3113 = vmatprep.subr.bf16.mxu0 0
    %3114 = vmatpush1.bf16.msra.mxu0 %v3095
    %3115 = vmatprep.subr.bf16.mxu0 0
    %3116 = vmatpush1.bf16.msra.mxu0 %v3094
    %3117 = vmatprep.subr.bf16.mxu0 0
    %3118 = vmatpush1.bf16.msra.mxu0 %v3093
    %3119 = vmatprep.subr.bf16.mxu0 0
    %3120 = vmatpush1.bf16.msra.mxu0 %v3092
    %3121 = vmatprep.subr.bf16.mxu0 0
    %3122 = vmatpush1.bf16.msra.mxu0 %v3091
    %3123 = vmatprep.subr.bf16.mxu0 0
    %3124 = vmatpush2.bf16.msra.mxu0 0
    %3125 = vmatprep.subr.bf16.mxu0 0
    %3126 = vmatpush2.bf16.msra.mxu0 0
    %3127 = vmatprep.subr.bf16.mxu0 0
    %3128 = vmatpush2.bf16.msra.mxu0 0
    %3129 = vmatprep.subr.bf16.mxu0 0
    %3130 = vmatpush2.bf16.msra.mxu0 0
    %3131 = vmatprep.subr.bf16.mxu0 0
    %3132 = vmatpush2.bf16.msra.mxu0 0
    %3133 = vmatprep.subr.bf16.mxu0 0
    %3134 = vmatpush2.bf16.msra.mxu0 0
    %3135 = vmatprep.subr.bf16.mxu0 0
    %3136 = vmatpush2.bf16.msra.mxu0 0
    %3137 = vmatprep.subr.bf16.mxu0 0
    %3138 = vmatpush2.bf16.msra.mxu0 0
    %3139 = vmatprep.mubr.bf16.mxu0 0
    %3140 = vmatmul.mubr.bf16.gmra.mxu0 %v3035
    %v3141 = vpop.f32.mrf.mxu0
    %v3142 = vadd.f32 %v3057, %v3141
    %v3143 = vpop.f32.mrf.mxu0
    %v3144 = vpop.f32.mrf.mxu0
    %v3145 = vadd.f32 %v3057, %v3144
    %v3146 = vpop.f32.mrf.mxu0
    %3147 = vdwg.mxu0
    %v3148 = vmax.f32 %v3142, 0.0
    %v3149 = vmax.f32 %v3145, 0.0
    %v3150 = vpack.c.bf16 %v3149, %v3148
    %v3151 = vld [vmem:[#allocation14] sm:$0xf]
    %v3152 = vld [vmem:[#allocation14 + $0x4] sm:$0xf]
    %v3153 = vld [vmem:[#allocation14 + $0x8] sm:$0xf]
    %v3154 = vld [vmem:[#allocation14 + $0xc] sm:$0xf]
    %v3155 = vld [vmem:[#allocation14 + $0x10] sm:$0xf]
    %v3156 = vld [vmem:[#allocation14 + $0x14] sm:$0xf]
    %v3157 = vld [vmem:[#allocation14 + $0x18] sm:$0xf]
    %v3158 = vld [vmem:[#allocation14 + $0x1c] sm:$0xf]
    %v3159 = vld [vmem:[#allocation14 + $0x20] sm:$0xf]
    %v3160 = vld [vmem:[#allocation14 + $0x24] sm:$0xf]
    %v3161 = vld [vmem:[#allocation14 + $0x28] sm:$0xf]
    %v3162 = vld [vmem:[#allocation14 + $0x2c] sm:$0xf]
    %v3163 = vld [vmem:[#allocation14 + $0x30] sm:$0xf]
    %v3164 = vld [vmem:[#allocation14 + $0x34] sm:$0xf]
    %v3165 = vld [vmem:[#allocation14 + $0x38] sm:$0xf]
    %v3166 = vld [vmem:[#allocation14 + $0x3c] sm:$0xf]
    %v3167 = vld [vmem:[%s7] sm:$0x1]
    %v3169 = vlaneseq
    %v3170 = vshrl.u32 %v3169, 7
    %v3171 = vsub.s32 0, %v3170
    %v3172 = vrot.slane %v3167, %v3171
    %v3190 = vunpack.c.l.b16 %v3151
    %v3191 = vunpack.c.l.b16 %v3152
    %v3192 = vunpack.c.l.b16 %v3153
    %v3193 = vunpack.c.l.b16 %v3154
    %v3194 = vunpack.c.l.b16 %v3155
    %v3195 = vunpack.c.l.b16 %v3156
    %v3196 = vunpack.c.l.b16 %v3157
    %v3197 = vunpack.c.l.b16 %v3158
    %v3198 = vunpack.c.l.b16 %v3159
    %v3199 = vunpack.c.l.b16 %v3160
    %v3200 = vunpack.c.l.b16 %v3161
    %v3201 = vunpack.c.l.b16 %v3162
    %v3202 = vunpack.c.l.b16 %v3163
    %v3203 = vunpack.c.l.b16 %v3164
    %v3204 = vunpack.c.l.b16 %v3165
    %v3205 = vunpack.c.l.b16 %v3166
    %v3206 = vpack.c.b16 %v3191, %v3190
    %v3207 = vpack.c.b16 %v3193, %v3192
    %v3208 = vpack.c.b16 %v3195, %v3194
    %v3209 = vpack.c.b16 %v3197, %v3196
    %v3210 = vpack.c.b16 %v3199, %v3198
    %v3211 = vpack.c.b16 %v3201, %v3200
    %v3212 = vpack.c.b16 %v3203, %v3202
    %v3213 = vpack.c.b16 %v3205, %v3204
    %3222 = vmatprep.subr.bf16.mxu0 0
    %3223 = vmatpush1.bf16.msra.mxu0 %v3213
    %3224 = vmatprep.subr.bf16.mxu0 0
    %3225 = vmatpush1.bf16.msra.mxu0 %v3212
    %3226 = vmatprep.subr.bf16.mxu0 0
    %3227 = vmatpush1.bf16.msra.mxu0 %v3211
    %3228 = vmatprep.subr.bf16.mxu0 0
    %3229 = vmatpush1.bf16.msra.mxu0 %v3210
    %3230 = vmatprep.subr.bf16.mxu0 0
    %3231 = vmatpush1.bf16.msra.mxu0 %v3209
    %3232 = vmatprep.subr.bf16.mxu0 0
    %3233 = vmatpush1.bf16.msra.mxu0 %v3208
    %3234 = vmatprep.subr.bf16.mxu0 0
    %3235 = vmatpush1.bf16.msra.mxu0 %v3207
    %3236 = vmatprep.subr.bf16.mxu0 0
    %3237 = vmatpush1.bf16.msra.mxu0 %v3206
    %3238 = vmatprep.subr.bf16.mxu0 0
    %3239 = vmatpush2.bf16.msra.mxu0 0
    %3240 = vmatprep.subr.bf16.mxu0 0
    %3241 = vmatpush2.bf16.msra.mxu0 0
    %3242 = vmatprep.subr.bf16.mxu0 0
    %3243 = vmatpush2.bf16.msra.mxu0 0
    %3244 = vmatprep.subr.bf16.mxu0 0
    %3245 = vmatpush2.bf16.msra.mxu0 0
    %3246 = vmatprep.subr.bf16.mxu0 0
    %3247 = vmatpush2.bf16.msra.mxu0 0
    %3248 = vmatprep.subr.bf16.mxu0 0
    %3249 = vmatpush2.bf16.msra.mxu0 0
    %3250 = vmatprep.subr.bf16.mxu0 0
    %3251 = vmatpush2.bf16.msra.mxu0 0
    %3252 = vmatprep.subr.bf16.mxu0 0
    %3253 = vmatpush2.bf16.msra.mxu0 0
    %3254 = vmatprep.mubr.bf16.mxu0 0
    %3255 = vmatmul.mubr.bf16.gmra.mxu0 %v3150
    %v3256 = vpop.f32.mrf.mxu0
    %v3257 = vadd.f32 %v3172, %v3256
    %v3258 = vpop.f32.mrf.mxu0
    %v3259 = vpop.f32.mrf.mxu0
    %v3260 = vadd.f32 %v3172, %v3259
    %v3261 = vpop.f32.mrf.mxu0
    %3262 = vdwg.mxu0
    %3263 = vst [vmem:[#allocation16] sm:$0xff] %v3257
    %3264 = vst [vmem:[#allocation16 + $0x8] sm:$0xff] %v3260
    // Predicated region
    $region58: #{tpu_custom_call.1} parent=1 // pred_check
      _
    $region59: #{tpu_custom_call.1} parent=1 // pred_check_branch
      %3266 = sbr.rel (0) target = $region61
    $region60: #{tpu_custom_call.1} parent=1 // pred_region
      %s3268 = ssub.s32 256, 256
      %3269 = vsyncadd [#allocation7], %s3268
      %s3270 = sshll.u32 [#allocation16], 4
      %s3271 = int_to_ptr.vmem [resolvable:$true] %s3270
      %3276 = dma.vmem_to_hbm [thread:$0]  %s3271, 256, %s8, [#allocation7], 128, 128, 8
    $region61: #{tpu_custom_call.1} parent=1 // pred_fallthru
      _
    // Predicated region
    $region62: #{tpu_custom_call.1} parent=1 // pred_check
      _
    $region63: #{tpu_custom_call.1} parent=1 // pred_check_branch
      %3278 = sbr.rel (0) target = $region65
    $region64: #{tpu_custom_call.1} parent=1 // pred_region
      %3279 = dma.done [#allocation7], 256
    $region65: #{tpu_custom_call.1} parent=1 // pred_fallthru
      _
    %3280 = vsyncpa [#allocation6], 1
    %3281 = vsyncpa [#allocation9], 1
    %3282 = vsyncpa [#allocation12], 1
    %3283 = vsyncpa [#allocation15], 1
    %3284 = vsyncpa [#allocation7], 1

</llo_original>
